<compile_context>
chip_gen: v7x
topology: tpu7x:2x2x1
jax: 0.10.0
libtpu: 0.0.40
codegen_flags: <defaults>
</compile_context>

<pallas_src>
import functools
import numpy as np
import jax
import jax.numpy as jnp
from jax.experimental import pallas as pl
from jax.experimental.pallas import tpu as pltpu

LEAKY_SLOPE = 0.2
BN_EPS = 0.8


# ------------------------------ fused kernel ------------------------------- #

def _generator_kernel(z_ref,
                      w1_ref, b1_ref,
                      w2_ref, b2_ref, g2_ref, be2_ref,
                      w3_ref, b3_ref, g3_ref, be3_ref,
                      w4_ref, b4_ref, g4_ref, be4_ref,
                      w5_ref, b5_ref,
                      o_ref):
    """Whole MLP in one kernel.  Activations are [B, F] f32 in vregs."""

    def dot_bf16(x, w_ref):
        # bf16 operands on the MXU, f32 accumulation.
        return jnp.dot(x.astype(jnp.bfloat16), w_ref[...],
                       preferred_element_type=jnp.float32)

    def lrelu(y):
        return jnp.maximum(y, LEAKY_SLOPE * y)

    def batchnorm(y, g_ref, be_ref):
        # Training-mode BatchNorm1d: batch mean, biased variance, eps=0.8.
        mean = jnp.mean(y, axis=0, keepdims=True)
        var = jnp.mean(jnp.square(y - mean), axis=0, keepdims=True)
        y_hat = (y - mean) * jax.lax.rsqrt(var + BN_EPS)
        return g_ref[...] * y_hat + be_ref[...]

    # block(latent_dim, 128, normalize=False)
    h = lrelu(dot_bf16(z_ref[...], w1_ref) + b1_ref[...])
    # block(128, 256)
    h = lrelu(batchnorm(dot_bf16(h, w2_ref) + b2_ref[...], g2_ref, be2_ref))
    # block(256, 512)
    h = lrelu(batchnorm(dot_bf16(h, w3_ref) + b3_ref[...], g3_ref, be3_ref))
    # block(512, 1024)
    h = lrelu(batchnorm(dot_bf16(h, w4_ref) + b4_ref[...], g4_ref, be4_ref))
    # Linear(1024, C*H*W) + Tanh
    o_ref[...] = jnp.tanh(dot_bf16(h, w5_ref) + b5_ref[...])


# ------------------------------ call wrapper ------------------------------- #

def _flat_params(params):
    flat = [params[0]["w"], params[0]["b"]]
    for i in (1, 2, 3):
        p = params[i]
        flat += [p["w"], p["b"], p["gamma"], p["beta"]]
    flat += [params[4]["w"], params[4]["b"]]
    return flat


def _cost_estimate(batch, params):
    flops = 0
    bytes_accessed = 0
    transcendentals = 0
    for p in params:
        fi, fo = p["w"].shape
        flops += 2 * batch * fi * fo
        if "gamma" in p:
            transcendentals += fo            # rsqrt per feature
    out_feat = params[-1]["w"].shape[1]
    transcendentals += batch * out_feat       # tanh
    for p in params:
        for v in p.values():
            bytes_accessed += v.size * v.dtype.itemsize
    fi0 = params[0]["w"].shape[0]
    bytes_accessed += batch * fi0 * 4 + batch * out_feat * 4
    return pl.CostEstimate(flops=flops, transcendentals=transcendentals,
                           bytes_accessed=bytes_accessed)


@functools.partial(jax.jit, static_argnames=("img_shape",))
def generator_forward(z, params, img_shape):
    """z: [B, latent_dim] -> img: [B, C, H, W] (NCHW, matching PyTorch)."""
    C, H, W = img_shape
    batch = z.shape[0]
    chw = C * H * W
    flat = _flat_params(params)

    vmem_spec = pl.BlockSpec(memory_space=pltpu.MemorySpace.VMEM)
    img_flat = pl.pallas_call(
        _generator_kernel,
        out_shape=jax.ShapeDtypeStruct((batch, chw), jnp.float32),
        in_specs=[vmem_spec] * (1 + len(flat)),
        out_specs=vmem_spec,
        cost_estimate=_cost_estimate(batch, params),
    )(z, *flat)

    return img_flat.reshape(batch, C, H, W)


# ----------------------------- parameter setup ----------------------------- #

def init_params(key, latent_dim, img_shape):
    """Deterministic init matching PyTorch Linear defaults.  Weights stored as
    (in, out) bf16 so the kernel computes x @ W (== PyTorch x @ W.T) on the
    MXU; biases / BN affine params stay f32 (epilogue math is f32)."""
    C, H, W = img_shape
    dims = [latent_dim, 128, 256, 512, 1024, C * H * W]
    params = []
    for i in range(len(dims) - 1):
        fan_in, fan_out = dims[i], dims[i + 1]
        key, kw, kb = jax.random.split(key, 3)
        bound = 1.0 / np.sqrt(fan_in)
        w = jax.random.uniform(kw, (fan_in, fan_out), jnp.float32, -bound, bound)
        b = jax.random.uniform(kb, (1, fan_out), jnp.float32, -bound, bound)
        layer = {"w": w.astype(jnp.bfloat16), "b": b}
        # BatchNorm1d only on hidden blocks 2..4 (not the first, not the output)
        if 1 <= i <= 3:
            layer["gamma"] = jnp.ones((1, fan_out), jnp.float32)
            layer["beta"] = jnp.zeros((1, fan_out), jnp.float32)
        params.append(layer)
    return params


# ---------------------------------- main ----------------------------------- #

if __name__ == "__main__":
    batch = 8
    latent_dim = 16
    img_shape = (2, 8, 8)   # (channels, img_size, img_size); C*H*W = 128 (lane-dense)

    key = jax.random.PRNGKey(0)
    key_z, key_p = jax.random.split(key)
    z = jax.random.normal(key_z, (batch, latent_dim), jnp.float32)
    params = init_params(key_p, latent_dim, img_shape)

    img = generator_forward(z, params, img_shape)
    img = jax.block_until_ready(img)
    assert img.shape == (batch,) + img_shape
    assert bool(jnp.all(jnp.isfinite(img)))
    assert bool(jnp.all(jnp.abs(img) <= 1.0))   # tanh range
    print("KERNEL_OK")
</pallas_src>

<mosaic_0001>
module attributes {stable_mosaic.version = 11 : i64} {
  func.func @_generator_kernel(%arg0: memref<8x16xf32, #tpu.memory_space<vmem>>, %arg1: memref<16x128xbf16, #tpu.memory_space<vmem>>, %arg2: memref<1x128xf32, #tpu.memory_space<vmem>>, %arg3: memref<128x256xbf16, #tpu.memory_space<vmem>>, %arg4: memref<1x256xf32, #tpu.memory_space<vmem>>, %arg5: memref<1x256xf32, #tpu.memory_space<vmem>>, %arg6: memref<1x256xf32, #tpu.memory_space<vmem>>, %arg7: memref<256x512xbf16, #tpu.memory_space<vmem>>, %arg8: memref<1x512xf32, #tpu.memory_space<vmem>>, %arg9: memref<1x512xf32, #tpu.memory_space<vmem>>, %arg10: memref<1x512xf32, #tpu.memory_space<vmem>>, %arg11: memref<512x1024xbf16, #tpu.memory_space<vmem>>, %arg12: memref<1x1024xf32, #tpu.memory_space<vmem>>, %arg13: memref<1x1024xf32, #tpu.memory_space<vmem>>, %arg14: memref<1x1024xf32, #tpu.memory_space<vmem>>, %arg15: memref<1024x128xbf16, #tpu.memory_space<vmem>>, %arg16: memref<1x128xf32, #tpu.memory_space<vmem>>, %arg17: memref<8x128xf32, #tpu.memory_space<vmem>>) attributes {dimension_semantics = [], scalar_prefetch = 0 : i64, scratch_operands = 0 : i64, tpu.core_type = #tpu.core_type<tc>} {
    %c0 = arith.constant 0 : index
    %c0_0 = arith.constant 0 : index
    %0 = vector.load %arg0[%c0, %c0_0] : memref<8x16xf32, #tpu.memory_space<vmem>>, vector<8x16xf32>
    %1 = arith.truncf %0 : vector<8x16xf32> to vector<8x16xbf16>
    %c0_1 = arith.constant 0 : index
    %c0_2 = arith.constant 0 : index
    %2 = vector.load %arg1[%c0_1, %c0_2] : memref<16x128xbf16, #tpu.memory_space<vmem>>, vector<16x128xbf16>
    %cst = arith.constant dense<0.000000e+00> : vector<8x128xf32>
    %3 = tpu.matmul %1, %2, %cst {dimension_numbers = #tpu.dot_dimension_numbers<[1], [0], [0], [1], [0, 0, 1, 1], [], []>} : vector<8x16xbf16>, vector<16x128xbf16>, vector<8x128xf32> -> vector<8x128xf32>
    %c0_3 = arith.constant 0 : index
    %c0_4 = arith.constant 0 : index
    %4 = vector.load %arg2[%c0_3, %c0_4] : memref<1x128xf32, #tpu.memory_space<vmem>>, vector<1x128xf32>
    %5 = vector.broadcast %4 : vector<1x128xf32> to vector<8x128xf32>
    %6 = arith.addf %3, %5 : vector<8x128xf32>
    %cst_5 = arith.constant 2.000000e-01 : f32
    %7 = vector.broadcast %cst_5 : f32 to vector<8x128xf32>
    %8 = arith.mulf %7, %6 : vector<8x128xf32>
    %9 = arith.maximumf %6, %8 : vector<8x128xf32>
    %10 = arith.truncf %9 : vector<8x128xf32> to vector<8x128xbf16>
    %c0_6 = arith.constant 0 : index
    %c0_7 = arith.constant 0 : index
    %11 = vector.load %arg3[%c0_6, %c0_7] : memref<128x256xbf16, #tpu.memory_space<vmem>>, vector<128x256xbf16>
    %cst_8 = arith.constant dense<0.000000e+00> : vector<8x256xf32>
    %12 = tpu.matmul %10, %11, %cst_8 {dimension_numbers = #tpu.dot_dimension_numbers<[1], [0], [0], [1], [0, 0, 1, 1], [], []>} : vector<8x128xbf16>, vector<128x256xbf16>, vector<8x256xf32> -> vector<8x256xf32>
    %c0_9 = arith.constant 0 : index
    %c0_10 = arith.constant 0 : index
    %13 = vector.load %arg4[%c0_9, %c0_10] : memref<1x256xf32, #tpu.memory_space<vmem>>, vector<1x256xf32>
    %14 = vector.broadcast %13 : vector<1x256xf32> to vector<8x256xf32>
    %15 = arith.addf %12, %14 : vector<8x256xf32>
    %cst_11 = arith.constant dense<0.000000e+00> : vector<256xf32>
    %16 = vector.multi_reduction <add>, %15, %cst_11 [0] : vector<8x256xf32> to vector<256xf32>
    %17 = vector.shape_cast %16 : vector<256xf32> to vector<1x256xf32>
    %cst_12 = arith.constant 8.000000e+00 : f32
    %18 = vector.broadcast %cst_12 : f32 to vector<1x256xf32>
    %19 = arith.divf %17, %18 : vector<1x256xf32>
    %20 = vector.broadcast %19 : vector<1x256xf32> to vector<8x256xf32>
    %21 = arith.subf %15, %20 : vector<8x256xf32>
    %22 = arith.mulf %21, %21 : vector<8x256xf32>
    %cst_13 = arith.constant dense<0.000000e+00> : vector<256xf32>
    %23 = vector.multi_reduction <add>, %22, %cst_13 [0] : vector<8x256xf32> to vector<256xf32>
    %24 = vector.shape_cast %23 : vector<256xf32> to vector<1x256xf32>
    %cst_14 = arith.constant 8.000000e+00 : f32
    %25 = vector.broadcast %cst_14 : f32 to vector<1x256xf32>
    %26 = arith.divf %24, %25 : vector<1x256xf32>
    %27 = vector.broadcast %19 : vector<1x256xf32> to vector<8x256xf32>
    %28 = arith.subf %15, %27 : vector<8x256xf32>
    %cst_15 = arith.constant 8.000000e-01 : f32
    %29 = vector.broadcast %cst_15 : f32 to vector<1x256xf32>
    %30 = arith.addf %26, %29 : vector<1x256xf32>
    %31 = math.rsqrt %30 : vector<1x256xf32>
    %32 = vector.broadcast %31 : vector<1x256xf32> to vector<8x256xf32>
    %33 = arith.mulf %28, %32 : vector<8x256xf32>
    %c0_16 = arith.constant 0 : index
    %c0_17 = arith.constant 0 : index
    %34 = vector.load %arg5[%c0_16, %c0_17] : memref<1x256xf32, #tpu.memory_space<vmem>>, vector<1x256xf32>
    %35 = vector.broadcast %34 : vector<1x256xf32> to vector<8x256xf32>
    %36 = arith.mulf %35, %33 : vector<8x256xf32>
    %c0_18 = arith.constant 0 : index
    %c0_19 = arith.constant 0 : index
    %37 = vector.load %arg6[%c0_18, %c0_19] : memref<1x256xf32, #tpu.memory_space<vmem>>, vector<1x256xf32>
    %38 = vector.broadcast %37 : vector<1x256xf32> to vector<8x256xf32>
    %39 = arith.addf %36, %38 : vector<8x256xf32>
    %cst_20 = arith.constant 2.000000e-01 : f32
    %40 = vector.broadcast %cst_20 : f32 to vector<8x256xf32>
    %41 = arith.mulf %40, %39 : vector<8x256xf32>
    %42 = arith.maximumf %39, %41 : vector<8x256xf32>
    %43 = arith.truncf %42 : vector<8x256xf32> to vector<8x256xbf16>
    %c0_21 = arith.constant 0 : index
    %c0_22 = arith.constant 0 : index
    %44 = vector.load %arg7[%c0_21, %c0_22] : memref<256x512xbf16, #tpu.memory_space<vmem>>, vector<256x512xbf16>
    %cst_23 = arith.constant dense<0.000000e+00> : vector<8x512xf32>
    %45 = tpu.matmul %43, %44, %cst_23 {dimension_numbers = #tpu.dot_dimension_numbers<[1], [0], [0], [1], [0, 0, 1, 1], [], []>} : vector<8x256xbf16>, vector<256x512xbf16>, vector<8x512xf32> -> vector<8x512xf32>
    %c0_24 = arith.constant 0 : index
    %c0_25 = arith.constant 0 : index
    %46 = vector.load %arg8[%c0_24, %c0_25] : memref<1x512xf32, #tpu.memory_space<vmem>>, vector<1x512xf32>
    %47 = vector.broadcast %46 : vector<1x512xf32> to vector<8x512xf32>
    %48 = arith.addf %45, %47 : vector<8x512xf32>
    %cst_26 = arith.constant dense<0.000000e+00> : vector<512xf32>
    %49 = vector.multi_reduction <add>, %48, %cst_26 [0] : vector<8x512xf32> to vector<512xf32>
    %50 = vector.shape_cast %49 : vector<512xf32> to vector<1x512xf32>
    %cst_27 = arith.constant 8.000000e+00 : f32
    %51 = vector.broadcast %cst_27 : f32 to vector<1x512xf32>
    %52 = arith.divf %50, %51 : vector<1x512xf32>
    %53 = vector.broadcast %52 : vector<1x512xf32> to vector<8x512xf32>
    %54 = arith.subf %48, %53 : vector<8x512xf32>
    %55 = arith.mulf %54, %54 : vector<8x512xf32>
    %cst_28 = arith.constant dense<0.000000e+00> : vector<512xf32>
    %56 = vector.multi_reduction <add>, %55, %cst_28 [0] : vector<8x512xf32> to vector<512xf32>
    %57 = vector.shape_cast %56 : vector<512xf32> to vector<1x512xf32>
    %cst_29 = arith.constant 8.000000e+00 : f32
    %58 = vector.broadcast %cst_29 : f32 to vector<1x512xf32>
    %59 = arith.divf %57, %58 : vector<1x512xf32>
    %60 = vector.broadcast %52 : vector<1x512xf32> to vector<8x512xf32>
    %61 = arith.subf %48, %60 : vector<8x512xf32>
    %cst_30 = arith.constant 8.000000e-01 : f32
    %62 = vector.broadcast %cst_30 : f32 to vector<1x512xf32>
    %63 = arith.addf %59, %62 : vector<1x512xf32>
    %64 = math.rsqrt %63 : vector<1x512xf32>
    %65 = vector.broadcast %64 : vector<1x512xf32> to vector<8x512xf32>
    %66 = arith.mulf %61, %65 : vector<8x512xf32>
    %c0_31 = arith.constant 0 : index
    %c0_32 = arith.constant 0 : index
    %67 = vector.load %arg9[%c0_31, %c0_32] : memref<1x512xf32, #tpu.memory_space<vmem>>, vector<1x512xf32>
    %68 = vector.broadcast %67 : vector<1x512xf32> to vector<8x512xf32>
    %69 = arith.mulf %68, %66 : vector<8x512xf32>
    %c0_33 = arith.constant 0 : index
    %c0_34 = arith.constant 0 : index
    %70 = vector.load %arg10[%c0_33, %c0_34] : memref<1x512xf32, #tpu.memory_space<vmem>>, vector<1x512xf32>
    %71 = vector.broadcast %70 : vector<1x512xf32> to vector<8x512xf32>
    %72 = arith.addf %69, %71 : vector<8x512xf32>
    %cst_35 = arith.constant 2.000000e-01 : f32
    %73 = vector.broadcast %cst_35 : f32 to vector<8x512xf32>
    %74 = arith.mulf %73, %72 : vector<8x512xf32>
    %75 = arith.maximumf %72, %74 : vector<8x512xf32>
    %76 = arith.truncf %75 : vector<8x512xf32> to vector<8x512xbf16>
    %c0_36 = arith.constant 0 : index
    %c0_37 = arith.constant 0 : index
    %77 = vector.load %arg11[%c0_36, %c0_37] : memref<512x1024xbf16, #tpu.memory_space<vmem>>, vector<512x1024xbf16>
    %cst_38 = arith.constant dense<0.000000e+00> : vector<8x1024xf32>
    %78 = tpu.matmul %76, %77, %cst_38 {dimension_numbers = #tpu.dot_dimension_numbers<[1], [0], [0], [1], [0, 0, 1, 1], [], []>} : vector<8x512xbf16>, vector<512x1024xbf16>, vector<8x1024xf32> -> vector<8x1024xf32>
    %c0_39 = arith.constant 0 : index
    %c0_40 = arith.constant 0 : index
    %79 = vector.load %arg12[%c0_39, %c0_40] : memref<1x1024xf32, #tpu.memory_space<vmem>>, vector<1x1024xf32>
    %80 = vector.broadcast %79 : vector<1x1024xf32> to vector<8x1024xf32>
    %81 = arith.addf %78, %80 : vector<8x1024xf32>
    %cst_41 = arith.constant dense<0.000000e+00> : vector<1024xf32>
    %82 = vector.multi_reduction <add>, %81, %cst_41 [0] : vector<8x1024xf32> to vector<1024xf32>
    %83 = vector.shape_cast %82 : vector<1024xf32> to vector<1x1024xf32>
    %cst_42 = arith.constant 8.000000e+00 : f32
    %84 = vector.broadcast %cst_42 : f32 to vector<1x1024xf32>
    %85 = arith.divf %83, %84 : vector<1x1024xf32>
    %86 = vector.broadcast %85 : vector<1x1024xf32> to vector<8x1024xf32>
    %87 = arith.subf %81, %86 : vector<8x1024xf32>
    %88 = arith.mulf %87, %87 : vector<8x1024xf32>
    %cst_43 = arith.constant dense<0.000000e+00> : vector<1024xf32>
    %89 = vector.multi_reduction <add>, %88, %cst_43 [0] : vector<8x1024xf32> to vector<1024xf32>
    %90 = vector.shape_cast %89 : vector<1024xf32> to vector<1x1024xf32>
    %cst_44 = arith.constant 8.000000e+00 : f32
    %91 = vector.broadcast %cst_44 : f32 to vector<1x1024xf32>
    %92 = arith.divf %90, %91 : vector<1x1024xf32>
    %93 = vector.broadcast %85 : vector<1x1024xf32> to vector<8x1024xf32>
    %94 = arith.subf %81, %93 : vector<8x1024xf32>
    %cst_45 = arith.constant 8.000000e-01 : f32
    %95 = vector.broadcast %cst_45 : f32 to vector<1x1024xf32>
    %96 = arith.addf %92, %95 : vector<1x1024xf32>
    %97 = math.rsqrt %96 : vector<1x1024xf32>
    %98 = vector.broadcast %97 : vector<1x1024xf32> to vector<8x1024xf32>
    %99 = arith.mulf %94, %98 : vector<8x1024xf32>
    %c0_46 = arith.constant 0 : index
    %c0_47 = arith.constant 0 : index
    %100 = vector.load %arg13[%c0_46, %c0_47] : memref<1x1024xf32, #tpu.memory_space<vmem>>, vector<1x1024xf32>
    %101 = vector.broadcast %100 : vector<1x1024xf32> to vector<8x1024xf32>
    %102 = arith.mulf %101, %99 : vector<8x1024xf32>
    %c0_48 = arith.constant 0 : index
    %c0_49 = arith.constant 0 : index
    %103 = vector.load %arg14[%c0_48, %c0_49] : memref<1x1024xf32, #tpu.memory_space<vmem>>, vector<1x1024xf32>
    %104 = vector.broadcast %103 : vector<1x1024xf32> to vector<8x1024xf32>
    %105 = arith.addf %102, %104 : vector<8x1024xf32>
    %cst_50 = arith.constant 2.000000e-01 : f32
    %106 = vector.broadcast %cst_50 : f32 to vector<8x1024xf32>
    %107 = arith.mulf %106, %105 : vector<8x1024xf32>
    %108 = arith.maximumf %105, %107 : vector<8x1024xf32>
    %109 = arith.truncf %108 : vector<8x1024xf32> to vector<8x1024xbf16>
    %c0_51 = arith.constant 0 : index
    %c0_52 = arith.constant 0 : index
    %110 = vector.load %arg15[%c0_51, %c0_52] : memref<1024x128xbf16, #tpu.memory_space<vmem>>, vector<1024x128xbf16>
    %cst_53 = arith.constant dense<0.000000e+00> : vector<8x128xf32>
    %111 = tpu.matmul %109, %110, %cst_53 {dimension_numbers = #tpu.dot_dimension_numbers<[1], [0], [0], [1], [0, 0, 1, 1], [], []>} : vector<8x1024xbf16>, vector<1024x128xbf16>, vector<8x128xf32> -> vector<8x128xf32>
    %c0_54 = arith.constant 0 : index
    %c0_55 = arith.constant 0 : index
    %112 = vector.load %arg16[%c0_54, %c0_55] : memref<1x128xf32, #tpu.memory_space<vmem>>, vector<1x128xf32>
    %113 = vector.broadcast %112 : vector<1x128xf32> to vector<8x128xf32>
    %114 = arith.addf %111, %113 : vector<8x128xf32>
    %115 = math.tanh %114 : vector<8x128xf32>
    %c0_56 = arith.constant 0 : index
    %c0_57 = arith.constant 0 : index
    %116 = vector.load %arg17[%c0_56, %c0_57] : memref<8x128xf32, #tpu.memory_space<vmem>>, vector<8x128xf32>
    tpu.vector_store %arg17[%c0_56, %c0_57], %115 {strides = array<i32>} : memref<8x128xf32, #tpu.memory_space<vmem>>, vector<8x128xf32>,
    return
  }
}

</mosaic_0001>

<llo_original>
// kernel: generator_forward.1
$region0: #{generator_forward.1}
  #allocation0 [shape = 'u32[]', space=smem, size = 0x4, offset = 0x4, fixed_abs, tag = 'smem constant byte address 0x4 - core index']
  #allocation1 [shape = 'u32[144,128]{1,0:T(1,128)}', space=vmem, size = 0x12000, scoped, tag = 'internal scratch']
  %s0 = inlined_call_operand.hbm [shape: f32[8,16], index: 0, kind: input, shape index: {}]
  %s1 = inlined_call_operand.hbm [shape: bf16[16,128], index: 1, kind: input, shape index: {}]
  %s2 = inlined_call_operand.hbm [shape: f32[1,128], index: 2, kind: input, shape index: {}]
  %s3 = inlined_call_operand.hbm [shape: bf16[128,256], index: 3, kind: input, shape index: {}]
  %s4 = inlined_call_operand.vmem [shape: f32[1,256], index: 4, kind: input, shape index: {}]
  %s5 = inlined_call_operand.hbm [shape: f32[1,256], index: 5, kind: input, shape index: {}]
  %s6 = inlined_call_operand.hbm [shape: f32[1,256], index: 6, kind: input, shape index: {}]
  %s7 = inlined_call_operand.hbm [shape: bf16[256,512], index: 7, kind: input, shape index: {}]
  %s8 = inlined_call_operand.hbm [shape: f32[1,512], index: 8, kind: input, shape index: {}]
  %s9 = inlined_call_operand.vmem [shape: f32[1,512], index: 9, kind: input, shape index: {}]
  %s10 = inlined_call_operand.hbm [shape: f32[1,512], index: 10, kind: input, shape index: {}]
  %s11 = inlined_call_operand.hbm [shape: bf16[512,1024], index: 11, kind: input, shape index: {}]
  %s12 = inlined_call_operand.vmem [shape: f32[1,1024], index: 12, kind: input, shape index: {}]
  %s13 = inlined_call_operand.vmem [shape: f32[1,1024], index: 13, kind: input, shape index: {}]
  %s14 = inlined_call_operand.vmem [shape: f32[1,1024], index: 14, kind: input, shape index: {}]
  %s15 = inlined_call_operand.hbm [shape: bf16[1024,128], index: 15, kind: input, shape index: {}]
  %s16 = inlined_call_operand.vmem [shape: f32[1,128], index: 16, kind: input, shape index: {}]
  %s17 = inlined_call_operand.vmem [shape: f32[8,128], index: 17, kind: output, shape index: {}]
  %s18 = sld [smem:[#allocation0]]
  $region122: #{generator_forward.1} parent=0
    _
  %s20 = ssub.s32 1, %s18
  %s21 = scalar_select 0, %s20, %s18
  $region1: #{generator_forward.1} parent=0
    #allocation2 [shape = 'u8[4096]{0}', space=vmem, size = 0x1000, scoped, tag = 'input window, operand 0, single buffered']
    #allocation3 [shape = 's32[1]{0}', space=sflag, size = 0x4, scoped, tag = 'scoped memory for generator_forward.1']
    #allocation4 [shape = 'u8[4096]{0}', space=vmem, size = 0x1000, scoped, tag = 'input window, operand 1, single buffered']
    #allocation5 [shape = 's32[1]{0}', space=sflag, size = 0x4, scoped, tag = 'scoped memory for generator_forward.1']
    #allocation6 [shape = 'u8[512]{0}', space=vmem, size = 0x400, scoped, tag = 'input window, operand 2, single buffered']
    #allocation7 [shape = 'u8[65536]{0}', space=vmem, size = 0x10000, scoped, tag = 'input window, operand 3, single buffered']
    #allocation8 [shape = 's32[1]{0}', space=sflag, size = 0x4, scoped, tag = 'scoped memory for generator_forward.1']
    #allocation9 [shape = 'u8[1024]{0}', space=vmem, size = 0x400, scoped, tag = 'input window, operand 5, single buffered']
    #allocation10 [shape = 'u8[1024]{0}', space=vmem, size = 0x400, scoped, tag = 'input window, operand 6, single buffered']
    #allocation11 [shape = 's32[1]{0}', space=sflag, size = 0x4, scoped, tag = 'scoped memory for generator_forward.1']
    #allocation12 [shape = 'u8[262144]{0}', space=vmem, size = 0x40000, scoped, tag = 'input window, operand 7, single buffered']
    #allocation13 [shape = 'u8[2048]{0}', space=vmem, size = 0x800, scoped, tag = 'input window, operand 8, single buffered']
    #allocation14 [shape = 's32[1]{0}', space=sflag, size = 0x4, scoped, tag = 'scoped memory for generator_forward.1']
    #allocation15 [shape = 'u8[2048]{0}', space=vmem, size = 0x800, scoped, tag = 'input window, operand 10, single buffered']
    #allocation16 [shape = 'u8[1048576]{0}', space=vmem, size = 0x100000, scoped, tag = 'input window, operand 11, single buffered']
    #allocation17 [shape = 's32[1]{0}', space=sflag, size = 0x4, scoped, tag = 'scoped memory for generator_forward.1']
    #allocation18 [shape = 'u8[262144]{0}', space=vmem, size = 0x40000, scoped, tag = 'input window, operand 15, single buffered']
    %22 = vsyncpa [#allocation3], 0
    %23 = vsyncpa [#allocation5], 0
    %24 = vsyncpa [#allocation8], 0
    %25 = vsyncpa [#allocation11], 0
    %26 = vsyncpa [#allocation14], 0
    %27 = vsyncpa [#allocation17], 0
    // Predicated region
    $region2: #{generator_forward.1} parent=1 // pred_check
      _
    $region3: #{generator_forward.1} parent=1 // pred_check_branch
      %29 = sbr.rel (0) target = $region5
    $region4: #{generator_forward.1} parent=1 // pred_region
      %s31 = ssub.s32 128, 128
      %32 = vsyncadd [#allocation3], %s31
      %s34 = sshll.u32 [#allocation2], 4
      %s35 = int_to_ptr.vmem [resolvable:$true] %s34
      %37 = dma.hbm_to_vmem [thread:$0]  %s0, 128, %s35, [#allocation3]
    $region5: #{generator_forward.1} parent=1 // pred_fallthru
      _
    // Predicated region
    $region6: #{generator_forward.1} parent=1 // pred_check
      _
    $region7: #{generator_forward.1} parent=1 // pred_check_branch
      %39 = sbr.rel (0) target = $region9
    $region8: #{generator_forward.1} parent=1 // pred_region
      %s41 = ssub.s32 128, 128
      %42 = vsyncadd [#allocation5], %s41
      %s43 = sshll.u32 [#allocation4], 4
      %s44 = int_to_ptr.vmem [resolvable:$true] %s43
      %49 = dma.hbm_to_vmem [thread:$0]  %s1, 128, %s44, [#allocation5], 64, 64, 4
    $region9: #{generator_forward.1} parent=1 // pred_fallthru
      _
    // Predicated region
    $region10: #{generator_forward.1} parent=1 // pred_check
      _
    $region11: #{generator_forward.1} parent=1 // pred_check_branch
      %51 = sbr.rel (0) target = $region13
    $region12: #{generator_forward.1} parent=1 // pred_region
      %s53 = ssub.s32 16, 16
      %54 = vsyncadd [#allocation5], %s53
      %s56 = sshll.u32 [#allocation6], 4
      %s57 = int_to_ptr.vmem [resolvable:$true] %s56
      %59 = dma.hbm_to_vmem [thread:$0]  %s2, 16, %s57, [#allocation5]
    $region13: #{generator_forward.1} parent=1 // pred_fallthru
      _
    // Predicated region
    $region14: #{generator_forward.1} parent=1 // pred_check
      _
    $region15: #{generator_forward.1} parent=1 // pred_check_branch
      %61 = sbr.rel (0) target = $region17
    $region16: #{generator_forward.1} parent=1 // pred_region
      %s63 = ssub.s32 2048, 2048
      %64 = vsyncadd [#allocation8], %s63
      %s65 = sshll.u32 [#allocation7], 4
      %s66 = int_to_ptr.vmem [resolvable:$true] %s65
      %71 = dma.hbm_to_vmem [thread:$0]  %s3, 2048, %s66, [#allocation8], 128, 128, 8
    $region17: #{generator_forward.1} parent=1 // pred_fallthru
      _
    // Predicated region
    $region18: #{generator_forward.1} parent=1 // pred_check
      _
    $region19: #{generator_forward.1} parent=1 // pred_check_branch
      %73 = sbr.rel (0) target = $region21
    $region20: #{generator_forward.1} parent=1 // pred_region
      _
    $region21: #{generator_forward.1} parent=1 // pred_fallthru
      _
    // Predicated region
    $region22: #{generator_forward.1} parent=1 // pred_check
      _
    $region23: #{generator_forward.1} parent=1 // pred_check_branch
      %75 = sbr.rel (0) target = $region25
    $region24: #{generator_forward.1} parent=1 // pred_region
      %s77 = ssub.s32 32, 32
      %78 = vsyncadd [#allocation8], %s77
      %s80 = sshll.u32 [#allocation9], 4
      %s81 = int_to_ptr.vmem [resolvable:$true] %s80
      %83 = dma.hbm_to_vmem [thread:$0]  %s5, 32, %s81, [#allocation8]
    $region25: #{generator_forward.1} parent=1 // pred_fallthru
      _
    // Predicated region
    $region26: #{generator_forward.1} parent=1 // pred_check
      _
    $region27: #{generator_forward.1} parent=1 // pred_check_branch
      %85 = sbr.rel (0) target = $region29
    $region28: #{generator_forward.1} parent=1 // pred_region
      %s87 = ssub.s32 32, 32
      %88 = vsyncadd [#allocation11], %s87
      %s90 = sshll.u32 [#allocation10], 4
      %s91 = int_to_ptr.vmem [resolvable:$true] %s90
      %93 = dma.hbm_to_vmem [thread:$0]  %s6, 32, %s91, [#allocation11]
    $region29: #{generator_forward.1} parent=1 // pred_fallthru
      _
    // Predicated region
    $region30: #{generator_forward.1} parent=1 // pred_check
      _
    $region31: #{generator_forward.1} parent=1 // pred_check_branch
      %95 = sbr.rel (0) target = $region33
    $region32: #{generator_forward.1} parent=1 // pred_region
      %s97 = ssub.s32 8192, 8192
      %98 = vsyncadd [#allocation11], %s97
      %s99 = sshll.u32 [#allocation12], 4
      %s100 = int_to_ptr.vmem [resolvable:$true] %s99
      %105 = dma.hbm_to_vmem [thread:$0]  %s7, 8192, %s100, [#allocation11], 256, 256, 16
    $region33: #{generator_forward.1} parent=1 // pred_fallthru
      _
    // Predicated region
    $region34: #{generator_forward.1} parent=1 // pred_check
      _
    $region35: #{generator_forward.1} parent=1 // pred_check_branch
      %107 = sbr.rel (0) target = $region37
    $region36: #{generator_forward.1} parent=1 // pred_region
      %s109 = ssub.s32 64, 64
      %110 = vsyncadd [#allocation14], %s109
      %s112 = sshll.u32 [#allocation13], 4
      %s113 = int_to_ptr.vmem [resolvable:$true] %s112
      %115 = dma.hbm_to_vmem [thread:$0]  %s8, 64, %s113, [#allocation14]
    $region37: #{generator_forward.1} parent=1 // pred_fallthru
      _
    // Predicated region
    $region38: #{generator_forward.1} parent=1 // pred_check
      _
    $region39: #{generator_forward.1} parent=1 // pred_check_branch
      %117 = sbr.rel (0) target = $region41
    $region40: #{generator_forward.1} parent=1 // pred_region
      _
    $region41: #{generator_forward.1} parent=1 // pred_fallthru
      _
    // Predicated region
    $region42: #{generator_forward.1} parent=1 // pred_check
      _
    $region43: #{generator_forward.1} parent=1 // pred_check_branch
      %119 = sbr.rel (0) target = $region45
    $region44: #{generator_forward.1} parent=1 // pred_region
      %s121 = ssub.s32 64, 64
      %122 = vsyncadd [#allocation14], %s121
      %s124 = sshll.u32 [#allocation15], 4
      %s125 = int_to_ptr.vmem [resolvable:$true] %s124
      %127 = dma.hbm_to_vmem [thread:$0]  %s10, 64, %s125, [#allocation14]
    $region45: #{generator_forward.1} parent=1 // pred_fallthru
      _
    // Predicated region
    $region46: #{generator_forward.1} parent=1 // pred_check
      _
    $region47: #{generator_forward.1} parent=1 // pred_check_branch
      %129 = sbr.rel (0) target = $region49
    $region48: #{generator_forward.1} parent=1 // pred_region
      %s131 = ssub.s32 32768, 32768
      %132 = vsyncadd [#allocation17], %s131
      %s133 = sshll.u32 [#allocation16], 4
      %s134 = int_to_ptr.vmem [resolvable:$true] %s133
      %139 = dma.hbm_to_vmem [thread:$0]  %s11, 32768, %s134, [#allocation17], 512, 512, 32
    $region49: #{generator_forward.1} parent=1 // pred_fallthru
      _
    // Predicated region
    $region50: #{generator_forward.1} parent=1 // pred_check
      _
    $region51: #{generator_forward.1} parent=1 // pred_check_branch
      %141 = sbr.rel (0) target = $region53
    $region52: #{generator_forward.1} parent=1 // pred_region
      _
    $region53: #{generator_forward.1} parent=1 // pred_fallthru
      _
    // Predicated region
    $region54: #{generator_forward.1} parent=1 // pred_check
      _
    $region55: #{generator_forward.1} parent=1 // pred_check_branch
      %143 = sbr.rel (0) target = $region57
    $region56: #{generator_forward.1} parent=1 // pred_region
      _
    $region57: #{generator_forward.1} parent=1 // pred_fallthru
      _
    // Predicated region
    $region58: #{generator_forward.1} parent=1 // pred_check
      _
    $region59: #{generator_forward.1} parent=1 // pred_check_branch
      %145 = sbr.rel (0) target = $region61
    $region60: #{generator_forward.1} parent=1 // pred_region
      _
    $region61: #{generator_forward.1} parent=1 // pred_fallthru
      _
    // Predicated region
    $region62: #{generator_forward.1} parent=1 // pred_check
      _
    $region63: #{generator_forward.1} parent=1 // pred_check_branch
      %147 = sbr.rel (0) target = $region65
    $region64: #{generator_forward.1} parent=1 // pred_region
      %s149 = ssub.s32 8192, 8192
      %150 = vsyncadd [#allocation17], %s149
      %s151 = sshll.u32 [#allocation18], 4
      %s152 = int_to_ptr.vmem [resolvable:$true] %s151
      %157 = dma.hbm_to_vmem [thread:$0]  %s15, 8192, %s152, [#allocation17], 64, 64, 4
    $region65: #{generator_forward.1} parent=1 // pred_fallthru
      _
    // Predicated region
    $region66: #{generator_forward.1} parent=1 // pred_check
      _
    $region67: #{generator_forward.1} parent=1 // pred_check_branch
      %159 = sbr.rel (0) target = $region69
    $region68: #{generator_forward.1} parent=1 // pred_region
      _
    $region69: #{generator_forward.1} parent=1 // pred_fallthru
      _
    // Predicated region
    $region70: #{generator_forward.1} parent=1 // pred_check
      _
    $region71: #{generator_forward.1} parent=1 // pred_check_branch
      %161 = sbr.rel (0) target = $region73
    $region72: #{generator_forward.1} parent=1 // pred_region
      %162 = dma.done [#allocation3], 128
    $region73: #{generator_forward.1} parent=1 // pred_fallthru
      _
    // Predicated region
    $region74: #{generator_forward.1} parent=1 // pred_check
      _
    $region75: #{generator_forward.1} parent=1 // pred_check_branch
      %164 = sbr.rel (0) target = $region77
    $region76: #{generator_forward.1} parent=1 // pred_region
      %165 = dma.done [#allocation5], 128
    $region77: #{generator_forward.1} parent=1 // pred_fallthru
      _
    // Predicated region
    $region78: #{generator_forward.1} parent=1 // pred_check
      _
    $region79: #{generator_forward.1} parent=1 // pred_check_branch
      %167 = sbr.rel (0) target = $region81
    $region80: #{generator_forward.1} parent=1 // pred_region
      %168 = dma.done [#allocation5], 16
    $region81: #{generator_forward.1} parent=1 // pred_fallthru
      _
    // Predicated region
    $region82: #{generator_forward.1} parent=1 // pred_check
      _
    $region83: #{generator_forward.1} parent=1 // pred_check_branch
      %170 = sbr.rel (0) target = $region85
    $region84: #{generator_forward.1} parent=1 // pred_region
      %171 = dma.done [#allocation8], 2048
    $region85: #{generator_forward.1} parent=1 // pred_fallthru
      _
    // Predicated region
    $region86: #{generator_forward.1} parent=1 // pred_check
      _
    $region87: #{generator_forward.1} parent=1 // pred_check_branch
      %173 = sbr.rel (0) target = $region89
    $region88: #{generator_forward.1} parent=1 // pred_region
      %174 = dma.done [#allocation8], 32
    $region89: #{generator_forward.1} parent=1 // pred_fallthru
      _
    // Predicated region
    $region90: #{generator_forward.1} parent=1 // pred_check
      _
    $region91: #{generator_forward.1} parent=1 // pred_check_branch
      %176 = sbr.rel (0) target = $region93
    $region92: #{generator_forward.1} parent=1 // pred_region
      %177 = dma.done [#allocation11], 32
    $region93: #{generator_forward.1} parent=1 // pred_fallthru
      _
    // Predicated region
    $region94: #{generator_forward.1} parent=1 // pred_check
      _
    $region95: #{generator_forward.1} parent=1 // pred_check_branch
      %179 = sbr.rel (0) target = $region97
    $region96: #{generator_forward.1} parent=1 // pred_region
      %180 = dma.done [#allocation11], 8192
    $region97: #{generator_forward.1} parent=1 // pred_fallthru
      _
    // Predicated region
    $region98: #{generator_forward.1} parent=1 // pred_check
      _
    $region99: #{generator_forward.1} parent=1 // pred_check_branch
      %182 = sbr.rel (0) target = $region101
    $region100: #{generator_forward.1} parent=1 // pred_region
      %183 = dma.done [#allocation14], 64
    $region101: #{generator_forward.1} parent=1 // pred_fallthru
      _
    // Predicated region
    $region102: #{generator_forward.1} parent=1 // pred_check
      _
    $region103: #{generator_forward.1} parent=1 // pred_check_branch
      %185 = sbr.rel (0) target = $region105
    $region104: #{generator_forward.1} parent=1 // pred_region
      %186 = dma.done [#allocation14], 64
    $region105: #{generator_forward.1} parent=1 // pred_fallthru
      _
    // Predicated region
    $region106: #{generator_forward.1} parent=1 // pred_check
      _
    $region107: #{generator_forward.1} parent=1 // pred_check_branch
      %188 = sbr.rel (0) target = $region109
    $region108: #{generator_forward.1} parent=1 // pred_region
      %189 = dma.done [#allocation17], 32768
    $region109: #{generator_forward.1} parent=1 // pred_fallthru
      _
    // Predicated region
    $region110: #{generator_forward.1} parent=1 // pred_check
      _
    $region111: #{generator_forward.1} parent=1 // pred_check_branch
      %191 = sbr.rel (0) target = $region113
    $region112: #{generator_forward.1} parent=1 // pred_region
      %192 = dma.done [#allocation17], 8192
    $region113: #{generator_forward.1} parent=1 // pred_fallthru
      _
    %v194 = vld [vmem:[#allocation2] sm:$0xff]
    %v195 = vpack.c.bf16 %v194, %v194
    %v196 = vld [vmem:[#allocation4] sm:$0xf]
    %v197 = vld [vmem:[#allocation4 + $0x4] sm:$0xf]
    %v198 = vld [vmem:[#allocation6] sm:$0x1]
    %v200 = vlaneseq
    %v201 = vshrl.u32 %v200, 7
    %v202 = vsub.s32 0, %v201
    %v203 = vrot.slane %v198, %v202
    %v207 = vunpack.c.l.b16 %v196
    %v208 = vunpack.c.l.b16 %v197
    %v209 = vpack.c.b16 %v208, %v207
    %vm211 = vcmask 130048
    %v213 = vsel %vm211, %v195, 0
    %215 = vmatprep.subr.bf16.mxu0 0
    %216 = vmatpush1.bf16.msra.mxu0 %v209
    %217 = vmatprep.subr.bf16.mxu0 0
    %218 = vmatpush1.bf16.msra.mxu0 0
    %219 = vmatprep.subr.bf16.mxu0 0
    %220 = vmatpush1.bf16.msra.mxu0 0
    %221 = vmatprep.subr.bf16.mxu0 0
    %222 = vmatpush1.bf16.msra.mxu0 0
    %223 = vmatprep.subr.bf16.mxu0 0
    %224 = vmatpush1.bf16.msra.mxu0 0
    %225 = vmatprep.subr.bf16.mxu0 0
    %226 = vmatpush1.bf16.msra.mxu0 0
    %227 = vmatprep.subr.bf16.mxu0 0
    %228 = vmatpush1.bf16.msra.mxu0 0
    %229 = vmatprep.subr.bf16.mxu0 0
    %230 = vmatpush1.bf16.msra.mxu0 0
    %231 = vmatprep.subr.bf16.mxu0 0
    %232 = vmatpush1.bf16.msra.mxu0 0
    %233 = vmatprep.subr.bf16.mxu0 0
    %234 = vmatpush1.bf16.msra.mxu0 0
    %235 = vmatprep.subr.bf16.mxu0 0
    %236 = vmatpush1.bf16.msra.mxu0 0
    %237 = vmatprep.subr.bf16.mxu0 0
    %238 = vmatpush1.bf16.msra.mxu0 0
    %239 = vmatprep.subr.bf16.mxu0 0
    %240 = vmatpush1.bf16.msra.mxu0 0
    %241 = vmatprep.subr.bf16.mxu0 0
    %242 = vmatpush1.bf16.msra.mxu0 0
    %243 = vmatprep.subr.bf16.mxu0 0
    %244 = vmatpush1.bf16.msra.mxu0 0
    %245 = vmatprep.subr.bf16.mxu0 0
    %246 = vmatpush1.bf16.msra.mxu0 0
    %247 = vmatprep.mubr.bf16.mxu0 0
    %248 = vmatmul.mubr.bf16.gmra.mrb[0].mxu0 %v213
    %v249 = vpop.f32.mrb[0].mxu0
    %v250 = vadd.f32 %v203, %v249
    %v251 = vpop.f32.mrb[0].mxu0
    %v252 = vpop.f32.mrb[0].mxu0
    %v253 = vpop.f32.mrb[0].mxu0
    %254 = vdwg.mxu0
    %v255 = vmul.f32 %v250, 0.2
    %v256 = vmax.f32 %v250, %v255
    %v257 = vpack.c.bf16 %v256, %v256
    %v258 = vld [vmem:[#allocation7] sm:$0xff]
    %v259 = vld [vmem:[#allocation7 + $0x8] sm:$0xff]
    %v260 = vld [vmem:[#allocation7 + $0x10] sm:$0xff]
    %v261 = vld [vmem:[#allocation7 + $0x18] sm:$0xff]
    %v262 = vld [vmem:[#allocation7 + $0x20] sm:$0xff]
    %v263 = vld [vmem:[#allocation7 + $0x28] sm:$0xff]
    %v264 = vld [vmem:[#allocation7 + $0x30] sm:$0xff]
    %v265 = vld [vmem:[#allocation7 + $0x38] sm:$0xff]
    %v266 = vld [vmem:[#allocation7 + $0x40] sm:$0xff]
    %v267 = vld [vmem:[#allocation7 + $0x48] sm:$0xff]
    %v268 = vld [vmem:[#allocation7 + $0x50] sm:$0xff]
    %v269 = vld [vmem:[#allocation7 + $0x58] sm:$0xff]
    %v270 = vld [vmem:[#allocation7 + $0x60] sm:$0xff]
    %v271 = vld [vmem:[#allocation7 + $0x68] sm:$0xff]
    %v272 = vld [vmem:[#allocation7 + $0x70] sm:$0xff]
    %v273 = vld [vmem:[#allocation7 + $0x78] sm:$0xff]
    %v274 = vld [vmem:[%s4] sm:$0x3]
    %v276 = vlaneseq
    %v277 = vshrl.u32 %v276, 7
    %v278 = vsub.s32 0, %v277
    %v279 = vrot.slane %v274, %v278
    %v280 = vlaneseq
    %v281 = vshrl.u32 %v280, 7
    %v282 = vsub.s32 1, %v281
    %v283 = vrot.slane %v274, %v282
    %v302 = vunpack.c.l.b16 %v258
    %v303 = vunpack.c.h.b16 %v258
    %v304 = vunpack.c.l.b16 %v259
    %v305 = vunpack.c.h.b16 %v259
    %v306 = vunpack.c.l.b16 %v260
    %v307 = vunpack.c.h.b16 %v260
    %v308 = vunpack.c.l.b16 %v261
    %v309 = vunpack.c.h.b16 %v261
    %v310 = vunpack.c.l.b16 %v262
    %v311 = vunpack.c.h.b16 %v262
    %v312 = vunpack.c.l.b16 %v263
    %v313 = vunpack.c.h.b16 %v263
    %v314 = vunpack.c.l.b16 %v264
    %v315 = vunpack.c.h.b16 %v264
    %v316 = vunpack.c.l.b16 %v265
    %v317 = vunpack.c.h.b16 %v265
    %v318 = vunpack.c.l.b16 %v266
    %v319 = vunpack.c.h.b16 %v266
    %v320 = vunpack.c.l.b16 %v267
    %v321 = vunpack.c.h.b16 %v267
    %v322 = vunpack.c.l.b16 %v268
    %v323 = vunpack.c.h.b16 %v268
    %v324 = vunpack.c.l.b16 %v269
    %v325 = vunpack.c.h.b16 %v269
    %v326 = vunpack.c.l.b16 %v270
    %v327 = vunpack.c.h.b16 %v270
    %v328 = vunpack.c.l.b16 %v271
    %v329 = vunpack.c.h.b16 %v271
    %v330 = vunpack.c.l.b16 %v272
    %v331 = vunpack.c.h.b16 %v272
    %v332 = vunpack.c.l.b16 %v273
    %v333 = vunpack.c.h.b16 %v273
    %v334 = vpack.c.b16 %v304, %v302
    %v335 = vpack.c.b16 %v305, %v303
    %v336 = vpack.c.b16 %v308, %v306
    %v337 = vpack.c.b16 %v309, %v307
    %v338 = vpack.c.b16 %v312, %v310
    %v339 = vpack.c.b16 %v313, %v311
    %v340 = vpack.c.b16 %v316, %v314
    %v341 = vpack.c.b16 %v317, %v315
    %v342 = vpack.c.b16 %v320, %v318
    %v343 = vpack.c.b16 %v321, %v319
    %v344 = vpack.c.b16 %v324, %v322
    %v345 = vpack.c.b16 %v325, %v323
    %v346 = vpack.c.b16 %v328, %v326
    %v347 = vpack.c.b16 %v329, %v327
    %v348 = vpack.c.b16 %v332, %v330
    %v349 = vpack.c.b16 %v333, %v331
    %366 = vmatprep.subr.bf16.mxu0 %v335
    %367 = vmatpush1.bf16.msra.mxu0 %v334
    %368 = vmatprep.subr.bf16.mxu0 %v337
    %369 = vmatpush1.bf16.msra.mxu0 %v336
    %370 = vmatprep.subr.bf16.mxu0 %v339
    %371 = vmatpush1.bf16.msra.mxu0 %v338
    %372 = vmatprep.subr.bf16.mxu0 %v341
    %373 = vmatpush1.bf16.msra.mxu0 %v340
    %374 = vmatprep.subr.bf16.mxu0 %v343
    %375 = vmatpush1.bf16.msra.mxu0 %v342
    %376 = vmatprep.subr.bf16.mxu0 %v345
    %377 = vmatpush1.bf16.msra.mxu0 %v344
    %378 = vmatprep.subr.bf16.mxu0 %v347
    %379 = vmatpush1.bf16.msra.mxu0 %v346
    %380 = vmatprep.subr.bf16.mxu0 %v349
    %381 = vmatpush1.bf16.msra.mxu0 %v348
    %382 = vmatprep.subr.bf16.mxu0 0
    %383 = vmatpush1.bf16.msra.mxu0 0
    %384 = vmatprep.subr.bf16.mxu0 0
    %385 = vmatpush1.bf16.msra.mxu0 0
    %386 = vmatprep.subr.bf16.mxu0 0
    %387 = vmatpush1.bf16.msra.mxu0 0
    %388 = vmatprep.subr.bf16.mxu0 0
    %389 = vmatpush1.bf16.msra.mxu0 0
    %390 = vmatprep.subr.bf16.mxu0 0
    %391 = vmatpush1.bf16.msra.mxu0 0
    %392 = vmatprep.subr.bf16.mxu0 0
    %393 = vmatpush1.bf16.msra.mxu0 0
    %394 = vmatprep.subr.bf16.mxu0 0
    %395 = vmatpush1.bf16.msra.mxu0 0
    %396 = vmatprep.subr.bf16.mxu0 0
    %397 = vmatpush1.bf16.msra.mxu0 0
    %398 = vmatprep.mubr.bf16.mxu0 0
    %399 = vmatmul.mubr.bf16.gmra.mrb[0].mxu0 %v257
    %v400 = vpop.f32.mrb[0].mxu0
    %v401 = vadd.f32 %v279, %v400
    %v402 = vpop.f32.mrb[0].mxu0
    %v403 = vadd.f32 %v283, %v402
    %v404 = vpop.f32.mrb[0].mxu0
    %v405 = vpop.f32.mrb[0].mxu0
    %406 = vdwg.mxu0
    %v407 = vrot.slane %v401, 4
    %v408 = vadd.f32 %v401, %v407
    %v409 = vrot.slane %v408, 2
    %v410 = vadd.f32 %v408, %v409
    %v411 = vrot.slane %v410, 1
    %v412 = vadd.f32 %v410, %v411
    %v413 = vrot.slane %v403, 4
    %v414 = vadd.f32 %v403, %v413
    %v415 = vrot.slane %v414, 2
    %v416 = vadd.f32 %v414, %v415
    %v417 = vrot.slane %v416, 1
    %v418 = vadd.f32 %v416, %v417
    %v419 = vrcp.pop 8.0
    %v420 = vmul.f32 %v412, %v419
    %v421 = vmul.f32 %v418, %v419
    %v422 = vsub.f32 %v401, %v420
    %v423 = vsub.f32 %v403, %v421
    %v424 = vmul.f32 %v422, %v422
    %v425 = vmul.f32 %v423, %v423
    %v426 = vrot.slane %v424, 4
    %v427 = vadd.f32 %v424, %v426
    %v428 = vrot.slane %v427, 2
    %v429 = vadd.f32 %v427, %v428
    %v430 = vrot.slane %v429, 1
    %v431 = vadd.f32 %v429, %v430
    %v432 = vrot.slane %v425, 4
    %v433 = vadd.f32 %v425, %v432
    %v434 = vrot.slane %v433, 2
    %v435 = vadd.f32 %v433, %v434
    %v436 = vrot.slane %v435, 1
    %v437 = vadd.f32 %v435, %v436
    %v438 = vmul.f32 %v431, %v419
    %v439 = vmul.f32 %v437, %v419
    %v440 = vadd.f32 %v438, 0.8
    %v441 = vadd.f32 %v439, 0.8
    %v442 = vrsqrt.pop %v440
    %v443 = vrsqrt.pop %v441
    %v444 = vmul.f32 %v422, %v442
    %v445 = vmul.f32 %v423, %v443
    %v446 = vld [vmem:[#allocation9] sm:$0x3]
    %v448 = vlaneseq
    %v449 = vshrl.u32 %v448, 7
    %v450 = vsub.s32 0, %v449
    %v451 = vrot.slane %v446, %v450
    %v452 = vlaneseq
    %v453 = vshrl.u32 %v452, 7
    %v454 = vsub.s32 1, %v453
    %v455 = vrot.slane %v446, %v454
    %v458 = vmul.f32 %v451, %v444
    %v459 = vmul.f32 %v455, %v445
    %v460 = vld [vmem:[#allocation10] sm:$0x3]
    %v462 = vlaneseq
    %v463 = vshrl.u32 %v462, 7
    %v464 = vsub.s32 0, %v463
    %v465 = vrot.slane %v460, %v464
    %v466 = vlaneseq
    %v467 = vshrl.u32 %v466, 7
    %v468 = vsub.s32 1, %v467
    %v469 = vrot.slane %v460, %v468
    %v472 = vadd.f32 %v458, %v465
    %v473 = vadd.f32 %v459, %v469
    %v474 = vmul.f32 %v472, 0.2
    %v475 = vmul.f32 %v473, 0.2
    %v476 = vmax.f32 %v472, %v474
    %v477 = vmax.f32 %v473, %v475
    %v478 = vpack.c.bf16 %v476, %v476
    %v479 = vpack.c.bf16 %v477, %v477
    %v480 = vld [vmem:[#allocation12] sm:$0xff]
    %v481 = vld [vmem:[#allocation12 + $0x8] sm:$0xff]
    %v482 = vld [vmem:[#allocation12 + $0x10] sm:$0xff]
    %v483 = vld [vmem:[#allocation12 + $0x18] sm:$0xff]
    %v484 = vld [vmem:[#allocation12 + $0x20] sm:$0xff]
    %v485 = vld [vmem:[#allocation12 + $0x28] sm:$0xff]
    %v486 = vld [vmem:[#allocation12 + $0x30] sm:$0xff]
    %v487 = vld [vmem:[#allocation12 + $0x38] sm:$0xff]
    %v488 = vld [vmem:[#allocation12 + $0x40] sm:$0xff]
    %v489 = vld [vmem:[#allocation12 + $0x48] sm:$0xff]
    %v490 = vld [vmem:[#allocation12 + $0x50] sm:$0xff]
    %v491 = vld [vmem:[#allocation12 + $0x58] sm:$0xff]
    %v492 = vld [vmem:[#allocation12 + $0x60] sm:$0xff]
    %v493 = vld [vmem:[#allocation12 + $0x68] sm:$0xff]
    %v494 = vld [vmem:[#allocation12 + $0x70] sm:$0xff]
    %v495 = vld [vmem:[#allocation12 + $0x78] sm:$0xff]
    %v496 = vld [vmem:[#allocation12 + $0x80] sm:$0xff]
    %v497 = vld [vmem:[#allocation12 + $0x88] sm:$0xff]
    %v498 = vld [vmem:[#allocation12 + $0x90] sm:$0xff]
    %v499 = vld [vmem:[#allocation12 + $0x98] sm:$0xff]
    %v500 = vld [vmem:[#allocation12 + $0xa0] sm:$0xff]
    %v501 = vld [vmem:[#allocation12 + $0xa8] sm:$0xff]
    %v502 = vld [vmem:[#allocation12 + $0xb0] sm:$0xff]
    %v503 = vld [vmem:[#allocation12 + $0xb8] sm:$0xff]
    %v504 = vld [vmem:[#allocation12 + $0xc0] sm:$0xff]
    %v505 = vld [vmem:[#allocation12 + $0xc8] sm:$0xff]
    %v506 = vld [vmem:[#allocation12 + $0xd0] sm:$0xff]
    %v507 = vld [vmem:[#allocation12 + $0xd8] sm:$0xff]
    %v508 = vld [vmem:[#allocation12 + $0xe0] sm:$0xff]
    %v509 = vld [vmem:[#allocation12 + $0xe8] sm:$0xff]
    %v510 = vld [vmem:[#allocation12 + $0xf0] sm:$0xff]
    %v511 = vld [vmem:[#allocation12 + $0xf8] sm:$0xff]
    %v512 = vld [vmem:[#allocation12 + $0x100] sm:$0xff]
    %v513 = vld [vmem:[#allocation12 + $0x108] sm:$0xff]
    %v514 = vld [vmem:[#allocation12 + $0x110] sm:$0xff]
    %v515 = vld [vmem:[#allocation12 + $0x118] sm:$0xff]
    %v516 = vld [vmem:[#allocation12 + $0x120] sm:$0xff]
    %v517 = vld [vmem:[#allocation12 + $0x128] sm:$0xff]
    %v518 = vld [vmem:[#allocation12 + $0x130] sm:$0xff]
    %v519 = vld [vmem:[#allocation12 + $0x138] sm:$0xff]
    %v520 = vld [vmem:[#allocation12 + $0x140] sm:$0xff]
    %v521 = vld [vmem:[#allocation12 + $0x148] sm:$0xff]
    %v522 = vld [vmem:[#allocation12 + $0x150] sm:$0xff]
    %v523 = vld [vmem:[#allocation12 + $0x158] sm:$0xff]
    %v524 = vld [vmem:[#allocation12 + $0x160] sm:$0xff]
    %v525 = vld [vmem:[#allocation12 + $0x168] sm:$0xff]
    %v526 = vld [vmem:[#allocation12 + $0x170] sm:$0xff]
    %v527 = vld [vmem:[#allocation12 + $0x178] sm:$0xff]
    %v528 = vld [vmem:[#allocation12 + $0x180] sm:$0xff]
    %v529 = vld [vmem:[#allocation12 + $0x188] sm:$0xff]
    %v530 = vld [vmem:[#allocation12 + $0x190] sm:$0xff]
    %v531 = vld [vmem:[#allocation12 + $0x198] sm:$0xff]
    %v532 = vld [vmem:[#allocation12 + $0x1a0] sm:$0xff]
    %v533 = vld [vmem:[#allocation12 + $0x1a8] sm:$0xff]
    %v534 = vld [vmem:[#allocation12 + $0x1b0] sm:$0xff]
    %v535 = vld [vmem:[#allocation12 + $0x1b8] sm:$0xff]
    %v536 = vld [vmem:[#allocation12 + $0x1c0] sm:$0xff]
    %v537 = vld [vmem:[#allocation12 + $0x1c8] sm:$0xff]
    %v538 = vld [vmem:[#allocation12 + $0x1d0] sm:$0xff]
    %v539 = vld [vmem:[#allocation12 + $0x1d8] sm:$0xff]
    %v540 = vld [vmem:[#allocation12 + $0x1e0] sm:$0xff]
    %v541 = vld [vmem:[#allocation12 + $0x1e8] sm:$0xff]
    %v542 = vld [vmem:[#allocation12 + $0x1f0] sm:$0xff]
    %v543 = vld [vmem:[#allocation12 + $0x1f8] sm:$0xff]
    %v544 = vld [vmem:[#allocation13] sm:$0xf]
    %v546 = vlaneseq
    %v547 = vshrl.u32 %v546, 7
    %v548 = vsub.s32 0, %v547
    %v549 = vrot.slane %v544, %v548
    %v550 = vlaneseq
    %v551 = vshrl.u32 %v550, 7
    %v552 = vsub.s32 1, %v551
    %v553 = vrot.slane %v544, %v552
    %v554 = vlaneseq
    %v555 = vshrl.u32 %v554, 7
    %v556 = vsub.s32 2, %v555
    %v557 = vrot.slane %v544, %v556
    %v558 = vlaneseq
    %v559 = vshrl.u32 %v558, 7
    %v560 = vsub.s32 3, %v559
    %v561 = vrot.slane %v544, %v560
    %v630 = vunpack.c.l.b16 %v480
    %v631 = vunpack.c.h.b16 %v480
    %v632 = vunpack.c.l.b16 %v481
    %v633 = vunpack.c.h.b16 %v481
    %v634 = vunpack.c.l.b16 %v482
    %v635 = vunpack.c.h.b16 %v482
    %v636 = vunpack.c.l.b16 %v483
    %v637 = vunpack.c.h.b16 %v483
    %v638 = vunpack.c.l.b16 %v484
    %v639 = vunpack.c.h.b16 %v484
    %v640 = vunpack.c.l.b16 %v485
    %v641 = vunpack.c.h.b16 %v485
    %v642 = vunpack.c.l.b16 %v486
    %v643 = vunpack.c.h.b16 %v486
    %v644 = vunpack.c.l.b16 %v487
    %v645 = vunpack.c.h.b16 %v487
    %v646 = vunpack.c.l.b16 %v488
    %v647 = vunpack.c.h.b16 %v488
    %v648 = vunpack.c.l.b16 %v489
    %v649 = vunpack.c.h.b16 %v489
    %v650 = vunpack.c.l.b16 %v490
    %v651 = vunpack.c.h.b16 %v490
    %v652 = vunpack.c.l.b16 %v491
    %v653 = vunpack.c.h.b16 %v491
    %v654 = vunpack.c.l.b16 %v492
    %v655 = vunpack.c.h.b16 %v492
    %v656 = vunpack.c.l.b16 %v493
    %v657 = vunpack.c.h.b16 %v493
    %v658 = vunpack.c.l.b16 %v494
    %v659 = vunpack.c.h.b16 %v494
    %v660 = vunpack.c.l.b16 %v495
    %v661 = vunpack.c.h.b16 %v495
    %v662 = vunpack.c.l.b16 %v496
    %v663 = vunpack.c.h.b16 %v496
    %v664 = vunpack.c.l.b16 %v497
    %v665 = vunpack.c.h.b16 %v497
    %v666 = vunpack.c.l.b16 %v498
    %v667 = vunpack.c.h.b16 %v498
    %v668 = vunpack.c.l.b16 %v499
    %v669 = vunpack.c.h.b16 %v499
    %v670 = vunpack.c.l.b16 %v500
    %v671 = vunpack.c.h.b16 %v500
    %v672 = vunpack.c.l.b16 %v501
    %v673 = vunpack.c.h.b16 %v501
    %v674 = vunpack.c.l.b16 %v502
    %v675 = vunpack.c.h.b16 %v502
    %v676 = vunpack.c.l.b16 %v503
    %v677 = vunpack.c.h.b16 %v503
    %v678 = vunpack.c.l.b16 %v504
    %v679 = vunpack.c.h.b16 %v504
    %v680 = vunpack.c.l.b16 %v505
    %v681 = vunpack.c.h.b16 %v505
    %v682 = vunpack.c.l.b16 %v506
    %v683 = vunpack.c.h.b16 %v506
    %v684 = vunpack.c.l.b16 %v507
    %v685 = vunpack.c.h.b16 %v507
    %v686 = vunpack.c.l.b16 %v508
    %v687 = vunpack.c.h.b16 %v508
    %v688 = vunpack.c.l.b16 %v509
    %v689 = vunpack.c.h.b16 %v509
    %v690 = vunpack.c.l.b16 %v510
    %v691 = vunpack.c.h.b16 %v510
    %v692 = vunpack.c.l.b16 %v511
    %v693 = vunpack.c.h.b16 %v511
    %v694 = vunpack.c.l.b16 %v512
    %v695 = vunpack.c.h.b16 %v512
    %v696 = vunpack.c.l.b16 %v513
    %v697 = vunpack.c.h.b16 %v513
    %v698 = vunpack.c.l.b16 %v514
    %v699 = vunpack.c.h.b16 %v514
    %v700 = vunpack.c.l.b16 %v515
    %v701 = vunpack.c.h.b16 %v515
    %v702 = vunpack.c.l.b16 %v516
    %v703 = vunpack.c.h.b16 %v516
    %v704 = vunpack.c.l.b16 %v517
    %v705 = vunpack.c.h.b16 %v517
    %v706 = vunpack.c.l.b16 %v518
    %v707 = vunpack.c.h.b16 %v518
    %v708 = vunpack.c.l.b16 %v519
    %v709 = vunpack.c.h.b16 %v519
    %v710 = vunpack.c.l.b16 %v520
    %v711 = vunpack.c.h.b16 %v520
    %v712 = vunpack.c.l.b16 %v521
    %v713 = vunpack.c.h.b16 %v521
    %v714 = vunpack.c.l.b16 %v522
    %v715 = vunpack.c.h.b16 %v522
    %v716 = vunpack.c.l.b16 %v523
    %v717 = vunpack.c.h.b16 %v523
    %v718 = vunpack.c.l.b16 %v524
    %v719 = vunpack.c.h.b16 %v524
    %v720 = vunpack.c.l.b16 %v525
    %v721 = vunpack.c.h.b16 %v525
    %v722 = vunpack.c.l.b16 %v526
    %v723 = vunpack.c.h.b16 %v526
    %v724 = vunpack.c.l.b16 %v527
    %v725 = vunpack.c.h.b16 %v527
    %v726 = vunpack.c.l.b16 %v528
    %v727 = vunpack.c.h.b16 %v528
    %v728 = vunpack.c.l.b16 %v529
    %v729 = vunpack.c.h.b16 %v529
    %v730 = vunpack.c.l.b16 %v530
    %v731 = vunpack.c.h.b16 %v530
    %v732 = vunpack.c.l.b16 %v531
    %v733 = vunpack.c.h.b16 %v531
    %v734 = vunpack.c.l.b16 %v532
    %v735 = vunpack.c.h.b16 %v532
    %v736 = vunpack.c.l.b16 %v533
    %v737 = vunpack.c.h.b16 %v533
    %v738 = vunpack.c.l.b16 %v534
    %v739 = vunpack.c.h.b16 %v534
    %v740 = vunpack.c.l.b16 %v535
    %v741 = vunpack.c.h.b16 %v535
    %v742 = vunpack.c.l.b16 %v536
    %v743 = vunpack.c.h.b16 %v536
    %v744 = vunpack.c.l.b16 %v537
    %v745 = vunpack.c.h.b16 %v537
    %v746 = vunpack.c.l.b16 %v538
    %v747 = vunpack.c.h.b16 %v538
    %v748 = vunpack.c.l.b16 %v539
    %v749 = vunpack.c.h.b16 %v539
    %v750 = vunpack.c.l.b16 %v540
    %v751 = vunpack.c.h.b16 %v540
    %v752 = vunpack.c.l.b16 %v541
    %v753 = vunpack.c.h.b16 %v541
    %v754 = vunpack.c.l.b16 %v542
    %v755 = vunpack.c.h.b16 %v542
    %v756 = vunpack.c.l.b16 %v543
    %v757 = vunpack.c.h.b16 %v543
    %v758 = vpack.c.b16 %v634, %v630
    %v759 = vpack.c.b16 %v635, %v631
    %v760 = vpack.c.b16 %v636, %v632
    %v761 = vpack.c.b16 %v637, %v633
    %v762 = vpack.c.b16 %v642, %v638
    %v763 = vpack.c.b16 %v643, %v639
    %v764 = vpack.c.b16 %v644, %v640
    %v765 = vpack.c.b16 %v645, %v641
    %v766 = vpack.c.b16 %v650, %v646
    %v767 = vpack.c.b16 %v651, %v647
    %v768 = vpack.c.b16 %v652, %v648
    %v769 = vpack.c.b16 %v653, %v649
    %v770 = vpack.c.b16 %v658, %v654
    %v771 = vpack.c.b16 %v659, %v655
    %v772 = vpack.c.b16 %v660, %v656
    %v773 = vpack.c.b16 %v661, %v657
    %v774 = vpack.c.b16 %v666, %v662
    %v775 = vpack.c.b16 %v667, %v663
    %v776 = vpack.c.b16 %v668, %v664
    %v777 = vpack.c.b16 %v669, %v665
    %v778 = vpack.c.b16 %v674, %v670
    %v779 = vpack.c.b16 %v675, %v671
    %v780 = vpack.c.b16 %v676, %v672
    %v781 = vpack.c.b16 %v677, %v673
    %v782 = vpack.c.b16 %v682, %v678
    %v783 = vpack.c.b16 %v683, %v679
    %v784 = vpack.c.b16 %v684, %v680
    %v785 = vpack.c.b16 %v685, %v681
    %v786 = vpack.c.b16 %v690, %v686
    %v787 = vpack.c.b16 %v691, %v687
    %v788 = vpack.c.b16 %v692, %v688
    %v789 = vpack.c.b16 %v693, %v689
    %v790 = vpack.c.b16 %v698, %v694
    %v791 = vpack.c.b16 %v699, %v695
    %v792 = vpack.c.b16 %v700, %v696
    %v793 = vpack.c.b16 %v701, %v697
    %v794 = vpack.c.b16 %v706, %v702
    %v795 = vpack.c.b16 %v707, %v703
    %v796 = vpack.c.b16 %v708, %v704
    %v797 = vpack.c.b16 %v709, %v705
    %v798 = vpack.c.b16 %v714, %v710
    %v799 = vpack.c.b16 %v715, %v711
    %v800 = vpack.c.b16 %v716, %v712
    %v801 = vpack.c.b16 %v717, %v713
    %v802 = vpack.c.b16 %v722, %v718
    %v803 = vpack.c.b16 %v723, %v719
    %v804 = vpack.c.b16 %v724, %v720
    %v805 = vpack.c.b16 %v725, %v721
    %v806 = vpack.c.b16 %v730, %v726
    %v807 = vpack.c.b16 %v731, %v727
    %v808 = vpack.c.b16 %v732, %v728
    %v809 = vpack.c.b16 %v733, %v729
    %v810 = vpack.c.b16 %v738, %v734
    %v811 = vpack.c.b16 %v739, %v735
    %v812 = vpack.c.b16 %v740, %v736
    %v813 = vpack.c.b16 %v741, %v737
    %v814 = vpack.c.b16 %v746, %v742
    %v815 = vpack.c.b16 %v747, %v743
    %v816 = vpack.c.b16 %v748, %v744
    %v817 = vpack.c.b16 %v749, %v745
    %v818 = vpack.c.b16 %v754, %v750
    %v819 = vpack.c.b16 %v755, %v751
    %v820 = vpack.c.b16 %v756, %v752
    %v821 = vpack.c.b16 %v757, %v753
    %886 = vmatprep.subr.bf16.mxu0 %v759
    %887 = vmatpush1.bf16.msra.mxu0 %v758
    %888 = vmatprep.subr.bf16.mxu0 %v763
    %889 = vmatpush1.bf16.msra.mxu0 %v762
    %890 = vmatprep.subr.bf16.mxu0 %v767
    %891 = vmatpush1.bf16.msra.mxu0 %v766
    %892 = vmatprep.subr.bf16.mxu0 %v771
    %893 = vmatpush1.bf16.msra.mxu0 %v770
    %894 = vmatprep.subr.bf16.mxu0 %v775
    %895 = vmatpush1.bf16.msra.mxu0 %v774
    %896 = vmatprep.subr.bf16.mxu0 %v779
    %897 = vmatpush1.bf16.msra.mxu0 %v778
    %898 = vmatprep.subr.bf16.mxu0 %v783
    %899 = vmatpush1.bf16.msra.mxu0 %v782
    %900 = vmatprep.subr.bf16.mxu0 %v787
    %901 = vmatpush1.bf16.msra.mxu0 %v786
    %902 = vmatprep.subr.bf16.mxu0 %v791
    %903 = vmatpush1.bf16.msra.mxu0 %v790
    %904 = vmatprep.subr.bf16.mxu0 %v795
    %905 = vmatpush1.bf16.msra.mxu0 %v794
    %906 = vmatprep.subr.bf16.mxu0 %v799
    %907 = vmatpush1.bf16.msra.mxu0 %v798
    %908 = vmatprep.subr.bf16.mxu0 %v803
    %909 = vmatpush1.bf16.msra.mxu0 %v802
    %910 = vmatprep.subr.bf16.mxu0 %v807
    %911 = vmatpush1.bf16.msra.mxu0 %v806
    %912 = vmatprep.subr.bf16.mxu0 %v811
    %913 = vmatpush1.bf16.msra.mxu0 %v810
    %914 = vmatprep.subr.bf16.mxu0 %v815
    %915 = vmatpush1.bf16.msra.mxu0 %v814
    %916 = vmatprep.subr.bf16.mxu0 %v819
    %917 = vmatpush1.bf16.msra.mxu0 %v818
    %918 = vmatprep.mubr.bf16.mxu0 %v479
    %919 = vmatmul.mubr.bf16.gmra.mrb[0].mxu0 %v478
    %v920 = vpop.f32.mrb[0].mxu0
    %v921 = vadd.f32 %v549, %v920
    %v922 = vpop.f32.mrb[0].mxu0
    %v923 = vadd.f32 %v553, %v922
    %v924 = vpop.f32.mrb[0].mxu0
    %v925 = vpop.f32.mrb[0].mxu0
    %926 = vdwg.mxu0
    %927 = vmatprep.subr.bf16.mxu0 %v761
    %928 = vmatpush1.bf16.msra.mxu0 %v760
    %929 = vmatprep.subr.bf16.mxu0 %v765
    %930 = vmatpush1.bf16.msra.mxu0 %v764
    %931 = vmatprep.subr.bf16.mxu0 %v769
    %932 = vmatpush1.bf16.msra.mxu0 %v768
    %933 = vmatprep.subr.bf16.mxu0 %v773
    %934 = vmatpush1.bf16.msra.mxu0 %v772
    %935 = vmatprep.subr.bf16.mxu0 %v777
    %936 = vmatpush1.bf16.msra.mxu0 %v776
    %937 = vmatprep.subr.bf16.mxu0 %v781
    %938 = vmatpush1.bf16.msra.mxu0 %v780
    %939 = vmatprep.subr.bf16.mxu0 %v785
    %940 = vmatpush1.bf16.msra.mxu0 %v784
    %941 = vmatprep.subr.bf16.mxu0 %v789
    %942 = vmatpush1.bf16.msra.mxu0 %v788
    %943 = vmatprep.subr.bf16.mxu0 %v793
    %944 = vmatpush1.bf16.msra.mxu0 %v792
    %945 = vmatprep.subr.bf16.mxu0 %v797
    %946 = vmatpush1.bf16.msra.mxu0 %v796
    %947 = vmatprep.subr.bf16.mxu0 %v801
    %948 = vmatpush1.bf16.msra.mxu0 %v800
    %949 = vmatprep.subr.bf16.mxu0 %v805
    %950 = vmatpush1.bf16.msra.mxu0 %v804
    %951 = vmatprep.subr.bf16.mxu0 %v809
    %952 = vmatpush1.bf16.msra.mxu0 %v808
    %953 = vmatprep.subr.bf16.mxu0 %v813
    %954 = vmatpush1.bf16.msra.mxu0 %v812
    %955 = vmatprep.subr.bf16.mxu0 %v817
    %956 = vmatpush1.bf16.msra.mxu0 %v816
    %957 = vmatprep.subr.bf16.mxu0 %v821
    %958 = vmatpush1.bf16.msra.mxu0 %v820
    %959 = vmatprep.mubr.bf16.mxu0 %v479
    %960 = vmatmul.mubr.bf16.gmra.mrb[0].mxu0 %v478
    %v961 = vpop.f32.mrb[0].mxu0
    %v962 = vadd.f32 %v557, %v961
    %v963 = vpop.f32.mrb[0].mxu0
    %v964 = vadd.f32 %v561, %v963
    %v965 = vpop.f32.mrb[0].mxu0
    %v966 = vpop.f32.mrb[0].mxu0
    %967 = vdwg.mxu0
    %v968 = vrot.slane %v921, 4
    %v969 = vadd.f32 %v921, %v968
    %v970 = vrot.slane %v969, 2
    %v971 = vadd.f32 %v969, %v970
    %v972 = vrot.slane %v971, 1
    %v973 = vadd.f32 %v971, %v972
    %v974 = vrot.slane %v923, 4
    %v975 = vadd.f32 %v923, %v974
    %v976 = vrot.slane %v975, 2
    %v977 = vadd.f32 %v975, %v976
    %v978 = vrot.slane %v977, 1
    %v979 = vadd.f32 %v977, %v978
    %v980 = vrot.slane %v962, 4
    %v981 = vadd.f32 %v962, %v980
    %v982 = vrot.slane %v981, 2
    %v983 = vadd.f32 %v981, %v982
    %v984 = vrot.slane %v983, 1
    %v985 = vadd.f32 %v983, %v984
    %v986 = vrot.slane %v964, 4
    %v987 = vadd.f32 %v964, %v986
    %v988 = vrot.slane %v987, 2
    %v989 = vadd.f32 %v987, %v988
    %v990 = vrot.slane %v989, 1
    %v991 = vadd.f32 %v989, %v990
    %v992 = vmul.f32 %v973, %v419
    %v993 = vmul.f32 %v979, %v419
    %v994 = vmul.f32 %v985, %v419
    %v995 = vmul.f32 %v991, %v419
    %v996 = vsub.f32 %v921, %v992
    %v997 = vsub.f32 %v923, %v993
    %v998 = vsub.f32 %v962, %v994
    %v999 = vsub.f32 %v964, %v995
    %v1000 = vmul.f32 %v996, %v996
    %v1001 = vmul.f32 %v997, %v997
    %v1002 = vmul.f32 %v998, %v998
    %v1003 = vmul.f32 %v999, %v999
    %v1004 = vrot.slane %v1000, 4
    %v1005 = vadd.f32 %v1000, %v1004
    %v1006 = vrot.slane %v1005, 2
    %v1007 = vadd.f32 %v1005, %v1006
    %v1008 = vrot.slane %v1007, 1
    %v1009 = vadd.f32 %v1007, %v1008
    %v1010 = vrot.slane %v1001, 4
    %v1011 = vadd.f32 %v1001, %v1010
    %v1012 = vrot.slane %v1011, 2
    %v1013 = vadd.f32 %v1011, %v1012
    %v1014 = vrot.slane %v1013, 1
    %v1015 = vadd.f32 %v1013, %v1014
    %v1016 = vrot.slane %v1002, 4
    %v1017 = vadd.f32 %v1002, %v1016
    %v1018 = vrot.slane %v1017, 2
    %v1019 = vadd.f32 %v1017, %v1018
    %v1020 = vrot.slane %v1019, 1
    %v1021 = vadd.f32 %v1019, %v1020
    %v1022 = vrot.slane %v1003, 4
    %v1023 = vadd.f32 %v1003, %v1022
    %v1024 = vrot.slane %v1023, 2
    %v1025 = vadd.f32 %v1023, %v1024
    %v1026 = vrot.slane %v1025, 1
    %v1027 = vadd.f32 %v1025, %v1026
    %v1028 = vmul.f32 %v1009, %v419
    %v1029 = vmul.f32 %v1015, %v419
    %v1030 = vmul.f32 %v1021, %v419
    %v1031 = vmul.f32 %v1027, %v419
    %v1032 = vadd.f32 %v1028, 0.8
    %v1033 = vadd.f32 %v1029, 0.8
    %v1034 = vadd.f32 %v1030, 0.8
    %v1035 = vadd.f32 %v1031, 0.8
    %v1036 = vrsqrt.pop %v1032
    %v1037 = vrsqrt.pop %v1033
    %v1038 = vrsqrt.pop %v1034
    %v1039 = vrsqrt.pop %v1035
    %v1040 = vmul.f32 %v996, %v1036
    %v1041 = vmul.f32 %v997, %v1037
    %v1042 = vmul.f32 %v998, %v1038
    %v1043 = vmul.f32 %v999, %v1039
    %v1044 = vld [vmem:[%s9] sm:$0xf]
    %v1046 = vlaneseq
    %v1047 = vshrl.u32 %v1046, 7
    %v1048 = vsub.s32 0, %v1047
    %v1049 = vrot.slane %v1044, %v1048
    %v1050 = vlaneseq
    %v1051 = vshrl.u32 %v1050, 7
    %v1052 = vsub.s32 1, %v1051
    %v1053 = vrot.slane %v1044, %v1052
    %v1054 = vlaneseq
    %v1055 = vshrl.u32 %v1054, 7
    %v1056 = vsub.s32 2, %v1055
    %v1057 = vrot.slane %v1044, %v1056
    %v1058 = vlaneseq
    %v1059 = vshrl.u32 %v1058, 7
    %v1060 = vsub.s32 3, %v1059
    %v1061 = vrot.slane %v1044, %v1060
    %v1066 = vmul.f32 %v1049, %v1040
    %v1067 = vmul.f32 %v1053, %v1041
    %v1068 = vmul.f32 %v1057, %v1042
    %v1069 = vmul.f32 %v1061, %v1043
    %v1070 = vld [vmem:[#allocation15] sm:$0xf]
    %v1072 = vlaneseq
    %v1073 = vshrl.u32 %v1072, 7
    %v1074 = vsub.s32 0, %v1073
    %v1075 = vrot.slane %v1070, %v1074
    %v1076 = vlaneseq
    %v1077 = vshrl.u32 %v1076, 7
    %v1078 = vsub.s32 1, %v1077
    %v1079 = vrot.slane %v1070, %v1078
    %v1080 = vlaneseq
    %v1081 = vshrl.u32 %v1080, 7
    %v1082 = vsub.s32 2, %v1081
    %v1083 = vrot.slane %v1070, %v1082
    %v1084 = vlaneseq
    %v1085 = vshrl.u32 %v1084, 7
    %v1086 = vsub.s32 3, %v1085
    %v1087 = vrot.slane %v1070, %v1086
    %v1092 = vadd.f32 %v1066, %v1075
    %v1093 = vadd.f32 %v1067, %v1079
    %v1094 = vadd.f32 %v1068, %v1083
    %v1095 = vadd.f32 %v1069, %v1087
    %v1096 = vmul.f32 %v1092, 0.2
    %v1097 = vmul.f32 %v1093, 0.2
    %v1098 = vmul.f32 %v1094, 0.2
    %v1099 = vmul.f32 %v1095, 0.2
    %v1100 = vmax.f32 %v1092, %v1096
    %v1101 = vmax.f32 %v1093, %v1097
    %v1102 = vmax.f32 %v1094, %v1098
    %v1103 = vmax.f32 %v1095, %v1099
    %v1104 = vpack.c.bf16 %v1100, %v1100
    %v1105 = vpack.c.bf16 %v1101, %v1101
    %v1106 = vpack.c.bf16 %v1102, %v1102
    %v1107 = vpack.c.bf16 %v1103, %v1103
    %v1108 = vld [vmem:[#allocation16] sm:$0xff]
    %v1109 = vld [vmem:[#allocation16 + $0x8] sm:$0xff]
    %v1110 = vld [vmem:[#allocation16 + $0x10] sm:$0xff]
    %v1111 = vld [vmem:[#allocation16 + $0x18] sm:$0xff]
    %v1112 = vld [vmem:[#allocation16 + $0x20] sm:$0xff]
    %v1113 = vld [vmem:[#allocation16 + $0x28] sm:$0xff]
    %v1114 = vld [vmem:[#allocation16 + $0x30] sm:$0xff]
    %v1115 = vld [vmem:[#allocation16 + $0x38] sm:$0xff]
    %v1116 = vld [vmem:[#allocation16 + $0x40] sm:$0xff]
    %v1117 = vld [vmem:[#allocation16 + $0x48] sm:$0xff]
    %v1118 = vld [vmem:[#allocation16 + $0x50] sm:$0xff]
    %v1119 = vld [vmem:[#allocation16 + $0x58] sm:$0xff]
    %v1120 = vld [vmem:[#allocation16 + $0x60] sm:$0xff]
    %v1121 = vld [vmem:[#allocation16 + $0x68] sm:$0xff]
    %v1122 = vld [vmem:[#allocation16 + $0x70] sm:$0xff]
    %v1123 = vld [vmem:[#allocation16 + $0x78] sm:$0xff]
    %v1124 = vld [vmem:[#allocation16 + $0x80] sm:$0xff]
    %v1125 = vld [vmem:[#allocation16 + $0x88] sm:$0xff]
    %v1126 = vld [vmem:[#allocation16 + $0x90] sm:$0xff]
    %v1127 = vld [vmem:[#allocation16 + $0x98] sm:$0xff]
    %v1128 = vld [vmem:[#allocation16 + $0xa0] sm:$0xff]
    %v1129 = vld [vmem:[#allocation16 + $0xa8] sm:$0xff]
    %v1130 = vld [vmem:[#allocation16 + $0xb0] sm:$0xff]
    %v1131 = vld [vmem:[#allocation16 + $0xb8] sm:$0xff]
    %v1132 = vld [vmem:[#allocation16 + $0xc0] sm:$0xff]
    %v1133 = vld [vmem:[#allocation16 + $0xc8] sm:$0xff]
    %v1134 = vld [vmem:[#allocation16 + $0xd0] sm:$0xff]
    %v1135 = vld [vmem:[#allocation16 + $0xd8] sm:$0xff]
    %v1136 = vld [vmem:[#allocation16 + $0xe0] sm:$0xff]
    %v1137 = vld [vmem:[#allocation16 + $0xe8] sm:$0xff]
    %v1138 = vld [vmem:[#allocation16 + $0xf0] sm:$0xff]
    %v1139 = vld [vmem:[#allocation16 + $0xf8] sm:$0xff]
    %v1140 = vld [vmem:[#allocation16 + $0x100] sm:$0xff]
    %v1141 = vld [vmem:[#allocation16 + $0x108] sm:$0xff]
    %v1142 = vld [vmem:[#allocation16 + $0x110] sm:$0xff]
    %v1143 = vld [vmem:[#allocation16 + $0x118] sm:$0xff]
    %v1144 = vld [vmem:[#allocation16 + $0x120] sm:$0xff]
    %v1145 = vld [vmem:[#allocation16 + $0x128] sm:$0xff]
    %v1146 = vld [vmem:[#allocation16 + $0x130] sm:$0xff]
    %v1147 = vld [vmem:[#allocation16 + $0x138] sm:$0xff]
    %v1148 = vld [vmem:[#allocation16 + $0x140] sm:$0xff]
    %v1149 = vld [vmem:[#allocation16 + $0x148] sm:$0xff]
    %v1150 = vld [vmem:[#allocation16 + $0x150] sm:$0xff]
    %v1151 = vld [vmem:[#allocation16 + $0x158] sm:$0xff]
    %v1152 = vld [vmem:[#allocation16 + $0x160] sm:$0xff]
    %v1153 = vld [vmem:[#allocation16 + $0x168] sm:$0xff]
    %v1154 = vld [vmem:[#allocation16 + $0x170] sm:$0xff]
    %v1155 = vld [vmem:[#allocation16 + $0x178] sm:$0xff]
    %v1156 = vld [vmem:[#allocation16 + $0x180] sm:$0xff]
    %v1157 = vld [vmem:[#allocation16 + $0x188] sm:$0xff]
    %v1158 = vld [vmem:[#allocation16 + $0x190] sm:$0xff]
    %v1159 = vld [vmem:[#allocation16 + $0x198] sm:$0xff]
    %v1160 = vld [vmem:[#allocation16 + $0x1a0] sm:$0xff]
    %v1161 = vld [vmem:[#allocation16 + $0x1a8] sm:$0xff]
    %v1162 = vld [vmem:[#allocation16 + $0x1b0] sm:$0xff]
    %v1163 = vld [vmem:[#allocation16 + $0x1b8] sm:$0xff]
    %v1164 = vld [vmem:[#allocation16 + $0x1c0] sm:$0xff]
    %v1165 = vld [vmem:[#allocation16 + $0x1c8] sm:$0xff]
    %v1166 = vld [vmem:[#allocation16 + $0x1d0] sm:$0xff]
    %v1167 = vld [vmem:[#allocation16 + $0x1d8] sm:$0xff]
    %v1168 = vld [vmem:[#allocation16 + $0x1e0] sm:$0xff]
    %v1169 = vld [vmem:[#allocation16 + $0x1e8] sm:$0xff]
    %v1170 = vld [vmem:[#allocation16 + $0x1f0] sm:$0xff]
    %v1171 = vld [vmem:[#allocation16 + $0x1f8] sm:$0xff]
    %v1172 = vld [vmem:[#allocation16 + $0x200] sm:$0xff]
    %v1173 = vld [vmem:[#allocation16 + $0x208] sm:$0xff]
    %v1174 = vld [vmem:[#allocation16 + $0x210] sm:$0xff]
    %v1175 = vld [vmem:[#allocation16 + $0x218] sm:$0xff]
    %v1176 = vld [vmem:[#allocation16 + $0x220] sm:$0xff]
    %v1177 = vld [vmem:[#allocation16 + $0x228] sm:$0xff]
    %v1178 = vld [vmem:[#allocation16 + $0x230] sm:$0xff]
    %v1179 = vld [vmem:[#allocation16 + $0x238] sm:$0xff]
    %v1180 = vld [vmem:[#allocation16 + $0x240] sm:$0xff]
    %v1181 = vld [vmem:[#allocation16 + $0x248] sm:$0xff]
    %v1182 = vld [vmem:[#allocation16 + $0x250] sm:$0xff]
    %v1183 = vld [vmem:[#allocation16 + $0x258] sm:$0xff]
    %v1184 = vld [vmem:[#allocation16 + $0x260] sm:$0xff]
    %v1185 = vld [vmem:[#allocation16 + $0x268] sm:$0xff]
    %v1186 = vld [vmem:[#allocation16 + $0x270] sm:$0xff]
    %v1187 = vld [vmem:[#allocation16 + $0x278] sm:$0xff]
    %v1188 = vld [vmem:[#allocation16 + $0x280] sm:$0xff]
    %v1189 = vld [vmem:[#allocation16 + $0x288] sm:$0xff]
    %v1190 = vld [vmem:[#allocation16 + $0x290] sm:$0xff]
    %v1191 = vld [vmem:[#allocation16 + $0x298] sm:$0xff]
    %v1192 = vld [vmem:[#allocation16 + $0x2a0] sm:$0xff]
    %v1193 = vld [vmem:[#allocation16 + $0x2a8] sm:$0xff]
    %v1194 = vld [vmem:[#allocation16 + $0x2b0] sm:$0xff]
    %v1195 = vld [vmem:[#allocation16 + $0x2b8] sm:$0xff]
    %v1196 = vld [vmem:[#allocation16 + $0x2c0] sm:$0xff]
    %v1197 = vld [vmem:[#allocation16 + $0x2c8] sm:$0xff]
    %v1198 = vld [vmem:[#allocation16 + $0x2d0] sm:$0xff]
    %v1199 = vld [vmem:[#allocation16 + $0x2d8] sm:$0xff]
    %v1200 = vld [vmem:[#allocation16 + $0x2e0] sm:$0xff]
    %v1201 = vld [vmem:[#allocation16 + $0x2e8] sm:$0xff]
    %v1202 = vld [vmem:[#allocation16 + $0x2f0] sm:$0xff]
    %v1203 = vld [vmem:[#allocation16 + $0x2f8] sm:$0xff]
    %v1204 = vld [vmem:[#allocation16 + $0x300] sm:$0xff]
    %v1205 = vld [vmem:[#allocation16 + $0x308] sm:$0xff]
    %v1206 = vld [vmem:[#allocation16 + $0x310] sm:$0xff]
    %v1207 = vld [vmem:[#allocation16 + $0x318] sm:$0xff]
    %v1208 = vld [vmem:[#allocation16 + $0x320] sm:$0xff]
    %v1209 = vld [vmem:[#allocation16 + $0x328] sm:$0xff]
    %v1210 = vld [vmem:[#allocation16 + $0x330] sm:$0xff]
    %v1211 = vld [vmem:[#allocation16 + $0x338] sm:$0xff]
    %v1212 = vld [vmem:[#allocation16 + $0x340] sm:$0xff]
    %v1213 = vld [vmem:[#allocation16 + $0x348] sm:$0xff]
    %v1214 = vld [vmem:[#allocation16 + $0x350] sm:$0xff]
    %v1215 = vld [vmem:[#allocation16 + $0x358] sm:$0xff]
    %v1216 = vld [vmem:[#allocation16 + $0x360] sm:$0xff]
    %v1217 = vld [vmem:[#allocation16 + $0x368] sm:$0xff]
    %v1218 = vld [vmem:[#allocation16 + $0x370] sm:$0xff]
    %v1219 = vld [vmem:[#allocation16 + $0x378] sm:$0xff]
    %v1220 = vld [vmem:[#allocation16 + $0x380] sm:$0xff]
    %v1221 = vld [vmem:[#allocation16 + $0x388] sm:$0xff]
    %v1222 = vld [vmem:[#allocation16 + $0x390] sm:$0xff]
    %v1223 = vld [vmem:[#allocation16 + $0x398] sm:$0xff]
    %v1224 = vld [vmem:[#allocation16 + $0x3a0] sm:$0xff]
    %v1225 = vld [vmem:[#allocation16 + $0x3a8] sm:$0xff]
    %v1226 = vld [vmem:[#allocation16 + $0x3b0] sm:$0xff]
    %v1227 = vld [vmem:[#allocation16 + $0x3b8] sm:$0xff]
    %v1228 = vld [vmem:[#allocation16 + $0x3c0] sm:$0xff]
    %v1229 = vld [vmem:[#allocation16 + $0x3c8] sm:$0xff]
    %v1230 = vld [vmem:[#allocation16 + $0x3d0] sm:$0xff]
    %v1231 = vld [vmem:[#allocation16 + $0x3d8] sm:$0xff]
    %v1232 = vld [vmem:[#allocation16 + $0x3e0] sm:$0xff]
    %v1233 = vld [vmem:[#allocation16 + $0x3e8] sm:$0xff]
    %v1234 = vld [vmem:[#allocation16 + $0x3f0] sm:$0xff]
    %v1235 = vld [vmem:[#allocation16 + $0x3f8] sm:$0xff]
    %v1236 = vld [vmem:[#allocation16 + $0x400] sm:$0xff]
    %v1237 = vld [vmem:[#allocation16 + $0x408] sm:$0xff]
    %v1238 = vld [vmem:[#allocation16 + $0x410] sm:$0xff]
    %v1239 = vld [vmem:[#allocation16 + $0x418] sm:$0xff]
    %v1240 = vld [vmem:[#allocation16 + $0x420] sm:$0xff]
    %v1241 = vld [vmem:[#allocation16 + $0x428] sm:$0xff]
    %v1242 = vld [vmem:[#allocation16 + $0x430] sm:$0xff]
    %v1243 = vld [vmem:[#allocation16 + $0x438] sm:$0xff]
    %v1244 = vld [vmem:[#allocation16 + $0x440] sm:$0xff]
    %v1245 = vld [vmem:[#allocation16 + $0x448] sm:$0xff]
    %v1246 = vld [vmem:[#allocation16 + $0x450] sm:$0xff]
    %v1247 = vld [vmem:[#allocation16 + $0x458] sm:$0xff]
    %v1248 = vld [vmem:[#allocation16 + $0x460] sm:$0xff]
    %v1249 = vld [vmem:[#allocation16 + $0x468] sm:$0xff]
    %v1250 = vld [vmem:[#allocation16 + $0x470] sm:$0xff]
    %v1251 = vld [vmem:[#allocation16 + $0x478] sm:$0xff]
    %v1252 = vld [vmem:[#allocation16 + $0x480] sm:$0xff]
    %v1253 = vld [vmem:[#allocation16 + $0x488] sm:$0xff]
    %v1254 = vld [vmem:[#allocation16 + $0x490] sm:$0xff]
    %v1255 = vld [vmem:[#allocation16 + $0x498] sm:$0xff]
    %v1256 = vld [vmem:[#allocation16 + $0x4a0] sm:$0xff]
    %v1257 = vld [vmem:[#allocation16 + $0x4a8] sm:$0xff]
    %v1258 = vld [vmem:[#allocation16 + $0x4b0] sm:$0xff]
    %v1259 = vld [vmem:[#allocation16 + $0x4b8] sm:$0xff]
    %v1260 = vld [vmem:[#allocation16 + $0x4c0] sm:$0xff]
    %v1261 = vld [vmem:[#allocation16 + $0x4c8] sm:$0xff]
    %v1262 = vld [vmem:[#allocation16 + $0x4d0] sm:$0xff]
    %v1263 = vld [vmem:[#allocation16 + $0x4d8] sm:$0xff]
    %v1264 = vld [vmem:[#allocation16 + $0x4e0] sm:$0xff]
    %v1265 = vld [vmem:[#allocation16 + $0x4e8] sm:$0xff]
    %v1266 = vld [vmem:[#allocation16 + $0x4f0] sm:$0xff]
    %v1267 = vld [vmem:[#allocation16 + $0x4f8] sm:$0xff]
    %v1268 = vld [vmem:[#allocation16 + $0x500] sm:$0xff]
    %v1269 = vld [vmem:[#allocation16 + $0x508] sm:$0xff]
    %v1270 = vld [vmem:[#allocation16 + $0x510] sm:$0xff]
    %v1271 = vld [vmem:[#allocation16 + $0x518] sm:$0xff]
    %v1272 = vld [vmem:[#allocation16 + $0x520] sm:$0xff]
    %v1273 = vld [vmem:[#allocation16 + $0x528] sm:$0xff]
    %v1274 = vld [vmem:[#allocation16 + $0x530] sm:$0xff]
    %v1275 = vld [vmem:[#allocation16 + $0x538] sm:$0xff]
    %v1276 = vld [vmem:[#allocation16 + $0x540] sm:$0xff]
    %v1277 = vld [vmem:[#allocation16 + $0x548] sm:$0xff]
    %v1278 = vld [vmem:[#allocation16 + $0x550] sm:$0xff]
    %v1279 = vld [vmem:[#allocation16 + $0x558] sm:$0xff]
    %v1280 = vld [vmem:[#allocation16 + $0x560] sm:$0xff]
    %v1281 = vld [vmem:[#allocation16 + $0x568] sm:$0xff]
    %v1282 = vld [vmem:[#allocation16 + $0x570] sm:$0xff]
    %v1283 = vld [vmem:[#allocation16 + $0x578] sm:$0xff]
    %v1284 = vld [vmem:[#allocation16 + $0x580] sm:$0xff]
    %v1285 = vld [vmem:[#allocation16 + $0x588] sm:$0xff]
    %v1286 = vld [vmem:[#allocation16 + $0x590] sm:$0xff]
    %v1287 = vld [vmem:[#allocation16 + $0x598] sm:$0xff]
    %v1288 = vld [vmem:[#allocation16 + $0x5a0] sm:$0xff]
    %v1289 = vld [vmem:[#allocation16 + $0x5a8] sm:$0xff]
    %v1290 = vld [vmem:[#allocation16 + $0x5b0] sm:$0xff]
    %v1291 = vld [vmem:[#allocation16 + $0x5b8] sm:$0xff]
    %v1292 = vld [vmem:[#allocation16 + $0x5c0] sm:$0xff]
    %v1293 = vld [vmem:[#allocation16 + $0x5c8] sm:$0xff]
    %v1294 = vld [vmem:[#allocation16 + $0x5d0] sm:$0xff]
    %v1295 = vld [vmem:[#allocation16 + $0x5d8] sm:$0xff]
    %v1296 = vld [vmem:[#allocation16 + $0x5e0] sm:$0xff]
    %v1297 = vld [vmem:[#allocation16 + $0x5e8] sm:$0xff]
    %v1298 = vld [vmem:[#allocation16 + $0x5f0] sm:$0xff]
    %v1299 = vld [vmem:[#allocation16 + $0x5f8] sm:$0xff]
    %v1300 = vld [vmem:[#allocation16 + $0x600] sm:$0xff]
    %v1301 = vld [vmem:[#allocation16 + $0x608] sm:$0xff]
    %v1302 = vld [vmem:[#allocation16 + $0x610] sm:$0xff]
    %v1303 = vld [vmem:[#allocation16 + $0x618] sm:$0xff]
    %v1304 = vld [vmem:[#allocation16 + $0x620] sm:$0xff]
    %v1305 = vld [vmem:[#allocation16 + $0x628] sm:$0xff]
    %v1306 = vld [vmem:[#allocation16 + $0x630] sm:$0xff]
    %v1307 = vld [vmem:[#allocation16 + $0x638] sm:$0xff]
    %v1308 = vld [vmem:[#allocation16 + $0x640] sm:$0xff]
    %v1309 = vld [vmem:[#allocation16 + $0x648] sm:$0xff]
    %v1310 = vld [vmem:[#allocation16 + $0x650] sm:$0xff]
    %v1311 = vld [vmem:[#allocation16 + $0x658] sm:$0xff]
    %v1312 = vld [vmem:[#allocation16 + $0x660] sm:$0xff]
    %v1313 = vld [vmem:[#allocation16 + $0x668] sm:$0xff]
    %v1314 = vld [vmem:[#allocation16 + $0x670] sm:$0xff]
    %v1315 = vld [vmem:[#allocation16 + $0x678] sm:$0xff]
    %v1316 = vld [vmem:[#allocation16 + $0x680] sm:$0xff]
    %v1317 = vld [vmem:[#allocation16 + $0x688] sm:$0xff]
    %v1318 = vld [vmem:[#allocation16 + $0x690] sm:$0xff]
    %v1319 = vld [vmem:[#allocation16 + $0x698] sm:$0xff]
    %v1320 = vld [vmem:[#allocation16 + $0x6a0] sm:$0xff]
    %v1321 = vld [vmem:[#allocation16 + $0x6a8] sm:$0xff]
    %v1322 = vld [vmem:[#allocation16 + $0x6b0] sm:$0xff]
    %v1323 = vld [vmem:[#allocation16 + $0x6b8] sm:$0xff]
    %v1324 = vld [vmem:[#allocation16 + $0x6c0] sm:$0xff]
    %v1325 = vld [vmem:[#allocation16 + $0x6c8] sm:$0xff]
    %v1326 = vld [vmem:[#allocation16 + $0x6d0] sm:$0xff]
    %v1327 = vld [vmem:[#allocation16 + $0x6d8] sm:$0xff]
    %v1328 = vld [vmem:[#allocation16 + $0x6e0] sm:$0xff]
    %v1329 = vld [vmem:[#allocation16 + $0x6e8] sm:$0xff]
    %v1330 = vld [vmem:[#allocation16 + $0x6f0] sm:$0xff]
    %v1331 = vld [vmem:[#allocation16 + $0x6f8] sm:$0xff]
    %v1332 = vld [vmem:[#allocation16 + $0x700] sm:$0xff]
    %v1333 = vld [vmem:[#allocation16 + $0x708] sm:$0xff]
    %v1334 = vld [vmem:[#allocation16 + $0x710] sm:$0xff]
    %v1335 = vld [vmem:[#allocation16 + $0x718] sm:$0xff]
    %v1336 = vld [vmem:[#allocation16 + $0x720] sm:$0xff]
    %v1337 = vld [vmem:[#allocation16 + $0x728] sm:$0xff]
    %v1338 = vld [vmem:[#allocation16 + $0x730] sm:$0xff]
    %v1339 = vld [vmem:[#allocation16 + $0x738] sm:$0xff]
    %v1340 = vld [vmem:[#allocation16 + $0x740] sm:$0xff]
    %v1341 = vld [vmem:[#allocation16 + $0x748] sm:$0xff]
    %v1342 = vld [vmem:[#allocation16 + $0x750] sm:$0xff]
    %v1343 = vld [vmem:[#allocation16 + $0x758] sm:$0xff]
    %v1344 = vld [vmem:[#allocation16 + $0x760] sm:$0xff]
    %v1345 = vld [vmem:[#allocation16 + $0x768] sm:$0xff]
    %v1346 = vld [vmem:[#allocation16 + $0x770] sm:$0xff]
    %v1347 = vld [vmem:[#allocation16 + $0x778] sm:$0xff]
    %v1348 = vld [vmem:[#allocation16 + $0x780] sm:$0xff]
    %v1349 = vld [vmem:[#allocation16 + $0x788] sm:$0xff]
    %v1350 = vld [vmem:[#allocation16 + $0x790] sm:$0xff]
    %v1351 = vld [vmem:[#allocation16 + $0x798] sm:$0xff]
    %v1352 = vld [vmem:[#allocation16 + $0x7a0] sm:$0xff]
    %v1353 = vld [vmem:[#allocation16 + $0x7a8] sm:$0xff]
    %v1354 = vld [vmem:[#allocation16 + $0x7b0] sm:$0xff]
    %v1355 = vld [vmem:[#allocation16 + $0x7b8] sm:$0xff]
    %v1356 = vld [vmem:[#allocation16 + $0x7c0] sm:$0xff]
    %v1357 = vld [vmem:[#allocation16 + $0x7c8] sm:$0xff]
    %v1358 = vld [vmem:[#allocation16 + $0x7d0] sm:$0xff]
    %v1359 = vld [vmem:[#allocation16 + $0x7d8] sm:$0xff]
    %v1360 = vld [vmem:[#allocation16 + $0x7e0] sm:$0xff]
    %v1361 = vld [vmem:[#allocation16 + $0x7e8] sm:$0xff]
    %v1362 = vld [vmem:[#allocation16 + $0x7f0] sm:$0xff]
    %v1363 = vld [vmem:[#allocation16 + $0x7f8] sm:$0xff]
    %v1364 = vld [vmem:[%s12] sm:$0xff]
    %v1366 = vlaneseq
    %v1367 = vshrl.u32 %v1366, 7
    %v1368 = vsub.s32 0, %v1367
    %v1369 = vrot.slane %v1364, %v1368
    %v1370 = vlaneseq
    %v1371 = vshrl.u32 %v1370, 7
    %v1372 = vsub.s32 1, %v1371
    %v1373 = vrot.slane %v1364, %v1372
    %v1374 = vlaneseq
    %v1375 = vshrl.u32 %v1374, 7
    %v1376 = vsub.s32 2, %v1375
    %v1377 = vrot.slane %v1364, %v1376
    %v1378 = vlaneseq
    %v1379 = vshrl.u32 %v1378, 7
    %v1380 = vsub.s32 3, %v1379
    %v1381 = vrot.slane %v1364, %v1380
    %v1382 = vlaneseq
    %v1383 = vshrl.u32 %v1382, 7
    %v1384 = vsub.s32 4, %v1383
    %v1385 = vrot.slane %v1364, %v1384
    %v1386 = vlaneseq
    %v1387 = vshrl.u32 %v1386, 7
    %v1388 = vsub.s32 5, %v1387
    %v1389 = vrot.slane %v1364, %v1388
    %v1390 = vlaneseq
    %v1391 = vshrl.u32 %v1390, 7
    %v1392 = vsub.s32 6, %v1391
    %v1393 = vrot.slane %v1364, %v1392
    %v1394 = vlaneseq
    %v1395 = vshrl.u32 %v1394, 7
    %v1396 = vsub.s32 7, %v1395
    %v1397 = vrot.slane %v1364, %v1396
    %v1662 = vunpack.c.l.b16 %v1108
    %v1663 = vunpack.c.h.b16 %v1108
    %v1664 = vunpack.c.l.b16 %v1109
    %v1665 = vunpack.c.h.b16 %v1109
    %v1666 = vunpack.c.l.b16 %v1110
    %v1667 = vunpack.c.h.b16 %v1110
    %v1668 = vunpack.c.l.b16 %v1111
    %v1669 = vunpack.c.h.b16 %v1111
    %v1670 = vunpack.c.l.b16 %v1112
    %v1671 = vunpack.c.h.b16 %v1112
    %v1672 = vunpack.c.l.b16 %v1113
    %v1673 = vunpack.c.h.b16 %v1113
    %v1674 = vunpack.c.l.b16 %v1114
    %v1675 = vunpack.c.h.b16 %v1114
    %v1676 = vunpack.c.l.b16 %v1115
    %v1677 = vunpack.c.h.b16 %v1115
    %v1678 = vunpack.c.l.b16 %v1116
    %v1679 = vunpack.c.h.b16 %v1116
    %v1680 = vunpack.c.l.b16 %v1117
    %v1681 = vunpack.c.h.b16 %v1117
    %v1682 = vunpack.c.l.b16 %v1118
    %v1683 = vunpack.c.h.b16 %v1118
    %v1684 = vunpack.c.l.b16 %v1119
    %v1685 = vunpack.c.h.b16 %v1119
    %v1686 = vunpack.c.l.b16 %v1120
    %v1687 = vunpack.c.h.b16 %v1120
    %v1688 = vunpack.c.l.b16 %v1121
    %v1689 = vunpack.c.h.b16 %v1121
    %v1690 = vunpack.c.l.b16 %v1122
    %v1691 = vunpack.c.h.b16 %v1122
    %v1692 = vunpack.c.l.b16 %v1123
    %v1693 = vunpack.c.h.b16 %v1123
    %v1694 = vunpack.c.l.b16 %v1124
    %v1695 = vunpack.c.h.b16 %v1124
    %v1696 = vunpack.c.l.b16 %v1125
    %v1697 = vunpack.c.h.b16 %v1125
    %v1698 = vunpack.c.l.b16 %v1126
    %v1699 = vunpack.c.h.b16 %v1126
    %v1700 = vunpack.c.l.b16 %v1127
    %v1701 = vunpack.c.h.b16 %v1127
    %v1702 = vunpack.c.l.b16 %v1128
    %v1703 = vunpack.c.h.b16 %v1128
    %v1704 = vunpack.c.l.b16 %v1129
    %v1705 = vunpack.c.h.b16 %v1129
    %v1706 = vunpack.c.l.b16 %v1130
    %v1707 = vunpack.c.h.b16 %v1130
    %v1708 = vunpack.c.l.b16 %v1131
    %v1709 = vunpack.c.h.b16 %v1131
    %v1710 = vunpack.c.l.b16 %v1132
    %v1711 = vunpack.c.h.b16 %v1132
    %v1712 = vunpack.c.l.b16 %v1133
    %v1713 = vunpack.c.h.b16 %v1133
    %v1714 = vunpack.c.l.b16 %v1134
    %v1715 = vunpack.c.h.b16 %v1134
    %v1716 = vunpack.c.l.b16 %v1135
    %v1717 = vunpack.c.h.b16 %v1135
    %v1718 = vunpack.c.l.b16 %v1136
    %v1719 = vunpack.c.h.b16 %v1136
    %v1720 = vunpack.c.l.b16 %v1137
    %v1721 = vunpack.c.h.b16 %v1137
    %v1722 = vunpack.c.l.b16 %v1138
    %v1723 = vunpack.c.h.b16 %v1138
    %v1724 = vunpack.c.l.b16 %v1139
    %v1725 = vunpack.c.h.b16 %v1139
    %v1726 = vunpack.c.l.b16 %v1140
    %v1727 = vunpack.c.h.b16 %v1140
    %v1728 = vunpack.c.l.b16 %v1141
    %v1729 = vunpack.c.h.b16 %v1141
    %v1730 = vunpack.c.l.b16 %v1142
    %v1731 = vunpack.c.h.b16 %v1142
    %v1732 = vunpack.c.l.b16 %v1143
    %v1733 = vunpack.c.h.b16 %v1143
    %v1734 = vunpack.c.l.b16 %v1144
    %v1735 = vunpack.c.h.b16 %v1144
    %v1736 = vunpack.c.l.b16 %v1145
    %v1737 = vunpack.c.h.b16 %v1145
    %v1738 = vunpack.c.l.b16 %v1146
    %v1739 = vunpack.c.h.b16 %v1146
    %v1740 = vunpack.c.l.b16 %v1147
    %v1741 = vunpack.c.h.b16 %v1147
    %v1742 = vunpack.c.l.b16 %v1148
    %v1743 = vunpack.c.h.b16 %v1148
    %v1744 = vunpack.c.l.b16 %v1149
    %v1745 = vunpack.c.h.b16 %v1149
    %v1746 = vunpack.c.l.b16 %v1150
    %v1747 = vunpack.c.h.b16 %v1150
    %v1748 = vunpack.c.l.b16 %v1151
    %v1749 = vunpack.c.h.b16 %v1151
    %v1750 = vunpack.c.l.b16 %v1152
    %v1751 = vunpack.c.h.b16 %v1152
    %v1752 = vunpack.c.l.b16 %v1153
    %v1753 = vunpack.c.h.b16 %v1153
    %v1754 = vunpack.c.l.b16 %v1154
    %v1755 = vunpack.c.h.b16 %v1154
    %v1756 = vunpack.c.l.b16 %v1155
    %v1757 = vunpack.c.h.b16 %v1155
    %v1758 = vunpack.c.l.b16 %v1156
    %v1759 = vunpack.c.h.b16 %v1156
    %v1760 = vunpack.c.l.b16 %v1157
    %v1761 = vunpack.c.h.b16 %v1157
    %v1762 = vunpack.c.l.b16 %v1158
    %v1763 = vunpack.c.h.b16 %v1158
    %v1764 = vunpack.c.l.b16 %v1159
    %v1765 = vunpack.c.h.b16 %v1159
    %v1766 = vunpack.c.l.b16 %v1160
    %v1767 = vunpack.c.h.b16 %v1160
    %v1768 = vunpack.c.l.b16 %v1161
    %v1769 = vunpack.c.h.b16 %v1161
    %v1770 = vunpack.c.l.b16 %v1162
    %v1771 = vunpack.c.h.b16 %v1162
    %v1772 = vunpack.c.l.b16 %v1163
    %v1773 = vunpack.c.h.b16 %v1163
    %v1774 = vunpack.c.l.b16 %v1164
    %v1775 = vunpack.c.h.b16 %v1164
    %v1776 = vunpack.c.l.b16 %v1165
    %v1777 = vunpack.c.h.b16 %v1165
    %v1778 = vunpack.c.l.b16 %v1166
    %v1779 = vunpack.c.h.b16 %v1166
    %v1780 = vunpack.c.l.b16 %v1167
    %v1781 = vunpack.c.h.b16 %v1167
    %v1782 = vunpack.c.l.b16 %v1168
    %v1783 = vunpack.c.h.b16 %v1168
    %v1784 = vunpack.c.l.b16 %v1169
    %v1785 = vunpack.c.h.b16 %v1169
    %v1786 = vunpack.c.l.b16 %v1170
    %v1787 = vunpack.c.h.b16 %v1170
    %v1788 = vunpack.c.l.b16 %v1171
    %v1789 = vunpack.c.h.b16 %v1171
    %v1790 = vunpack.c.l.b16 %v1172
    %v1791 = vunpack.c.h.b16 %v1172
    %v1792 = vunpack.c.l.b16 %v1173
    %v1793 = vunpack.c.h.b16 %v1173
    %v1794 = vunpack.c.l.b16 %v1174
    %v1795 = vunpack.c.h.b16 %v1174
    %v1796 = vunpack.c.l.b16 %v1175
    %v1797 = vunpack.c.h.b16 %v1175
    %v1798 = vunpack.c.l.b16 %v1176
    %v1799 = vunpack.c.h.b16 %v1176
    %v1800 = vunpack.c.l.b16 %v1177
    %v1801 = vunpack.c.h.b16 %v1177
    %v1802 = vunpack.c.l.b16 %v1178
    %v1803 = vunpack.c.h.b16 %v1178
    %v1804 = vunpack.c.l.b16 %v1179
    %v1805 = vunpack.c.h.b16 %v1179
    %v1806 = vunpack.c.l.b16 %v1180
    %v1807 = vunpack.c.h.b16 %v1180
    %v1808 = vunpack.c.l.b16 %v1181
    %v1809 = vunpack.c.h.b16 %v1181
    %v1810 = vunpack.c.l.b16 %v1182
    %v1811 = vunpack.c.h.b16 %v1182
    %v1812 = vunpack.c.l.b16 %v1183
    %v1813 = vunpack.c.h.b16 %v1183
    %v1814 = vunpack.c.l.b16 %v1184
    %v1815 = vunpack.c.h.b16 %v1184
    %v1816 = vunpack.c.l.b16 %v1185
    %v1817 = vunpack.c.h.b16 %v1185
    %v1818 = vunpack.c.l.b16 %v1186
    %v1819 = vunpack.c.h.b16 %v1186
    %v1820 = vunpack.c.l.b16 %v1187
    %v1821 = vunpack.c.h.b16 %v1187
    %v1822 = vunpack.c.l.b16 %v1188
    %v1823 = vunpack.c.h.b16 %v1188
    %v1824 = vunpack.c.l.b16 %v1189
    %v1825 = vunpack.c.h.b16 %v1189
    %v1826 = vunpack.c.l.b16 %v1190
    %v1827 = vunpack.c.h.b16 %v1190
    %v1828 = vunpack.c.l.b16 %v1191
    %v1829 = vunpack.c.h.b16 %v1191
    %v1830 = vunpack.c.l.b16 %v1192
    %v1831 = vunpack.c.h.b16 %v1192
    %v1832 = vunpack.c.l.b16 %v1193
    %v1833 = vunpack.c.h.b16 %v1193
    %v1834 = vunpack.c.l.b16 %v1194
    %v1835 = vunpack.c.h.b16 %v1194
    %v1836 = vunpack.c.l.b16 %v1195
    %v1837 = vunpack.c.h.b16 %v1195
    %v1838 = vunpack.c.l.b16 %v1196
    %v1839 = vunpack.c.h.b16 %v1196
    %v1840 = vunpack.c.l.b16 %v1197
    %v1841 = vunpack.c.h.b16 %v1197
    %v1842 = vunpack.c.l.b16 %v1198
    %v1843 = vunpack.c.h.b16 %v1198
    %v1844 = vunpack.c.l.b16 %v1199
    %v1845 = vunpack.c.h.b16 %v1199
    %v1846 = vunpack.c.l.b16 %v1200
    %v1847 = vunpack.c.h.b16 %v1200
    %v1848 = vunpack.c.l.b16 %v1201
    %v1849 = vunpack.c.h.b16 %v1201
    %v1850 = vunpack.c.l.b16 %v1202
    %v1851 = vunpack.c.h.b16 %v1202
    %v1852 = vunpack.c.l.b16 %v1203
    %v1853 = vunpack.c.h.b16 %v1203
    %v1854 = vunpack.c.l.b16 %v1204
    %v1855 = vunpack.c.h.b16 %v1204
    %v1856 = vunpack.c.l.b16 %v1205
    %v1857 = vunpack.c.h.b16 %v1205
    %v1858 = vunpack.c.l.b16 %v1206
    %v1859 = vunpack.c.h.b16 %v1206
    %v1860 = vunpack.c.l.b16 %v1207
    %v1861 = vunpack.c.h.b16 %v1207
    %v1862 = vunpack.c.l.b16 %v1208
    %v1863 = vunpack.c.h.b16 %v1208
    %v1864 = vunpack.c.l.b16 %v1209
    %v1865 = vunpack.c.h.b16 %v1209
    %v1866 = vunpack.c.l.b16 %v1210
    %v1867 = vunpack.c.h.b16 %v1210
    %v1868 = vunpack.c.l.b16 %v1211
    %v1869 = vunpack.c.h.b16 %v1211
    %v1870 = vunpack.c.l.b16 %v1212
    %v1871 = vunpack.c.h.b16 %v1212
    %v1872 = vunpack.c.l.b16 %v1213
    %v1873 = vunpack.c.h.b16 %v1213
    %v1874 = vunpack.c.l.b16 %v1214
    %v1875 = vunpack.c.h.b16 %v1214
    %v1876 = vunpack.c.l.b16 %v1215
    %v1877 = vunpack.c.h.b16 %v1215
    %v1878 = vunpack.c.l.b16 %v1216
    %v1879 = vunpack.c.h.b16 %v1216
    %v1880 = vunpack.c.l.b16 %v1217
    %v1881 = vunpack.c.h.b16 %v1217
    %v1882 = vunpack.c.l.b16 %v1218
    %v1883 = vunpack.c.h.b16 %v1218
    %v1884 = vunpack.c.l.b16 %v1219
    %v1885 = vunpack.c.h.b16 %v1219
    %v1886 = vunpack.c.l.b16 %v1220
    %v1887 = vunpack.c.h.b16 %v1220
    %v1888 = vunpack.c.l.b16 %v1221
    %v1889 = vunpack.c.h.b16 %v1221
    %v1890 = vunpack.c.l.b16 %v1222
    %v1891 = vunpack.c.h.b16 %v1222
    %v1892 = vunpack.c.l.b16 %v1223
    %v1893 = vunpack.c.h.b16 %v1223
    %v1894 = vunpack.c.l.b16 %v1224
    %v1895 = vunpack.c.h.b16 %v1224
    %v1896 = vunpack.c.l.b16 %v1225
    %v1897 = vunpack.c.h.b16 %v1225
    %v1898 = vunpack.c.l.b16 %v1226
    %v1899 = vunpack.c.h.b16 %v1226
    %v1900 = vunpack.c.l.b16 %v1227
    %v1901 = vunpack.c.h.b16 %v1227
    %v1902 = vunpack.c.l.b16 %v1228
    %v1903 = vunpack.c.h.b16 %v1228
    %v1904 = vunpack.c.l.b16 %v1229
    %v1905 = vunpack.c.h.b16 %v1229
    %v1906 = vunpack.c.l.b16 %v1230
    %v1907 = vunpack.c.h.b16 %v1230
    %v1908 = vunpack.c.l.b16 %v1231
    %v1909 = vunpack.c.h.b16 %v1231
    %v1910 = vunpack.c.l.b16 %v1232
    %v1911 = vunpack.c.h.b16 %v1232
    %v1912 = vunpack.c.l.b16 %v1233
    %v1913 = vunpack.c.h.b16 %v1233
    %v1914 = vunpack.c.l.b16 %v1234
    %v1915 = vunpack.c.h.b16 %v1234
    %v1916 = vunpack.c.l.b16 %v1235
    %v1917 = vunpack.c.h.b16 %v1235
    %v1918 = vunpack.c.l.b16 %v1236
    %v1919 = vunpack.c.h.b16 %v1236
    %v1920 = vunpack.c.l.b16 %v1237
    %v1921 = vunpack.c.h.b16 %v1237
    %v1922 = vunpack.c.l.b16 %v1238
    %v1923 = vunpack.c.h.b16 %v1238
    %v1924 = vunpack.c.l.b16 %v1239
    %v1925 = vunpack.c.h.b16 %v1239
    %v1926 = vunpack.c.l.b16 %v1240
    %v1927 = vunpack.c.h.b16 %v1240
    %v1928 = vunpack.c.l.b16 %v1241
    %v1929 = vunpack.c.h.b16 %v1241
    %v1930 = vunpack.c.l.b16 %v1242
    %v1931 = vunpack.c.h.b16 %v1242
    %v1932 = vunpack.c.l.b16 %v1243
    %v1933 = vunpack.c.h.b16 %v1243
    %v1934 = vunpack.c.l.b16 %v1244
    %v1935 = vunpack.c.h.b16 %v1244
    %v1936 = vunpack.c.l.b16 %v1245
    %v1937 = vunpack.c.h.b16 %v1245
    %v1938 = vunpack.c.l.b16 %v1246
    %v1939 = vunpack.c.h.b16 %v1246
    %v1940 = vunpack.c.l.b16 %v1247
    %v1941 = vunpack.c.h.b16 %v1247
    %v1942 = vunpack.c.l.b16 %v1248
    %v1943 = vunpack.c.h.b16 %v1248
    %v1944 = vunpack.c.l.b16 %v1249
    %v1945 = vunpack.c.h.b16 %v1249
    %v1946 = vunpack.c.l.b16 %v1250
    %v1947 = vunpack.c.h.b16 %v1250
    %v1948 = vunpack.c.l.b16 %v1251
    %v1949 = vunpack.c.h.b16 %v1251
    %v1950 = vunpack.c.l.b16 %v1252
    %v1951 = vunpack.c.h.b16 %v1252
    %v1952 = vunpack.c.l.b16 %v1253
    %v1953 = vunpack.c.h.b16 %v1253
    %v1954 = vunpack.c.l.b16 %v1254
    %v1955 = vunpack.c.h.b16 %v1254
    %v1956 = vunpack.c.l.b16 %v1255
    %v1957 = vunpack.c.h.b16 %v1255
    %v1958 = vunpack.c.l.b16 %v1256
    %v1959 = vunpack.c.h.b16 %v1256
    %v1960 = vunpack.c.l.b16 %v1257
    %v1961 = vunpack.c.h.b16 %v1257
    %v1962 = vunpack.c.l.b16 %v1258
    %v1963 = vunpack.c.h.b16 %v1258
    %v1964 = vunpack.c.l.b16 %v1259
    %v1965 = vunpack.c.h.b16 %v1259
    %v1966 = vunpack.c.l.b16 %v1260
    %v1967 = vunpack.c.h.b16 %v1260
    %v1968 = vunpack.c.l.b16 %v1261
    %v1969 = vunpack.c.h.b16 %v1261
    %v1970 = vunpack.c.l.b16 %v1262
    %v1971 = vunpack.c.h.b16 %v1262
    %v1972 = vunpack.c.l.b16 %v1263
    %v1973 = vunpack.c.h.b16 %v1263
    %v1974 = vunpack.c.l.b16 %v1264
    %v1975 = vunpack.c.h.b16 %v1264
    %v1976 = vunpack.c.l.b16 %v1265
    %v1977 = vunpack.c.h.b16 %v1265
    %v1978 = vunpack.c.l.b16 %v1266
    %v1979 = vunpack.c.h.b16 %v1266
    %v1980 = vunpack.c.l.b16 %v1267
    %v1981 = vunpack.c.h.b16 %v1267
    %v1982 = vunpack.c.l.b16 %v1268
    %v1983 = vunpack.c.h.b16 %v1268
    %v1984 = vunpack.c.l.b16 %v1269
    %v1985 = vunpack.c.h.b16 %v1269
    %v1986 = vunpack.c.l.b16 %v1270
    %v1987 = vunpack.c.h.b16 %v1270
    %v1988 = vunpack.c.l.b16 %v1271
    %v1989 = vunpack.c.h.b16 %v1271
    %v1990 = vunpack.c.l.b16 %v1272
    %v1991 = vunpack.c.h.b16 %v1272
    %v1992 = vunpack.c.l.b16 %v1273
    %v1993 = vunpack.c.h.b16 %v1273
    %v1994 = vunpack.c.l.b16 %v1274
    %v1995 = vunpack.c.h.b16 %v1274
    %v1996 = vunpack.c.l.b16 %v1275
    %v1997 = vunpack.c.h.b16 %v1275
    %v1998 = vunpack.c.l.b16 %v1276
    %v1999 = vunpack.c.h.b16 %v1276
    %v2000 = vunpack.c.l.b16 %v1277
    %v2001 = vunpack.c.h.b16 %v1277
    %v2002 = vunpack.c.l.b16 %v1278
    %v2003 = vunpack.c.h.b16 %v1278
    %v2004 = vunpack.c.l.b16 %v1279
    %v2005 = vunpack.c.h.b16 %v1279
    %v2006 = vunpack.c.l.b16 %v1280
    %v2007 = vunpack.c.h.b16 %v1280
    %v2008 = vunpack.c.l.b16 %v1281
    %v2009 = vunpack.c.h.b16 %v1281
    %v2010 = vunpack.c.l.b16 %v1282
    %v2011 = vunpack.c.h.b16 %v1282
    %v2012 = vunpack.c.l.b16 %v1283
    %v2013 = vunpack.c.h.b16 %v1283
    %v2014 = vunpack.c.l.b16 %v1284
    %v2015 = vunpack.c.h.b16 %v1284
    %v2016 = vunpack.c.l.b16 %v1285
    %v2017 = vunpack.c.h.b16 %v1285
    %v2018 = vunpack.c.l.b16 %v1286
    %v2019 = vunpack.c.h.b16 %v1286
    %v2020 = vunpack.c.l.b16 %v1287
    %v2021 = vunpack.c.h.b16 %v1287
    %v2022 = vunpack.c.l.b16 %v1288
    %v2023 = vunpack.c.h.b16 %v1288
    %v2024 = vunpack.c.l.b16 %v1289
    %v2025 = vunpack.c.h.b16 %v1289
    %v2026 = vunpack.c.l.b16 %v1290
    %v2027 = vunpack.c.h.b16 %v1290
    %v2028 = vunpack.c.l.b16 %v1291
    %v2029 = vunpack.c.h.b16 %v1291
    %v2030 = vunpack.c.l.b16 %v1292
    %v2031 = vunpack.c.h.b16 %v1292
    %v2032 = vunpack.c.l.b16 %v1293
    %v2033 = vunpack.c.h.b16 %v1293
    %v2034 = vunpack.c.l.b16 %v1294
    %v2035 = vunpack.c.h.b16 %v1294
    %v2036 = vunpack.c.l.b16 %v1295
    %v2037 = vunpack.c.h.b16 %v1295
    %v2038 = vunpack.c.l.b16 %v1296
    %v2039 = vunpack.c.h.b16 %v1296
    %v2040 = vunpack.c.l.b16 %v1297
    %v2041 = vunpack.c.h.b16 %v1297
    %v2042 = vunpack.c.l.b16 %v1298
    %v2043 = vunpack.c.h.b16 %v1298
    %v2044 = vunpack.c.l.b16 %v1299
    %v2045 = vunpack.c.h.b16 %v1299
    %v2046 = vunpack.c.l.b16 %v1300
    %v2047 = vunpack.c.h.b16 %v1300
    %v2048 = vunpack.c.l.b16 %v1301
    %v2049 = vunpack.c.h.b16 %v1301
    %v2050 = vunpack.c.l.b16 %v1302
    %v2051 = vunpack.c.h.b16 %v1302
    %v2052 = vunpack.c.l.b16 %v1303
    %v2053 = vunpack.c.h.b16 %v1303
    %v2054 = vunpack.c.l.b16 %v1304
    %v2055 = vunpack.c.h.b16 %v1304
    %v2056 = vunpack.c.l.b16 %v1305
    %v2057 = vunpack.c.h.b16 %v1305
    %v2058 = vunpack.c.l.b16 %v1306
    %v2059 = vunpack.c.h.b16 %v1306
    %v2060 = vunpack.c.l.b16 %v1307
    %v2061 = vunpack.c.h.b16 %v1307
    %v2062 = vunpack.c.l.b16 %v1308
    %v2063 = vunpack.c.h.b16 %v1308
    %v2064 = vunpack.c.l.b16 %v1309
    %v2065 = vunpack.c.h.b16 %v1309
    %v2066 = vunpack.c.l.b16 %v1310
    %v2067 = vunpack.c.h.b16 %v1310
    %v2068 = vunpack.c.l.b16 %v1311
    %v2069 = vunpack.c.h.b16 %v1311
    %v2070 = vunpack.c.l.b16 %v1312
    %v2071 = vunpack.c.h.b16 %v1312
    %v2072 = vunpack.c.l.b16 %v1313
    %v2073 = vunpack.c.h.b16 %v1313
    %v2074 = vunpack.c.l.b16 %v1314
    %v2075 = vunpack.c.h.b16 %v1314
    %v2076 = vunpack.c.l.b16 %v1315
    %v2077 = vunpack.c.h.b16 %v1315
    %v2078 = vunpack.c.l.b16 %v1316
    %v2079 = vunpack.c.h.b16 %v1316
    %v2080 = vunpack.c.l.b16 %v1317
    %v2081 = vunpack.c.h.b16 %v1317
    %v2082 = vunpack.c.l.b16 %v1318
    %v2083 = vunpack.c.h.b16 %v1318
    %v2084 = vunpack.c.l.b16 %v1319
    %v2085 = vunpack.c.h.b16 %v1319
    %v2086 = vunpack.c.l.b16 %v1320
    %v2087 = vunpack.c.h.b16 %v1320
    %v2088 = vunpack.c.l.b16 %v1321
    %v2089 = vunpack.c.h.b16 %v1321
    %v2090 = vunpack.c.l.b16 %v1322
    %v2091 = vunpack.c.h.b16 %v1322
    %v2092 = vunpack.c.l.b16 %v1323
    %v2093 = vunpack.c.h.b16 %v1323
    %v2094 = vunpack.c.l.b16 %v1324
    %v2095 = vunpack.c.h.b16 %v1324
    %v2096 = vunpack.c.l.b16 %v1325
    %v2097 = vunpack.c.h.b16 %v1325
    %v2098 = vunpack.c.l.b16 %v1326
    %v2099 = vunpack.c.h.b16 %v1326
    %v2100 = vunpack.c.l.b16 %v1327
    %v2101 = vunpack.c.h.b16 %v1327
    %v2102 = vunpack.c.l.b16 %v1328
    %v2103 = vunpack.c.h.b16 %v1328
    %v2104 = vunpack.c.l.b16 %v1329
    %v2105 = vunpack.c.h.b16 %v1329
    %v2106 = vunpack.c.l.b16 %v1330
    %v2107 = vunpack.c.h.b16 %v1330
    %v2108 = vunpack.c.l.b16 %v1331
    %v2109 = vunpack.c.h.b16 %v1331
    %v2110 = vunpack.c.l.b16 %v1332
    %v2111 = vunpack.c.h.b16 %v1332
    %v2112 = vunpack.c.l.b16 %v1333
    %v2113 = vunpack.c.h.b16 %v1333
    %v2114 = vunpack.c.l.b16 %v1334
    %v2115 = vunpack.c.h.b16 %v1334
    %v2116 = vunpack.c.l.b16 %v1335
    %v2117 = vunpack.c.h.b16 %v1335
    %v2118 = vunpack.c.l.b16 %v1336
    %v2119 = vunpack.c.h.b16 %v1336
    %v2120 = vunpack.c.l.b16 %v1337
    %v2121 = vunpack.c.h.b16 %v1337
    %v2122 = vunpack.c.l.b16 %v1338
    %v2123 = vunpack.c.h.b16 %v1338
    %v2124 = vunpack.c.l.b16 %v1339
    %v2125 = vunpack.c.h.b16 %v1339
    %v2126 = vunpack.c.l.b16 %v1340
    %v2127 = vunpack.c.h.b16 %v1340
    %v2128 = vunpack.c.l.b16 %v1341
    %v2129 = vunpack.c.h.b16 %v1341
    %v2130 = vunpack.c.l.b16 %v1342
    %v2131 = vunpack.c.h.b16 %v1342
    %v2132 = vunpack.c.l.b16 %v1343
    %v2133 = vunpack.c.h.b16 %v1343
    %v2134 = vunpack.c.l.b16 %v1344
    %v2135 = vunpack.c.h.b16 %v1344
    %v2136 = vunpack.c.l.b16 %v1345
    %v2137 = vunpack.c.h.b16 %v1345
    %v2138 = vunpack.c.l.b16 %v1346
    %v2139 = vunpack.c.h.b16 %v1346
    %v2140 = vunpack.c.l.b16 %v1347
    %v2141 = vunpack.c.h.b16 %v1347
    %v2142 = vunpack.c.l.b16 %v1348
    %v2143 = vunpack.c.h.b16 %v1348
    %v2144 = vunpack.c.l.b16 %v1349
    %v2145 = vunpack.c.h.b16 %v1349
    %v2146 = vunpack.c.l.b16 %v1350
    %v2147 = vunpack.c.h.b16 %v1350
    %v2148 = vunpack.c.l.b16 %v1351
    %v2149 = vunpack.c.h.b16 %v1351
    %v2150 = vunpack.c.l.b16 %v1352
    %v2151 = vunpack.c.h.b16 %v1352
    %v2152 = vunpack.c.l.b16 %v1353
    %v2153 = vunpack.c.h.b16 %v1353
    %v2154 = vunpack.c.l.b16 %v1354
    %v2155 = vunpack.c.h.b16 %v1354
    %v2156 = vunpack.c.l.b16 %v1355
    %v2157 = vunpack.c.h.b16 %v1355
    %v2158 = vunpack.c.l.b16 %v1356
    %v2159 = vunpack.c.h.b16 %v1356
    %v2160 = vunpack.c.l.b16 %v1357
    %v2161 = vunpack.c.h.b16 %v1357
    %v2162 = vunpack.c.l.b16 %v1358
    %v2163 = vunpack.c.h.b16 %v1358
    %v2164 = vunpack.c.l.b16 %v1359
    %v2165 = vunpack.c.h.b16 %v1359
    %v2166 = vunpack.c.l.b16 %v1360
    %v2167 = vunpack.c.h.b16 %v1360
    %v2168 = vunpack.c.l.b16 %v1361
    %v2169 = vunpack.c.h.b16 %v1361
    %v2170 = vunpack.c.l.b16 %v1362
    %v2171 = vunpack.c.h.b16 %v1362
    %v2172 = vunpack.c.l.b16 %v1363
    %v2173 = vunpack.c.h.b16 %v1363
    %v2174 = vpack.c.b16 %v1670, %v1662
    %v2175 = vpack.c.b16 %v1671, %v1663
    %v2176 = vpack.c.b16 %v1672, %v1664
    %v2177 = vpack.c.b16 %v1673, %v1665
    %v2178 = vpack.c.b16 %v1674, %v1666
    %v2179 = vpack.c.b16 %v1675, %v1667
    %v2180 = vpack.c.b16 %v1676, %v1668
    %v2181 = vpack.c.b16 %v1677, %v1669
    %v2182 = vpack.c.b16 %v1686, %v1678
    %v2183 = vpack.c.b16 %v1687, %v1679
    %v2184 = vpack.c.b16 %v1688, %v1680
    %v2185 = vpack.c.b16 %v1689, %v1681
    %v2186 = vpack.c.b16 %v1690, %v1682
    %v2187 = vpack.c.b16 %v1691, %v1683
    %v2188 = vpack.c.b16 %v1692, %v1684
    %v2189 = vpack.c.b16 %v1693, %v1685
    %v2190 = vpack.c.b16 %v1702, %v1694
    %v2191 = vpack.c.b16 %v1703, %v1695
    %v2192 = vpack.c.b16 %v1704, %v1696
    %v2193 = vpack.c.b16 %v1705, %v1697
    %v2194 = vpack.c.b16 %v1706, %v1698
    %v2195 = vpack.c.b16 %v1707, %v1699
    %v2196 = vpack.c.b16 %v1708, %v1700
    %v2197 = vpack.c.b16 %v1709, %v1701
    %v2198 = vpack.c.b16 %v1718, %v1710
    %v2199 = vpack.c.b16 %v1719, %v1711
    %v2200 = vpack.c.b16 %v1720, %v1712
    %v2201 = vpack.c.b16 %v1721, %v1713
    %v2202 = vpack.c.b16 %v1722, %v1714
    %v2203 = vpack.c.b16 %v1723, %v1715
    %v2204 = vpack.c.b16 %v1724, %v1716
    %v2205 = vpack.c.b16 %v1725, %v1717
    %v2206 = vpack.c.b16 %v1734, %v1726
    %v2207 = vpack.c.b16 %v1735, %v1727
    %v2208 = vpack.c.b16 %v1736, %v1728
    %v2209 = vpack.c.b16 %v1737, %v1729
    %v2210 = vpack.c.b16 %v1738, %v1730
    %v2211 = vpack.c.b16 %v1739, %v1731
    %v2212 = vpack.c.b16 %v1740, %v1732
    %v2213 = vpack.c.b16 %v1741, %v1733
    %v2214 = vpack.c.b16 %v1750, %v1742
    %v2215 = vpack.c.b16 %v1751, %v1743
    %v2216 = vpack.c.b16 %v1752, %v1744
    %v2217 = vpack.c.b16 %v1753, %v1745
    %v2218 = vpack.c.b16 %v1754, %v1746
    %v2219 = vpack.c.b16 %v1755, %v1747
    %v2220 = vpack.c.b16 %v1756, %v1748
    %v2221 = vpack.c.b16 %v1757, %v1749
    %v2222 = vpack.c.b16 %v1766, %v1758
    %v2223 = vpack.c.b16 %v1767, %v1759
    %v2224 = vpack.c.b16 %v1768, %v1760
    %v2225 = vpack.c.b16 %v1769, %v1761
    %v2226 = vpack.c.b16 %v1770, %v1762
    %v2227 = vpack.c.b16 %v1771, %v1763
    %v2228 = vpack.c.b16 %v1772, %v1764
    %v2229 = vpack.c.b16 %v1773, %v1765
    %v2230 = vpack.c.b16 %v1782, %v1774
    %v2231 = vpack.c.b16 %v1783, %v1775
    %v2232 = vpack.c.b16 %v1784, %v1776
    %v2233 = vpack.c.b16 %v1785, %v1777
    %v2234 = vpack.c.b16 %v1786, %v1778
    %v2235 = vpack.c.b16 %v1787, %v1779
    %v2236 = vpack.c.b16 %v1788, %v1780
    %v2237 = vpack.c.b16 %v1789, %v1781
    %v2238 = vpack.c.b16 %v1798, %v1790
    %v2239 = vpack.c.b16 %v1799, %v1791
    %v2240 = vpack.c.b16 %v1800, %v1792
    %v2241 = vpack.c.b16 %v1801, %v1793
    %v2242 = vpack.c.b16 %v1802, %v1794
    %v2243 = vpack.c.b16 %v1803, %v1795
    %v2244 = vpack.c.b16 %v1804, %v1796
    %v2245 = vpack.c.b16 %v1805, %v1797
    %v2246 = vpack.c.b16 %v1814, %v1806
    %v2247 = vpack.c.b16 %v1815, %v1807
    %v2248 = vpack.c.b16 %v1816, %v1808
    %v2249 = vpack.c.b16 %v1817, %v1809
    %v2250 = vpack.c.b16 %v1818, %v1810
    %v2251 = vpack.c.b16 %v1819, %v1811
    %v2252 = vpack.c.b16 %v1820, %v1812
    %v2253 = vpack.c.b16 %v1821, %v1813
    %v2254 = vpack.c.b16 %v1830, %v1822
    %v2255 = vpack.c.b16 %v1831, %v1823
    %v2256 = vpack.c.b16 %v1832, %v1824
    %v2257 = vpack.c.b16 %v1833, %v1825
    %v2258 = vpack.c.b16 %v1834, %v1826
    %v2259 = vpack.c.b16 %v1835, %v1827
    %v2260 = vpack.c.b16 %v1836, %v1828
    %v2261 = vpack.c.b16 %v1837, %v1829
    %v2262 = vpack.c.b16 %v1846, %v1838
    %v2263 = vpack.c.b16 %v1847, %v1839
    %v2264 = vpack.c.b16 %v1848, %v1840
    %v2265 = vpack.c.b16 %v1849, %v1841
    %v2266 = vpack.c.b16 %v1850, %v1842
    %v2267 = vpack.c.b16 %v1851, %v1843
    %v2268 = vpack.c.b16 %v1852, %v1844
    %v2269 = vpack.c.b16 %v1853, %v1845
    %v2270 = vpack.c.b16 %v1862, %v1854
    %v2271 = vpack.c.b16 %v1863, %v1855
    %v2272 = vpack.c.b16 %v1864, %v1856
    %v2273 = vpack.c.b16 %v1865, %v1857
    %v2274 = vpack.c.b16 %v1866, %v1858
    %v2275 = vpack.c.b16 %v1867, %v1859
    %v2276 = vpack.c.b16 %v1868, %v1860
    %v2277 = vpack.c.b16 %v1869, %v1861
    %v2278 = vpack.c.b16 %v1878, %v1870
    %v2279 = vpack.c.b16 %v1879, %v1871
    %v2280 = vpack.c.b16 %v1880, %v1872
    %v2281 = vpack.c.b16 %v1881, %v1873
    %v2282 = vpack.c.b16 %v1882, %v1874
    %v2283 = vpack.c.b16 %v1883, %v1875
    %v2284 = vpack.c.b16 %v1884, %v1876
    %v2285 = vpack.c.b16 %v1885, %v1877
    %v2286 = vpack.c.b16 %v1894, %v1886
    %v2287 = vpack.c.b16 %v1895, %v1887
    %v2288 = vpack.c.b16 %v1896, %v1888
    %v2289 = vpack.c.b16 %v1897, %v1889
    %v2290 = vpack.c.b16 %v1898, %v1890
    %v2291 = vpack.c.b16 %v1899, %v1891
    %v2292 = vpack.c.b16 %v1900, %v1892
    %v2293 = vpack.c.b16 %v1901, %v1893
    %v2294 = vpack.c.b16 %v1910, %v1902
    %v2295 = vpack.c.b16 %v1911, %v1903
    %v2296 = vpack.c.b16 %v1912, %v1904
    %v2297 = vpack.c.b16 %v1913, %v1905
    %v2298 = vpack.c.b16 %v1914, %v1906
    %v2299 = vpack.c.b16 %v1915, %v1907
    %v2300 = vpack.c.b16 %v1916, %v1908
    %v2301 = vpack.c.b16 %v1917, %v1909
    %v2302 = vpack.c.b16 %v1926, %v1918
    %v2303 = vpack.c.b16 %v1927, %v1919
    %v2304 = vpack.c.b16 %v1928, %v1920
    %v2305 = vpack.c.b16 %v1929, %v1921
    %v2306 = vpack.c.b16 %v1930, %v1922
    %v2307 = vpack.c.b16 %v1931, %v1923
    %v2308 = vpack.c.b16 %v1932, %v1924
    %v2309 = vpack.c.b16 %v1933, %v1925
    %v2310 = vpack.c.b16 %v1942, %v1934
    %v2311 = vpack.c.b16 %v1943, %v1935
    %v2312 = vpack.c.b16 %v1944, %v1936
    %v2313 = vpack.c.b16 %v1945, %v1937
    %v2314 = vpack.c.b16 %v1946, %v1938
    %v2315 = vpack.c.b16 %v1947, %v1939
    %v2316 = vpack.c.b16 %v1948, %v1940
    %v2317 = vpack.c.b16 %v1949, %v1941
    %v2318 = vpack.c.b16 %v1958, %v1950
    %v2319 = vpack.c.b16 %v1959, %v1951
    %v2320 = vpack.c.b16 %v1960, %v1952
    %v2321 = vpack.c.b16 %v1961, %v1953
    %v2322 = vpack.c.b16 %v1962, %v1954
    %v2323 = vpack.c.b16 %v1963, %v1955
    %v2324 = vpack.c.b16 %v1964, %v1956
    %v2325 = vpack.c.b16 %v1965, %v1957
    %v2326 = vpack.c.b16 %v1974, %v1966
    %v2327 = vpack.c.b16 %v1975, %v1967
    %v2328 = vpack.c.b16 %v1976, %v1968
    %v2329 = vpack.c.b16 %v1977, %v1969
    %v2330 = vpack.c.b16 %v1978, %v1970
    %v2331 = vpack.c.b16 %v1979, %v1971
    %v2332 = vpack.c.b16 %v1980, %v1972
    %v2333 = vpack.c.b16 %v1981, %v1973
    %v2334 = vpack.c.b16 %v1990, %v1982
    %v2335 = vpack.c.b16 %v1991, %v1983
    %v2336 = vpack.c.b16 %v1992, %v1984
    %v2337 = vpack.c.b16 %v1993, %v1985
    %v2338 = vpack.c.b16 %v1994, %v1986
    %v2339 = vpack.c.b16 %v1995, %v1987
    %v2340 = vpack.c.b16 %v1996, %v1988
    %v2341 = vpack.c.b16 %v1997, %v1989
    %v2342 = vpack.c.b16 %v2006, %v1998
    %v2343 = vpack.c.b16 %v2007, %v1999
    %v2344 = vpack.c.b16 %v2008, %v2000
    %v2345 = vpack.c.b16 %v2009, %v2001
    %v2346 = vpack.c.b16 %v2010, %v2002
    %v2347 = vpack.c.b16 %v2011, %v2003
    %v2348 = vpack.c.b16 %v2012, %v2004
    %v2349 = vpack.c.b16 %v2013, %v2005
    %v2350 = vpack.c.b16 %v2022, %v2014
    %v2351 = vpack.c.b16 %v2023, %v2015
    %v2352 = vpack.c.b16 %v2024, %v2016
    %v2353 = vpack.c.b16 %v2025, %v2017
    %v2354 = vpack.c.b16 %v2026, %v2018
    %v2355 = vpack.c.b16 %v2027, %v2019
    %v2356 = vpack.c.b16 %v2028, %v2020
    %v2357 = vpack.c.b16 %v2029, %v2021
    %v2358 = vpack.c.b16 %v2038, %v2030
    %v2359 = vpack.c.b16 %v2039, %v2031
    %v2360 = vpack.c.b16 %v2040, %v2032
    %v2361 = vpack.c.b16 %v2041, %v2033
    %v2362 = vpack.c.b16 %v2042, %v2034
    %v2363 = vpack.c.b16 %v2043, %v2035
    %v2364 = vpack.c.b16 %v2044, %v2036
    %v2365 = vpack.c.b16 %v2045, %v2037
    %v2366 = vpack.c.b16 %v2054, %v2046
    %v2367 = vpack.c.b16 %v2055, %v2047
    %v2368 = vpack.c.b16 %v2056, %v2048
    %v2369 = vpack.c.b16 %v2057, %v2049
    %v2370 = vpack.c.b16 %v2058, %v2050
    %v2371 = vpack.c.b16 %v2059, %v2051
    %v2372 = vpack.c.b16 %v2060, %v2052
    %v2373 = vpack.c.b16 %v2061, %v2053
    %v2374 = vpack.c.b16 %v2070, %v2062
    %v2375 = vpack.c.b16 %v2071, %v2063
    %v2376 = vpack.c.b16 %v2072, %v2064
    %v2377 = vpack.c.b16 %v2073, %v2065
    %v2378 = vpack.c.b16 %v2074, %v2066
    %v2379 = vpack.c.b16 %v2075, %v2067
    %v2380 = vpack.c.b16 %v2076, %v2068
    %v2381 = vpack.c.b16 %v2077, %v2069
    %v2382 = vpack.c.b16 %v2086, %v2078
    %v2383 = vpack.c.b16 %v2087, %v2079
    %v2384 = vpack.c.b16 %v2088, %v2080
    %v2385 = vpack.c.b16 %v2089, %v2081
    %v2386 = vpack.c.b16 %v2090, %v2082
    %v2387 = vpack.c.b16 %v2091, %v2083
    %v2388 = vpack.c.b16 %v2092, %v2084
    %v2389 = vpack.c.b16 %v2093, %v2085
    %v2390 = vpack.c.b16 %v2102, %v2094
    %v2391 = vpack.c.b16 %v2103, %v2095
    %v2392 = vpack.c.b16 %v2104, %v2096
    %v2393 = vpack.c.b16 %v2105, %v2097
    %v2394 = vpack.c.b16 %v2106, %v2098
    %v2395 = vpack.c.b16 %v2107, %v2099
    %v2396 = vpack.c.b16 %v2108, %v2100
    %v2397 = vpack.c.b16 %v2109, %v2101
    %v2398 = vpack.c.b16 %v2118, %v2110
    %v2399 = vpack.c.b16 %v2119, %v2111
    %v2400 = vpack.c.b16 %v2120, %v2112
    %v2401 = vpack.c.b16 %v2121, %v2113
    %v2402 = vpack.c.b16 %v2122, %v2114
    %v2403 = vpack.c.b16 %v2123, %v2115
    %v2404 = vpack.c.b16 %v2124, %v2116
    %v2405 = vpack.c.b16 %v2125, %v2117
    %v2406 = vpack.c.b16 %v2134, %v2126
    %v2407 = vpack.c.b16 %v2135, %v2127
    %v2408 = vpack.c.b16 %v2136, %v2128
    %v2409 = vpack.c.b16 %v2137, %v2129
    %v2410 = vpack.c.b16 %v2138, %v2130
    %v2411 = vpack.c.b16 %v2139, %v2131
    %v2412 = vpack.c.b16 %v2140, %v2132
    %v2413 = vpack.c.b16 %v2141, %v2133
    %v2414 = vpack.c.b16 %v2150, %v2142
    %v2415 = vpack.c.b16 %v2151, %v2143
    %v2416 = vpack.c.b16 %v2152, %v2144
    %v2417 = vpack.c.b16 %v2153, %v2145
    %v2418 = vpack.c.b16 %v2154, %v2146
    %v2419 = vpack.c.b16 %v2155, %v2147
    %v2420 = vpack.c.b16 %v2156, %v2148
    %v2421 = vpack.c.b16 %v2157, %v2149
    %v2422 = vpack.c.b16 %v2166, %v2158
    %v2423 = vpack.c.b16 %v2167, %v2159
    %v2424 = vpack.c.b16 %v2168, %v2160
    %v2425 = vpack.c.b16 %v2169, %v2161
    %v2426 = vpack.c.b16 %v2170, %v2162
    %v2427 = vpack.c.b16 %v2171, %v2163
    %v2428 = vpack.c.b16 %v2172, %v2164
    %v2429 = vpack.c.b16 %v2173, %v2165
    %2686 = vmatprep.subr.bf16.mxu0 %v2175
    %2687 = vmatpush1.bf16.msra.mxu0 %v2174
    %2688 = vmatprep.subr.bf16.mxu0 %v2183
    %2689 = vmatpush1.bf16.msra.mxu0 %v2182
    %2690 = vmatprep.subr.bf16.mxu0 %v2191
    %2691 = vmatpush1.bf16.msra.mxu0 %v2190
    %2692 = vmatprep.subr.bf16.mxu0 %v2199
    %2693 = vmatpush1.bf16.msra.mxu0 %v2198
    %2694 = vmatprep.subr.bf16.mxu0 %v2207
    %2695 = vmatpush1.bf16.msra.mxu0 %v2206
    %2696 = vmatprep.subr.bf16.mxu0 %v2215
    %2697 = vmatpush1.bf16.msra.mxu0 %v2214
    %2698 = vmatprep.subr.bf16.mxu0 %v2223
    %2699 = vmatpush1.bf16.msra.mxu0 %v2222
    %2700 = vmatprep.subr.bf16.mxu0 %v2231
    %2701 = vmatpush1.bf16.msra.mxu0 %v2230
    %2702 = vmatprep.subr.bf16.mxu0 %v2239
    %2703 = vmatpush1.bf16.msra.mxu0 %v2238
    %2704 = vmatprep.subr.bf16.mxu0 %v2247
    %2705 = vmatpush1.bf16.msra.mxu0 %v2246
    %2706 = vmatprep.subr.bf16.mxu0 %v2255
    %2707 = vmatpush1.bf16.msra.mxu0 %v2254
    %2708 = vmatprep.subr.bf16.mxu0 %v2263
    %2709 = vmatpush1.bf16.msra.mxu0 %v2262
    %2710 = vmatprep.subr.bf16.mxu0 %v2271
    %2711 = vmatpush1.bf16.msra.mxu0 %v2270
    %2712 = vmatprep.subr.bf16.mxu0 %v2279
    %2713 = vmatpush1.bf16.msra.mxu0 %v2278
    %2714 = vmatprep.subr.bf16.mxu0 %v2287
    %2715 = vmatpush1.bf16.msra.mxu0 %v2286
    %2716 = vmatprep.subr.bf16.mxu0 %v2295
    %2717 = vmatpush1.bf16.msra.mxu0 %v2294
    %2718 = vmatprep.mubr.bf16.mxu0 %v1105
    %2719 = vmatmul.mubr.bf16.gmra.mrb[0].mxu0 %v1104
    %v2720 = vpop.f32.mrb[0].mxu0
    %v2721 = vadd.f32 %v1369, %v2720
    %v2722 = vpop.f32.mrb[0].mxu0
    %v2723 = vadd.f32 %v1373, %v2722
    %v2724 = vpop.f32.mrb[0].mxu0
    %v2725 = vpop.f32.mrb[0].mxu0
    %2726 = vdwg.mxu0
    %2727 = vmatprep.subr.bf16.mxu0 %v2303
    %2728 = vmatpush1.bf16.msra.mxu0 %v2302
    %2729 = vmatprep.subr.bf16.mxu0 %v2311
    %2730 = vmatpush1.bf16.msra.mxu0 %v2310
    %2731 = vmatprep.subr.bf16.mxu0 %v2319
    %2732 = vmatpush1.bf16.msra.mxu0 %v2318
    %2733 = vmatprep.subr.bf16.mxu0 %v2327
    %2734 = vmatpush1.bf16.msra.mxu0 %v2326
    %2735 = vmatprep.subr.bf16.mxu0 %v2335
    %2736 = vmatpush1.bf16.msra.mxu0 %v2334
    %2737 = vmatprep.subr.bf16.mxu0 %v2343
    %2738 = vmatpush1.bf16.msra.mxu0 %v2342
    %2739 = vmatprep.subr.bf16.mxu0 %v2351
    %2740 = vmatpush1.bf16.msra.mxu0 %v2350
    %2741 = vmatprep.subr.bf16.mxu0 %v2359
    %2742 = vmatpush1.bf16.msra.mxu0 %v2358
    %2743 = vmatprep.subr.bf16.mxu0 %v2367
    %2744 = vmatpush1.bf16.msra.mxu0 %v2366
    %2745 = vmatprep.subr.bf16.mxu0 %v2375
    %2746 = vmatpush1.bf16.msra.mxu0 %v2374
    %2747 = vmatprep.subr.bf16.mxu0 %v2383
    %2748 = vmatpush1.bf16.msra.mxu0 %v2382
    %2749 = vmatprep.subr.bf16.mxu0 %v2391
    %2750 = vmatpush1.bf16.msra.mxu0 %v2390
    %2751 = vmatprep.subr.bf16.mxu0 %v2399
    %2752 = vmatpush1.bf16.msra.mxu0 %v2398
    %2753 = vmatprep.subr.bf16.mxu0 %v2407
    %2754 = vmatpush1.bf16.msra.mxu0 %v2406
    %2755 = vmatprep.subr.bf16.mxu0 %v2415
    %2756 = vmatpush1.bf16.msra.mxu0 %v2414
    %2757 = vmatprep.subr.bf16.mxu0 %v2423
    %2758 = vmatpush1.bf16.msra.mxu0 %v2422
    %2759 = vmatprep.mubr.bf16.mxu0 %v1107
    %2760 = vmatmul.mubr.bf16.gmra.mrb[0].mxu0 %v1106
    %v2761 = vpop.f32.mrb[0].mxu0
    %v2762 = vadd.f32 %v2721, %v2761
    %v2763 = vpop.f32.mrb[0].mxu0
    %v2764 = vadd.f32 %v2723, %v2763
    %v2765 = vpop.f32.mrb[0].mxu0
    %v2766 = vpop.f32.mrb[0].mxu0
    %2767 = vdwg.mxu0
    %2768 = vmatprep.subr.bf16.mxu0 %v2177
    %2769 = vmatpush1.bf16.msra.mxu0 %v2176
    %2770 = vmatprep.subr.bf16.mxu0 %v2185
    %2771 = vmatpush1.bf16.msra.mxu0 %v2184
    %2772 = vmatprep.subr.bf16.mxu0 %v2193
    %2773 = vmatpush1.bf16.msra.mxu0 %v2192
    %2774 = vmatprep.subr.bf16.mxu0 %v2201
    %2775 = vmatpush1.bf16.msra.mxu0 %v2200
    %2776 = vmatprep.subr.bf16.mxu0 %v2209
    %2777 = vmatpush1.bf16.msra.mxu0 %v2208
    %2778 = vmatprep.subr.bf16.mxu0 %v2217
    %2779 = vmatpush1.bf16.msra.mxu0 %v2216
    %2780 = vmatprep.subr.bf16.mxu0 %v2225
    %2781 = vmatpush1.bf16.msra.mxu0 %v2224
    %2782 = vmatprep.subr.bf16.mxu0 %v2233
    %2783 = vmatpush1.bf16.msra.mxu0 %v2232
    %2784 = vmatprep.subr.bf16.mxu0 %v2241
    %2785 = vmatpush1.bf16.msra.mxu0 %v2240
    %2786 = vmatprep.subr.bf16.mxu0 %v2249
    %2787 = vmatpush1.bf16.msra.mxu0 %v2248
    %2788 = vmatprep.subr.bf16.mxu0 %v2257
    %2789 = vmatpush1.bf16.msra.mxu0 %v2256
    %2790 = vmatprep.subr.bf16.mxu0 %v2265
    %2791 = vmatpush1.bf16.msra.mxu0 %v2264
    %2792 = vmatprep.subr.bf16.mxu0 %v2273
    %2793 = vmatpush1.bf16.msra.mxu0 %v2272
    %2794 = vmatprep.subr.bf16.mxu0 %v2281
    %2795 = vmatpush1.bf16.msra.mxu0 %v2280
    %2796 = vmatprep.subr.bf16.mxu0 %v2289
    %2797 = vmatpush1.bf16.msra.mxu0 %v2288
    %2798 = vmatprep.subr.bf16.mxu0 %v2297
    %2799 = vmatpush1.bf16.msra.mxu0 %v2296
    %2800 = vmatprep.mubr.bf16.mxu0 %v1105
    %2801 = vmatmul.mubr.bf16.gmra.mrb[0].mxu0 %v1104
    %v2802 = vpop.f32.mrb[0].mxu0
    %v2803 = vadd.f32 %v1377, %v2802
    %v2804 = vpop.f32.mrb[0].mxu0
    %v2805 = vadd.f32 %v1381, %v2804
    %v2806 = vpop.f32.mrb[0].mxu0
    %v2807 = vpop.f32.mrb[0].mxu0
    %2808 = vdwg.mxu0
    %2809 = vmatprep.subr.bf16.mxu0 %v2305
    %2810 = vmatpush1.bf16.msra.mxu0 %v2304
    %2811 = vmatprep.subr.bf16.mxu0 %v2313
    %2812 = vmatpush1.bf16.msra.mxu0 %v2312
    %2813 = vmatprep.subr.bf16.mxu0 %v2321
    %2814 = vmatpush1.bf16.msra.mxu0 %v2320
    %2815 = vmatprep.subr.bf16.mxu0 %v2329
    %2816 = vmatpush1.bf16.msra.mxu0 %v2328
    %2817 = vmatprep.subr.bf16.mxu0 %v2337
    %2818 = vmatpush1.bf16.msra.mxu0 %v2336
    %2819 = vmatprep.subr.bf16.mxu0 %v2345
    %2820 = vmatpush1.bf16.msra.mxu0 %v2344
    %2821 = vmatprep.subr.bf16.mxu0 %v2353
    %2822 = vmatpush1.bf16.msra.mxu0 %v2352
    %2823 = vmatprep.subr.bf16.mxu0 %v2361
    %2824 = vmatpush1.bf16.msra.mxu0 %v2360
    %2825 = vmatprep.subr.bf16.mxu0 %v2369
    %2826 = vmatpush1.bf16.msra.mxu0 %v2368
    %2827 = vmatprep.subr.bf16.mxu0 %v2377
    %2828 = vmatpush1.bf16.msra.mxu0 %v2376
    %2829 = vmatprep.subr.bf16.mxu0 %v2385
    %2830 = vmatpush1.bf16.msra.mxu0 %v2384
    %2831 = vmatprep.subr.bf16.mxu0 %v2393
    %2832 = vmatpush1.bf16.msra.mxu0 %v2392
    %2833 = vmatprep.subr.bf16.mxu0 %v2401
    %2834 = vmatpush1.bf16.msra.mxu0 %v2400
    %2835 = vmatprep.subr.bf16.mxu0 %v2409
    %2836 = vmatpush1.bf16.msra.mxu0 %v2408
    %2837 = vmatprep.subr.bf16.mxu0 %v2417
    %2838 = vmatpush1.bf16.msra.mxu0 %v2416
    %2839 = vmatprep.subr.bf16.mxu0 %v2425
    %2840 = vmatpush1.bf16.msra.mxu0 %v2424
    %2841 = vmatprep.mubr.bf16.mxu0 %v1107
    %2842 = vmatmul.mubr.bf16.gmra.mrb[0].mxu0 %v1106
    %v2843 = vpop.f32.mrb[0].mxu0
    %v2844 = vadd.f32 %v2803, %v2843
    %v2845 = vpop.f32.mrb[0].mxu0
    %v2846 = vadd.f32 %v2805, %v2845
    %v2847 = vpop.f32.mrb[0].mxu0
    %v2848 = vpop.f32.mrb[0].mxu0
    %2849 = vdwg.mxu0
    %2850 = vmatprep.subr.bf16.mxu0 %v2179
    %2851 = vmatpush1.bf16.msra.mxu0 %v2178
    %2852 = vmatprep.subr.bf16.mxu0 %v2187
    %2853 = vmatpush1.bf16.msra.mxu0 %v2186
    %2854 = vmatprep.subr.bf16.mxu0 %v2195
    %2855 = vmatpush1.bf16.msra.mxu0 %v2194
    %2856 = vmatprep.subr.bf16.mxu0 %v2203
    %2857 = vmatpush1.bf16.msra.mxu0 %v2202
    %2858 = vmatprep.subr.bf16.mxu0 %v2211
    %2859 = vmatpush1.bf16.msra.mxu0 %v2210
    %2860 = vmatprep.subr.bf16.mxu0 %v2219
    %2861 = vmatpush1.bf16.msra.mxu0 %v2218
    %2862 = vmatprep.subr.bf16.mxu0 %v2227
    %2863 = vmatpush1.bf16.msra.mxu0 %v2226
    %2864 = vmatprep.subr.bf16.mxu0 %v2235
    %2865 = vmatpush1.bf16.msra.mxu0 %v2234
    %2866 = vmatprep.subr.bf16.mxu0 %v2243
    %2867 = vmatpush1.bf16.msra.mxu0 %v2242
    %2868 = vmatprep.subr.bf16.mxu0 %v2251
    %2869 = vmatpush1.bf16.msra.mxu0 %v2250
    %2870 = vmatprep.subr.bf16.mxu0 %v2259
    %2871 = vmatpush1.bf16.msra.mxu0 %v2258
    %2872 = vmatprep.subr.bf16.mxu0 %v2267
    %2873 = vmatpush1.bf16.msra.mxu0 %v2266
    %2874 = vmatprep.subr.bf16.mxu0 %v2275
    %2875 = vmatpush1.bf16.msra.mxu0 %v2274
    %2876 = vmatprep.subr.bf16.mxu0 %v2283
    %2877 = vmatpush1.bf16.msra.mxu0 %v2282
    %2878 = vmatprep.subr.bf16.mxu0 %v2291
    %2879 = vmatpush1.bf16.msra.mxu0 %v2290
    %2880 = vmatprep.subr.bf16.mxu0 %v2299
    %2881 = vmatpush1.bf16.msra.mxu0 %v2298
    %2882 = vmatprep.mubr.bf16.mxu0 %v1105
    %2883 = vmatmul.mubr.bf16.gmra.mrb[0].mxu0 %v1104
    %v2884 = vpop.f32.mrb[0].mxu0
    %v2885 = vadd.f32 %v1385, %v2884
    %v2886 = vpop.f32.mrb[0].mxu0
    %v2887 = vadd.f32 %v1389, %v2886
    %v2888 = vpop.f32.mrb[0].mxu0
    %v2889 = vpop.f32.mrb[0].mxu0
    %2890 = vdwg.mxu0
    %2891 = vmatprep.subr.bf16.mxu0 %v2307
    %2892 = vmatpush1.bf16.msra.mxu0 %v2306
    %2893 = vmatprep.subr.bf16.mxu0 %v2315
    %2894 = vmatpush1.bf16.msra.mxu0 %v2314
    %2895 = vmatprep.subr.bf16.mxu0 %v2323
    %2896 = vmatpush1.bf16.msra.mxu0 %v2322
    %2897 = vmatprep.subr.bf16.mxu0 %v2331
    %2898 = vmatpush1.bf16.msra.mxu0 %v2330
    %2899 = vmatprep.subr.bf16.mxu0 %v2339
    %2900 = vmatpush1.bf16.msra.mxu0 %v2338
    %2901 = vmatprep.subr.bf16.mxu0 %v2347
    %2902 = vmatpush1.bf16.msra.mxu0 %v2346
    %2903 = vmatprep.subr.bf16.mxu0 %v2355
    %2904 = vmatpush1.bf16.msra.mxu0 %v2354
    %2905 = vmatprep.subr.bf16.mxu0 %v2363
    %2906 = vmatpush1.bf16.msra.mxu0 %v2362
    %2907 = vmatprep.subr.bf16.mxu0 %v2371
    %2908 = vmatpush1.bf16.msra.mxu0 %v2370
    %2909 = vmatprep.subr.bf16.mxu0 %v2379
    %2910 = vmatpush1.bf16.msra.mxu0 %v2378
    %2911 = vmatprep.subr.bf16.mxu0 %v2387
    %2912 = vmatpush1.bf16.msra.mxu0 %v2386
    %2913 = vmatprep.subr.bf16.mxu0 %v2395
    %2914 = vmatpush1.bf16.msra.mxu0 %v2394
    %2915 = vmatprep.subr.bf16.mxu0 %v2403
    %2916 = vmatpush1.bf16.msra.mxu0 %v2402
    %2917 = vmatprep.subr.bf16.mxu0 %v2411
    %2918 = vmatpush1.bf16.msra.mxu0 %v2410
    %2919 = vmatprep.subr.bf16.mxu0 %v2419
    %2920 = vmatpush1.bf16.msra.mxu0 %v2418
    %2921 = vmatprep.subr.bf16.mxu0 %v2427
    %2922 = vmatpush1.bf16.msra.mxu0 %v2426
    %2923 = vmatprep.mubr.bf16.mxu0 %v1107
    %2924 = vmatmul.mubr.bf16.gmra.mrb[0].mxu0 %v1106
    %v2925 = vpop.f32.mrb[0].mxu0
    %v2926 = vadd.f32 %v2885, %v2925
    %v2927 = vpop.f32.mrb[0].mxu0
    %v2928 = vadd.f32 %v2887, %v2927
    %v2929 = vpop.f32.mrb[0].mxu0
    %v2930 = vpop.f32.mrb[0].mxu0
    %2931 = vdwg.mxu0
    %2932 = vmatprep.subr.bf16.mxu0 %v2181
    %2933 = vmatpush1.bf16.msra.mxu0 %v2180
    %2934 = vmatprep.subr.bf16.mxu0 %v2189
    %2935 = vmatpush1.bf16.msra.mxu0 %v2188
    %2936 = vmatprep.subr.bf16.mxu0 %v2197
    %2937 = vmatpush1.bf16.msra.mxu0 %v2196
    %2938 = vmatprep.subr.bf16.mxu0 %v2205
    %2939 = vmatpush1.bf16.msra.mxu0 %v2204
    %2940 = vmatprep.subr.bf16.mxu0 %v2213
    %2941 = vmatpush1.bf16.msra.mxu0 %v2212
    %2942 = vmatprep.subr.bf16.mxu0 %v2221
    %2943 = vmatpush1.bf16.msra.mxu0 %v2220
    %2944 = vmatprep.subr.bf16.mxu0 %v2229
    %2945 = vmatpush1.bf16.msra.mxu0 %v2228
    %2946 = vmatprep.subr.bf16.mxu0 %v2237
    %2947 = vmatpush1.bf16.msra.mxu0 %v2236
    %2948 = vmatprep.subr.bf16.mxu0 %v2245
    %2949 = vmatpush1.bf16.msra.mxu0 %v2244
    %2950 = vmatprep.subr.bf16.mxu0 %v2253
    %2951 = vmatpush1.bf16.msra.mxu0 %v2252
    %2952 = vmatprep.subr.bf16.mxu0 %v2261
    %2953 = vmatpush1.bf16.msra.mxu0 %v2260
    %2954 = vmatprep.subr.bf16.mxu0 %v2269
    %2955 = vmatpush1.bf16.msra.mxu0 %v2268
    %2956 = vmatprep.subr.bf16.mxu0 %v2277
    %2957 = vmatpush1.bf16.msra.mxu0 %v2276
    %2958 = vmatprep.subr.bf16.mxu0 %v2285
    %2959 = vmatpush1.bf16.msra.mxu0 %v2284
    %2960 = vmatprep.subr.bf16.mxu0 %v2293
    %2961 = vmatpush1.bf16.msra.mxu0 %v2292
    %2962 = vmatprep.subr.bf16.mxu0 %v2301
    %2963 = vmatpush1.bf16.msra.mxu0 %v2300
    %2964 = vmatprep.mubr.bf16.mxu0 %v1105
    %2965 = vmatmul.mubr.bf16.gmra.mrb[0].mxu0 %v1104
    %v2966 = vpop.f32.mrb[0].mxu0
    %v2967 = vadd.f32 %v1393, %v2966
    %v2968 = vpop.f32.mrb[0].mxu0
    %v2969 = vadd.f32 %v1397, %v2968
    %v2970 = vpop.f32.mrb[0].mxu0
    %v2971 = vpop.f32.mrb[0].mxu0
    %2972 = vdwg.mxu0
    %2973 = vmatprep.subr.bf16.mxu0 %v2309
    %2974 = vmatpush1.bf16.msra.mxu0 %v2308
    %2975 = vmatprep.subr.bf16.mxu0 %v2317
    %2976 = vmatpush1.bf16.msra.mxu0 %v2316
    %2977 = vmatprep.subr.bf16.mxu0 %v2325
    %2978 = vmatpush1.bf16.msra.mxu0 %v2324
    %2979 = vmatprep.subr.bf16.mxu0 %v2333
    %2980 = vmatpush1.bf16.msra.mxu0 %v2332
    %2981 = vmatprep.subr.bf16.mxu0 %v2341
    %2982 = vmatpush1.bf16.msra.mxu0 %v2340
    %2983 = vmatprep.subr.bf16.mxu0 %v2349
    %2984 = vmatpush1.bf16.msra.mxu0 %v2348
    %2985 = vmatprep.subr.bf16.mxu0 %v2357
    %2986 = vmatpush1.bf16.msra.mxu0 %v2356
    %2987 = vmatprep.subr.bf16.mxu0 %v2365
    %2988 = vmatpush1.bf16.msra.mxu0 %v2364
    %2989 = vmatprep.subr.bf16.mxu0 %v2373
    %2990 = vmatpush1.bf16.msra.mxu0 %v2372
    %2991 = vmatprep.subr.bf16.mxu0 %v2381
    %2992 = vmatpush1.bf16.msra.mxu0 %v2380
    %2993 = vmatprep.subr.bf16.mxu0 %v2389
    %2994 = vmatpush1.bf16.msra.mxu0 %v2388
    %2995 = vmatprep.subr.bf16.mxu0 %v2397
    %2996 = vmatpush1.bf16.msra.mxu0 %v2396
    %2997 = vmatprep.subr.bf16.mxu0 %v2405
    %2998 = vmatpush1.bf16.msra.mxu0 %v2404
    %2999 = vmatprep.subr.bf16.mxu0 %v2413
    %3000 = vmatpush1.bf16.msra.mxu0 %v2412
    %3001 = vmatprep.subr.bf16.mxu0 %v2421
    %3002 = vmatpush1.bf16.msra.mxu0 %v2420
    %3003 = vmatprep.subr.bf16.mxu0 %v2429
    %3004 = vmatpush1.bf16.msra.mxu0 %v2428
    %3005 = vmatprep.mubr.bf16.mxu0 %v1107
    %3006 = vmatmul.mubr.bf16.gmra.mrb[0].mxu0 %v1106
    %v3007 = vpop.f32.mrb[0].mxu0
    %v3008 = vadd.f32 %v2967, %v3007
    %v3009 = vpop.f32.mrb[0].mxu0
    %v3010 = vadd.f32 %v2969, %v3009
    %v3011 = vpop.f32.mrb[0].mxu0
    %v3012 = vpop.f32.mrb[0].mxu0
    %3013 = vdwg.mxu0
    %v3014 = vrot.slane %v2762, 4
    %v3015 = vadd.f32 %v2762, %v3014
    %v3016 = vrot.slane %v3015, 2
    %v3017 = vadd.f32 %v3015, %v3016
    %v3018 = vrot.slane %v3017, 1
    %v3019 = vadd.f32 %v3017, %v3018
    %v3020 = vrot.slane %v2764, 4
    %v3021 = vadd.f32 %v2764, %v3020
    %v3022 = vrot.slane %v3021, 2
    %v3023 = vadd.f32 %v3021, %v3022
    %v3024 = vrot.slane %v3023, 1
    %v3025 = vadd.f32 %v3023, %v3024
    %v3026 = vrot.slane %v2844, 4
    %v3027 = vadd.f32 %v2844, %v3026
    %v3028 = vrot.slane %v3027, 2
    %v3029 = vadd.f32 %v3027, %v3028
    %v3030 = vrot.slane %v3029, 1
    %v3031 = vadd.f32 %v3029, %v3030
    %v3032 = vrot.slane %v2846, 4
    %v3033 = vadd.f32 %v2846, %v3032
    %v3034 = vrot.slane %v3033, 2
    %v3035 = vadd.f32 %v3033, %v3034
    %v3036 = vrot.slane %v3035, 1
    %v3037 = vadd.f32 %v3035, %v3036
    %v3038 = vrot.slane %v2926, 4
    %v3039 = vadd.f32 %v2926, %v3038
    %v3040 = vrot.slane %v3039, 2
    %v3041 = vadd.f32 %v3039, %v3040
    %v3042 = vrot.slane %v3041, 1
    %v3043 = vadd.f32 %v3041, %v3042
    %v3044 = vrot.slane %v2928, 4
    %v3045 = vadd.f32 %v2928, %v3044
    %v3046 = vrot.slane %v3045, 2
    %v3047 = vadd.f32 %v3045, %v3046
    %v3048 = vrot.slane %v3047, 1
    %v3049 = vadd.f32 %v3047, %v3048
    %v3050 = vrot.slane %v3008, 4
    %v3051 = vadd.f32 %v3008, %v3050
    %v3052 = vrot.slane %v3051, 2
    %v3053 = vadd.f32 %v3051, %v3052
    %v3054 = vrot.slane %v3053, 1
    %v3055 = vadd.f32 %v3053, %v3054
    %v3056 = vrot.slane %v3010, 4
    %v3057 = vadd.f32 %v3010, %v3056
    %v3058 = vrot.slane %v3057, 2
    %v3059 = vadd.f32 %v3057, %v3058
    %v3060 = vrot.slane %v3059, 1
    %v3061 = vadd.f32 %v3059, %v3060
    %v3062 = vmul.f32 %v3019, %v419
    %v3063 = vmul.f32 %v3025, %v419
    %v3064 = vmul.f32 %v3031, %v419
    %v3065 = vmul.f32 %v3037, %v419
    %v3066 = vmul.f32 %v3043, %v419
    %v3067 = vmul.f32 %v3049, %v419
    %v3068 = vmul.f32 %v3055, %v419
    %v3069 = vmul.f32 %v3061, %v419
    %v3070 = vsub.f32 %v2762, %v3062
    %v3071 = vsub.f32 %v2764, %v3063
    %v3072 = vsub.f32 %v2844, %v3064
    %v3073 = vsub.f32 %v2846, %v3065
    %v3074 = vsub.f32 %v2926, %v3066
    %v3075 = vsub.f32 %v2928, %v3067
    %v3076 = vsub.f32 %v3008, %v3068
    %v3077 = vsub.f32 %v3010, %v3069
    %v3078 = vmul.f32 %v3070, %v3070
    %v3079 = vmul.f32 %v3071, %v3071
    %v3080 = vmul.f32 %v3072, %v3072
    %v3081 = vmul.f32 %v3073, %v3073
    %v3082 = vmul.f32 %v3074, %v3074
    %v3083 = vmul.f32 %v3075, %v3075
    %v3084 = vmul.f32 %v3076, %v3076
    %v3085 = vmul.f32 %v3077, %v3077
    %v3086 = vrot.slane %v3078, 4
    %v3087 = vadd.f32 %v3078, %v3086
    %v3088 = vrot.slane %v3087, 2
    %v3089 = vadd.f32 %v3087, %v3088
    %v3090 = vrot.slane %v3089, 1
    %v3091 = vadd.f32 %v3089, %v3090
    %v3092 = vrot.slane %v3079, 4
    %v3093 = vadd.f32 %v3079, %v3092
    %v3094 = vrot.slane %v3093, 2
    %v3095 = vadd.f32 %v3093, %v3094
    %v3096 = vrot.slane %v3095, 1
    %v3097 = vadd.f32 %v3095, %v3096
    %v3098 = vrot.slane %v3080, 4
    %v3099 = vadd.f32 %v3080, %v3098
    %v3100 = vrot.slane %v3099, 2
    %v3101 = vadd.f32 %v3099, %v3100
    %v3102 = vrot.slane %v3101, 1
    %v3103 = vadd.f32 %v3101, %v3102
    %v3104 = vrot.slane %v3081, 4
    %v3105 = vadd.f32 %v3081, %v3104
    %v3106 = vrot.slane %v3105, 2
    %v3107 = vadd.f32 %v3105, %v3106
    %v3108 = vrot.slane %v3107, 1
    %v3109 = vadd.f32 %v3107, %v3108
    %v3110 = vrot.slane %v3082, 4
    %v3111 = vadd.f32 %v3082, %v3110
    %v3112 = vrot.slane %v3111, 2
    %v3113 = vadd.f32 %v3111, %v3112
    %v3114 = vrot.slane %v3113, 1
    %v3115 = vadd.f32 %v3113, %v3114
    %v3116 = vrot.slane %v3083, 4
    %v3117 = vadd.f32 %v3083, %v3116
    %v3118 = vrot.slane %v3117, 2
    %v3119 = vadd.f32 %v3117, %v3118
    %v3120 = vrot.slane %v3119, 1
    %v3121 = vadd.f32 %v3119, %v3120
    %v3122 = vrot.slane %v3084, 4
    %v3123 = vadd.f32 %v3084, %v3122
    %v3124 = vrot.slane %v3123, 2
    %v3125 = vadd.f32 %v3123, %v3124
    %v3126 = vrot.slane %v3125, 1
    %v3127 = vadd.f32 %v3125, %v3126
    %v3128 = vrot.slane %v3085, 4
    %v3129 = vadd.f32 %v3085, %v3128
    %v3130 = vrot.slane %v3129, 2
    %v3131 = vadd.f32 %v3129, %v3130
    %v3132 = vrot.slane %v3131, 1
    %v3133 = vadd.f32 %v3131, %v3132
    %v3134 = vmul.f32 %v3091, %v419
    %v3135 = vmul.f32 %v3097, %v419
    %v3136 = vmul.f32 %v3103, %v419
    %v3137 = vmul.f32 %v3109, %v419
    %v3138 = vmul.f32 %v3115, %v419
    %v3139 = vmul.f32 %v3121, %v419
    %v3140 = vmul.f32 %v3127, %v419
    %v3141 = vmul.f32 %v3133, %v419
    %v3142 = vadd.f32 %v3134, 0.8
    %v3143 = vadd.f32 %v3135, 0.8
    %v3144 = vadd.f32 %v3136, 0.8
    %v3145 = vadd.f32 %v3137, 0.8
    %v3146 = vadd.f32 %v3138, 0.8
    %v3147 = vadd.f32 %v3139, 0.8
    %v3148 = vadd.f32 %v3140, 0.8
    %v3149 = vadd.f32 %v3141, 0.8
    %v3150 = vrsqrt.pop %v3142
    %v3151 = vrsqrt.pop %v3143
    %v3152 = vrsqrt.pop %v3144
    %v3153 = vrsqrt.pop %v3145
    %v3154 = vrsqrt.pop %v3146
    %v3155 = vrsqrt.pop %v3147
    %v3156 = vrsqrt.pop %v3148
    %v3157 = vrsqrt.pop %v3149
    %v3158 = vmul.f32 %v3070, %v3150
    %v3159 = vmul.f32 %v3071, %v3151
    %v3160 = vmul.f32 %v3072, %v3152
    %v3161 = vmul.f32 %v3073, %v3153
    %v3162 = vmul.f32 %v3074, %v3154
    %v3163 = vmul.f32 %v3075, %v3155
    %v3164 = vmul.f32 %v3076, %v3156
    %v3165 = vmul.f32 %v3077, %v3157
    %v3166 = vld [vmem:[%s13] sm:$0xff]
    %v3168 = vlaneseq
    %v3169 = vshrl.u32 %v3168, 7
    %v3170 = vsub.s32 0, %v3169
    %v3171 = vrot.slane %v3166, %v3170
    %v3172 = vlaneseq
    %v3173 = vshrl.u32 %v3172, 7
    %v3174 = vsub.s32 1, %v3173
    %v3175 = vrot.slane %v3166, %v3174
    %v3176 = vlaneseq
    %v3177 = vshrl.u32 %v3176, 7
    %v3178 = vsub.s32 2, %v3177
    %v3179 = vrot.slane %v3166, %v3178
    %v3180 = vlaneseq
    %v3181 = vshrl.u32 %v3180, 7
    %v3182 = vsub.s32 3, %v3181
    %v3183 = vrot.slane %v3166, %v3182
    %v3184 = vlaneseq
    %v3185 = vshrl.u32 %v3184, 7
    %v3186 = vsub.s32 4, %v3185
    %v3187 = vrot.slane %v3166, %v3186
    %v3188 = vlaneseq
    %v3189 = vshrl.u32 %v3188, 7
    %v3190 = vsub.s32 5, %v3189
    %v3191 = vrot.slane %v3166, %v3190
    %v3192 = vlaneseq
    %v3193 = vshrl.u32 %v3192, 7
    %v3194 = vsub.s32 6, %v3193
    %v3195 = vrot.slane %v3166, %v3194
    %v3196 = vlaneseq
    %v3197 = vshrl.u32 %v3196, 7
    %v3198 = vsub.s32 7, %v3197
    %v3199 = vrot.slane %v3166, %v3198
    %v3208 = vmul.f32 %v3171, %v3158
    %v3209 = vmul.f32 %v3175, %v3159
    %v3210 = vmul.f32 %v3179, %v3160
    %v3211 = vmul.f32 %v3183, %v3161
    %v3212 = vmul.f32 %v3187, %v3162
    %v3213 = vmul.f32 %v3191, %v3163
    %v3214 = vmul.f32 %v3195, %v3164
    %v3215 = vmul.f32 %v3199, %v3165
    %v3216 = vld [vmem:[%s14] sm:$0xff]
    %v3218 = vlaneseq
    %v3219 = vshrl.u32 %v3218, 7
    %v3220 = vsub.s32 0, %v3219
    %v3221 = vrot.slane %v3216, %v3220
    %v3222 = vlaneseq
    %v3223 = vshrl.u32 %v3222, 7
    %v3224 = vsub.s32 1, %v3223
    %v3225 = vrot.slane %v3216, %v3224
    %v3226 = vlaneseq
    %v3227 = vshrl.u32 %v3226, 7
    %v3228 = vsub.s32 2, %v3227
    %v3229 = vrot.slane %v3216, %v3228
    %v3230 = vlaneseq
    %v3231 = vshrl.u32 %v3230, 7
    %v3232 = vsub.s32 3, %v3231
    %v3233 = vrot.slane %v3216, %v3232
    %v3234 = vlaneseq
    %v3235 = vshrl.u32 %v3234, 7
    %v3236 = vsub.s32 4, %v3235
    %v3237 = vrot.slane %v3216, %v3236
    %v3238 = vlaneseq
    %v3239 = vshrl.u32 %v3238, 7
    %v3240 = vsub.s32 5, %v3239
    %v3241 = vrot.slane %v3216, %v3240
    %v3242 = vlaneseq
    %v3243 = vshrl.u32 %v3242, 7
    %v3244 = vsub.s32 6, %v3243
    %v3245 = vrot.slane %v3216, %v3244
    %v3246 = vlaneseq
    %v3247 = vshrl.u32 %v3246, 7
    %v3248 = vsub.s32 7, %v3247
    %v3249 = vrot.slane %v3216, %v3248
    %v3258 = vadd.f32 %v3208, %v3221
    %v3259 = vadd.f32 %v3209, %v3225
    %v3260 = vadd.f32 %v3210, %v3229
    %v3261 = vadd.f32 %v3211, %v3233
    %v3262 = vadd.f32 %v3212, %v3237
    %v3263 = vadd.f32 %v3213, %v3241
    %v3264 = vadd.f32 %v3214, %v3245
    %v3265 = vadd.f32 %v3215, %v3249
    %v3266 = vmul.f32 %v3258, 0.2
    %v3267 = vmul.f32 %v3259, 0.2
    %v3268 = vmul.f32 %v3260, 0.2
    %v3269 = vmul.f32 %v3261, 0.2
    %v3270 = vmul.f32 %v3262, 0.2
    %v3271 = vmul.f32 %v3263, 0.2
    %v3272 = vmul.f32 %v3264, 0.2
    %v3273 = vmul.f32 %v3265, 0.2
    %v3274 = vmax.f32 %v3258, %v3266
    %v3275 = vmax.f32 %v3259, %v3267
    %v3276 = vmax.f32 %v3260, %v3268
    %v3277 = vmax.f32 %v3261, %v3269
    %v3278 = vmax.f32 %v3262, %v3270
    %v3279 = vmax.f32 %v3263, %v3271
    %v3280 = vmax.f32 %v3264, %v3272
    %v3281 = vmax.f32 %v3265, %v3273
    %v3282 = vpack.c.bf16 %v3274, %v3274
    %v3283 = vpack.c.bf16 %v3275, %v3275
    %v3284 = vpack.c.bf16 %v3276, %v3276
    %v3285 = vpack.c.bf16 %v3277, %v3277
    %v3286 = vpack.c.bf16 %v3278, %v3278
    %v3287 = vpack.c.bf16 %v3279, %v3279
    %v3288 = vpack.c.bf16 %v3280, %v3280
    %v3289 = vpack.c.bf16 %v3281, %v3281
    %v3290 = vld [vmem:[#allocation18] sm:$0xf]
    %v3291 = vld [vmem:[#allocation18 + $0x4] sm:$0xf]
    %v3292 = vld [vmem:[#allocation18 + $0x8] sm:$0xf]
    %v3293 = vld [vmem:[#allocation18 + $0xc] sm:$0xf]
    %v3294 = vld [vmem:[#allocation18 + $0x10] sm:$0xf]
    %v3295 = vld [vmem:[#allocation18 + $0x14] sm:$0xf]
    %v3296 = vld [vmem:[#allocation18 + $0x18] sm:$0xf]
    %v3297 = vld [vmem:[#allocation18 + $0x1c] sm:$0xf]
    %v3298 = vld [vmem:[#allocation18 + $0x20] sm:$0xf]
    %v3299 = vld [vmem:[#allocation18 + $0x24] sm:$0xf]
    %v3300 = vld [vmem:[#allocation18 + $0x28] sm:$0xf]
    %v3301 = vld [vmem:[#allocation18 + $0x2c] sm:$0xf]
    %v3302 = vld [vmem:[#allocation18 + $0x30] sm:$0xf]
    %v3303 = vld [vmem:[#allocation18 + $0x34] sm:$0xf]
    %v3304 = vld [vmem:[#allocation18 + $0x38] sm:$0xf]
    %v3305 = vld [vmem:[#allocation18 + $0x3c] sm:$0xf]
    %v3306 = vld [vmem:[#allocation18 + $0x40] sm:$0xf]
    %v3307 = vld [vmem:[#allocation18 + $0x44] sm:$0xf]
    %v3308 = vld [vmem:[#allocation18 + $0x48] sm:$0xf]
    %v3309 = vld [vmem:[#allocation18 + $0x4c] sm:$0xf]
    %v3310 = vld [vmem:[#allocation18 + $0x50] sm:$0xf]
    %v3311 = vld [vmem:[#allocation18 + $0x54] sm:$0xf]
    %v3312 = vld [vmem:[#allocation18 + $0x58] sm:$0xf]
    %v3313 = vld [vmem:[#allocation18 + $0x5c] sm:$0xf]
    %v3314 = vld [vmem:[#allocation18 + $0x60] sm:$0xf]
    %v3315 = vld [vmem:[#allocation18 + $0x64] sm:$0xf]
    %v3316 = vld [vmem:[#allocation18 + $0x68] sm:$0xf]
    %v3317 = vld [vmem:[#allocation18 + $0x6c] sm:$0xf]
    %v3318 = vld [vmem:[#allocation18 + $0x70] sm:$0xf]
    %v3319 = vld [vmem:[#allocation18 + $0x74] sm:$0xf]
    %v3320 = vld [vmem:[#allocation18 + $0x78] sm:$0xf]
    %v3321 = vld [vmem:[#allocation18 + $0x7c] sm:$0xf]
    %v3322 = vld [vmem:[#allocation18 + $0x80] sm:$0xf]
    %v3323 = vld [vmem:[#allocation18 + $0x84] sm:$0xf]
    %v3324 = vld [vmem:[#allocation18 + $0x88] sm:$0xf]
    %v3325 = vld [vmem:[#allocation18 + $0x8c] sm:$0xf]
    %v3326 = vld [vmem:[#allocation18 + $0x90] sm:$0xf]
    %v3327 = vld [vmem:[#allocation18 + $0x94] sm:$0xf]
    %v3328 = vld [vmem:[#allocation18 + $0x98] sm:$0xf]
    %v3329 = vld [vmem:[#allocation18 + $0x9c] sm:$0xf]
    %v3330 = vld [vmem:[#allocation18 + $0xa0] sm:$0xf]
    %v3331 = vld [vmem:[#allocation18 + $0xa4] sm:$0xf]
    %v3332 = vld [vmem:[#allocation18 + $0xa8] sm:$0xf]
    %v3333 = vld [vmem:[#allocation18 + $0xac] sm:$0xf]
    %v3334 = vld [vmem:[#allocation18 + $0xb0] sm:$0xf]
    %v3335 = vld [vmem:[#allocation18 + $0xb4] sm:$0xf]
    %v3336 = vld [vmem:[#allocation18 + $0xb8] sm:$0xf]
    %v3337 = vld [vmem:[#allocation18 + $0xbc] sm:$0xf]
    %v3338 = vld [vmem:[#allocation18 + $0xc0] sm:$0xf]
    %v3339 = vld [vmem:[#allocation18 + $0xc4] sm:$0xf]
    %v3340 = vld [vmem:[#allocation18 + $0xc8] sm:$0xf]
    %v3341 = vld [vmem:[#allocation18 + $0xcc] sm:$0xf]
    %v3342 = vld [vmem:[#allocation18 + $0xd0] sm:$0xf]
    %v3343 = vld [vmem:[#allocation18 + $0xd4] sm:$0xf]
    %v3344 = vld [vmem:[#allocation18 + $0xd8] sm:$0xf]
    %v3345 = vld [vmem:[#allocation18 + $0xdc] sm:$0xf]
    %v3346 = vld [vmem:[#allocation18 + $0xe0] sm:$0xf]
    %v3347 = vld [vmem:[#allocation18 + $0xe4] sm:$0xf]
    %v3348 = vld [vmem:[#allocation18 + $0xe8] sm:$0xf]
    %v3349 = vld [vmem:[#allocation18 + $0xec] sm:$0xf]
    %v3350 = vld [vmem:[#allocation18 + $0xf0] sm:$0xf]
    %v3351 = vld [vmem:[#allocation18 + $0xf4] sm:$0xf]
    %v3352 = vld [vmem:[#allocation18 + $0xf8] sm:$0xf]
    %v3353 = vld [vmem:[#allocation18 + $0xfc] sm:$0xf]
    %v3354 = vld [vmem:[#allocation18 + $0x100] sm:$0xf]
    %v3355 = vld [vmem:[#allocation18 + $0x104] sm:$0xf]
    %v3356 = vld [vmem:[#allocation18 + $0x108] sm:$0xf]
    %v3357 = vld [vmem:[#allocation18 + $0x10c] sm:$0xf]
    %v3358 = vld [vmem:[#allocation18 + $0x110] sm:$0xf]
    %v3359 = vld [vmem:[#allocation18 + $0x114] sm:$0xf]
    %v3360 = vld [vmem:[#allocation18 + $0x118] sm:$0xf]
    %v3361 = vld [vmem:[#allocation18 + $0x11c] sm:$0xf]
    %v3362 = vld [vmem:[#allocation18 + $0x120] sm:$0xf]
    %v3363 = vld [vmem:[#allocation18 + $0x124] sm:$0xf]
    %v3364 = vld [vmem:[#allocation18 + $0x128] sm:$0xf]
    %v3365 = vld [vmem:[#allocation18 + $0x12c] sm:$0xf]
    %v3366 = vld [vmem:[#allocation18 + $0x130] sm:$0xf]
    %v3367 = vld [vmem:[#allocation18 + $0x134] sm:$0xf]
    %v3368 = vld [vmem:[#allocation18 + $0x138] sm:$0xf]
    %v3369 = vld [vmem:[#allocation18 + $0x13c] sm:$0xf]
    %v3370 = vld [vmem:[#allocation18 + $0x140] sm:$0xf]
    %v3371 = vld [vmem:[#allocation18 + $0x144] sm:$0xf]
    %v3372 = vld [vmem:[#allocation18 + $0x148] sm:$0xf]
    %v3373 = vld [vmem:[#allocation18 + $0x14c] sm:$0xf]
    %v3374 = vld [vmem:[#allocation18 + $0x150] sm:$0xf]
    %v3375 = vld [vmem:[#allocation18 + $0x154] sm:$0xf]
    %v3376 = vld [vmem:[#allocation18 + $0x158] sm:$0xf]
    %v3377 = vld [vmem:[#allocation18 + $0x15c] sm:$0xf]
    %v3378 = vld [vmem:[#allocation18 + $0x160] sm:$0xf]
    %v3379 = vld [vmem:[#allocation18 + $0x164] sm:$0xf]
    %v3380 = vld [vmem:[#allocation18 + $0x168] sm:$0xf]
    %v3381 = vld [vmem:[#allocation18 + $0x16c] sm:$0xf]
    %v3382 = vld [vmem:[#allocation18 + $0x170] sm:$0xf]
    %v3383 = vld [vmem:[#allocation18 + $0x174] sm:$0xf]
    %v3384 = vld [vmem:[#allocation18 + $0x178] sm:$0xf]
    %v3385 = vld [vmem:[#allocation18 + $0x17c] sm:$0xf]
    %v3386 = vld [vmem:[#allocation18 + $0x180] sm:$0xf]
    %v3387 = vld [vmem:[#allocation18 + $0x184] sm:$0xf]
    %v3388 = vld [vmem:[#allocation18 + $0x188] sm:$0xf]
    %v3389 = vld [vmem:[#allocation18 + $0x18c] sm:$0xf]
    %v3390 = vld [vmem:[#allocation18 + $0x190] sm:$0xf]
    %v3391 = vld [vmem:[#allocation18 + $0x194] sm:$0xf]
    %v3392 = vld [vmem:[#allocation18 + $0x198] sm:$0xf]
    %v3393 = vld [vmem:[#allocation18 + $0x19c] sm:$0xf]
    %v3394 = vld [vmem:[#allocation18 + $0x1a0] sm:$0xf]
    %v3395 = vld [vmem:[#allocation18 + $0x1a4] sm:$0xf]
    %v3396 = vld [vmem:[#allocation18 + $0x1a8] sm:$0xf]
    %v3397 = vld [vmem:[#allocation18 + $0x1ac] sm:$0xf]
    %v3398 = vld [vmem:[#allocation18 + $0x1b0] sm:$0xf]
    %v3399 = vld [vmem:[#allocation18 + $0x1b4] sm:$0xf]
    %v3400 = vld [vmem:[#allocation18 + $0x1b8] sm:$0xf]
    %v3401 = vld [vmem:[#allocation18 + $0x1bc] sm:$0xf]
    %v3402 = vld [vmem:[#allocation18 + $0x1c0] sm:$0xf]
    %v3403 = vld [vmem:[#allocation18 + $0x1c4] sm:$0xf]
    %v3404 = vld [vmem:[#allocation18 + $0x1c8] sm:$0xf]
    %v3405 = vld [vmem:[#allocation18 + $0x1cc] sm:$0xf]
    %v3406 = vld [vmem:[#allocation18 + $0x1d0] sm:$0xf]
    %v3407 = vld [vmem:[#allocation18 + $0x1d4] sm:$0xf]
    %v3408 = vld [vmem:[#allocation18 + $0x1d8] sm:$0xf]
    %v3409 = vld [vmem:[#allocation18 + $0x1dc] sm:$0xf]
    %v3410 = vld [vmem:[#allocation18 + $0x1e0] sm:$0xf]
    %v3411 = vld [vmem:[#allocation18 + $0x1e4] sm:$0xf]
    %v3412 = vld [vmem:[#allocation18 + $0x1e8] sm:$0xf]
    %v3413 = vld [vmem:[#allocation18 + $0x1ec] sm:$0xf]
    %v3414 = vld [vmem:[#allocation18 + $0x1f0] sm:$0xf]
    %v3415 = vld [vmem:[#allocation18 + $0x1f4] sm:$0xf]
    %v3416 = vld [vmem:[#allocation18 + $0x1f8] sm:$0xf]
    %v3417 = vld [vmem:[#allocation18 + $0x1fc] sm:$0xf]
    %v3418 = vld [vmem:[%s16] sm:$0x1]
    %v3420 = vlaneseq
    %v3421 = vshrl.u32 %v3420, 7
    %v3422 = vsub.s32 0, %v3421
    %v3423 = vrot.slane %v3418, %v3422
    %v3553 = vunpack.c.l.b16 %v3290
    %v3554 = vunpack.c.l.b16 %v3291
    %v3555 = vunpack.c.l.b16 %v3292
    %v3556 = vunpack.c.l.b16 %v3293
    %v3557 = vunpack.c.l.b16 %v3294
    %v3558 = vunpack.c.l.b16 %v3295
    %v3559 = vunpack.c.l.b16 %v3296
    %v3560 = vunpack.c.l.b16 %v3297
    %v3561 = vunpack.c.l.b16 %v3298
    %v3562 = vunpack.c.l.b16 %v3299
    %v3563 = vunpack.c.l.b16 %v3300
    %v3564 = vunpack.c.l.b16 %v3301
    %v3565 = vunpack.c.l.b16 %v3302
    %v3566 = vunpack.c.l.b16 %v3303
    %v3567 = vunpack.c.l.b16 %v3304
    %v3568 = vunpack.c.l.b16 %v3305
    %v3569 = vunpack.c.l.b16 %v3306
    %v3570 = vunpack.c.l.b16 %v3307
    %v3571 = vunpack.c.l.b16 %v3308
    %v3572 = vunpack.c.l.b16 %v3309
    %v3573 = vunpack.c.l.b16 %v3310
    %v3574 = vunpack.c.l.b16 %v3311
    %v3575 = vunpack.c.l.b16 %v3312
    %v3576 = vunpack.c.l.b16 %v3313
    %v3577 = vunpack.c.l.b16 %v3314
    %v3578 = vunpack.c.l.b16 %v3315
    %v3579 = vunpack.c.l.b16 %v3316
    %v3580 = vunpack.c.l.b16 %v3317
    %v3581 = vunpack.c.l.b16 %v3318
    %v3582 = vunpack.c.l.b16 %v3319
    %v3583 = vunpack.c.l.b16 %v3320
    %v3584 = vunpack.c.l.b16 %v3321
    %v3585 = vunpack.c.l.b16 %v3322
    %v3586 = vunpack.c.l.b16 %v3323
    %v3587 = vunpack.c.l.b16 %v3324
    %v3588 = vunpack.c.l.b16 %v3325
    %v3589 = vunpack.c.l.b16 %v3326
    %v3590 = vunpack.c.l.b16 %v3327
    %v3591 = vunpack.c.l.b16 %v3328
    %v3592 = vunpack.c.l.b16 %v3329
    %v3593 = vunpack.c.l.b16 %v3330
    %v3594 = vunpack.c.l.b16 %v3331
    %v3595 = vunpack.c.l.b16 %v3332
    %v3596 = vunpack.c.l.b16 %v3333
    %v3597 = vunpack.c.l.b16 %v3334
    %v3598 = vunpack.c.l.b16 %v3335
    %v3599 = vunpack.c.l.b16 %v3336
    %v3600 = vunpack.c.l.b16 %v3337
    %v3601 = vunpack.c.l.b16 %v3338
    %v3602 = vunpack.c.l.b16 %v3339
    %v3603 = vunpack.c.l.b16 %v3340
    %v3604 = vunpack.c.l.b16 %v3341
    %v3605 = vunpack.c.l.b16 %v3342
    %v3606 = vunpack.c.l.b16 %v3343
    %v3607 = vunpack.c.l.b16 %v3344
    %v3608 = vunpack.c.l.b16 %v3345
    %v3609 = vunpack.c.l.b16 %v3346
    %v3610 = vunpack.c.l.b16 %v3347
    %v3611 = vunpack.c.l.b16 %v3348
    %v3612 = vunpack.c.l.b16 %v3349
    %v3613 = vunpack.c.l.b16 %v3350
    %v3614 = vunpack.c.l.b16 %v3351
    %v3615 = vunpack.c.l.b16 %v3352
    %v3616 = vunpack.c.l.b16 %v3353
    %v3617 = vunpack.c.l.b16 %v3354
    %v3618 = vunpack.c.l.b16 %v3355
    %v3619 = vunpack.c.l.b16 %v3356
    %v3620 = vunpack.c.l.b16 %v3357
    %v3621 = vunpack.c.l.b16 %v3358
    %v3622 = vunpack.c.l.b16 %v3359
    %v3623 = vunpack.c.l.b16 %v3360
    %v3624 = vunpack.c.l.b16 %v3361
    %v3625 = vunpack.c.l.b16 %v3362
    %v3626 = vunpack.c.l.b16 %v3363
    %v3627 = vunpack.c.l.b16 %v3364
    %v3628 = vunpack.c.l.b16 %v3365
    %v3629 = vunpack.c.l.b16 %v3366
    %v3630 = vunpack.c.l.b16 %v3367
    %v3631 = vunpack.c.l.b16 %v3368
    %v3632 = vunpack.c.l.b16 %v3369
    %v3633 = vunpack.c.l.b16 %v3370
    %v3634 = vunpack.c.l.b16 %v3371
    %v3635 = vunpack.c.l.b16 %v3372
    %v3636 = vunpack.c.l.b16 %v3373
    %v3637 = vunpack.c.l.b16 %v3374
    %v3638 = vunpack.c.l.b16 %v3375
    %v3639 = vunpack.c.l.b16 %v3376
    %v3640 = vunpack.c.l.b16 %v3377
    %v3641 = vunpack.c.l.b16 %v3378
    %v3642 = vunpack.c.l.b16 %v3379
    %v3643 = vunpack.c.l.b16 %v3380
    %v3644 = vunpack.c.l.b16 %v3381
    %v3645 = vunpack.c.l.b16 %v3382
    %v3646 = vunpack.c.l.b16 %v3383
    %v3647 = vunpack.c.l.b16 %v3384
    %v3648 = vunpack.c.l.b16 %v3385
    %v3649 = vunpack.c.l.b16 %v3386
    %v3650 = vunpack.c.l.b16 %v3387
    %v3651 = vunpack.c.l.b16 %v3388
    %v3652 = vunpack.c.l.b16 %v3389
    %v3653 = vunpack.c.l.b16 %v3390
    %v3654 = vunpack.c.l.b16 %v3391
    %v3655 = vunpack.c.l.b16 %v3392
    %v3656 = vunpack.c.l.b16 %v3393
    %v3657 = vunpack.c.l.b16 %v3394
    %v3658 = vunpack.c.l.b16 %v3395
    %v3659 = vunpack.c.l.b16 %v3396
    %v3660 = vunpack.c.l.b16 %v3397
    %v3661 = vunpack.c.l.b16 %v3398
    %v3662 = vunpack.c.l.b16 %v3399
    %v3663 = vunpack.c.l.b16 %v3400
    %v3664 = vunpack.c.l.b16 %v3401
    %v3665 = vunpack.c.l.b16 %v3402
    %v3666 = vunpack.c.l.b16 %v3403
    %v3667 = vunpack.c.l.b16 %v3404
    %v3668 = vunpack.c.l.b16 %v3405
    %v3669 = vunpack.c.l.b16 %v3406
    %v3670 = vunpack.c.l.b16 %v3407
    %v3671 = vunpack.c.l.b16 %v3408
    %v3672 = vunpack.c.l.b16 %v3409
    %v3673 = vunpack.c.l.b16 %v3410
    %v3674 = vunpack.c.l.b16 %v3411
    %v3675 = vunpack.c.l.b16 %v3412
    %v3676 = vunpack.c.l.b16 %v3413
    %v3677 = vunpack.c.l.b16 %v3414
    %v3678 = vunpack.c.l.b16 %v3415
    %v3679 = vunpack.c.l.b16 %v3416
    %v3680 = vunpack.c.l.b16 %v3417
    %v3681 = vpack.c.b16 %v3554, %v3553
    %v3682 = vpack.c.b16 %v3556, %v3555
    %v3683 = vpack.c.b16 %v3558, %v3557
    %v3684 = vpack.c.b16 %v3560, %v3559
    %v3685 = vpack.c.b16 %v3562, %v3561
    %v3686 = vpack.c.b16 %v3564, %v3563
    %v3687 = vpack.c.b16 %v3566, %v3565
    %v3688 = vpack.c.b16 %v3568, %v3567
    %v3689 = vpack.c.b16 %v3570, %v3569
    %v3690 = vpack.c.b16 %v3572, %v3571
    %v3691 = vpack.c.b16 %v3574, %v3573
    %v3692 = vpack.c.b16 %v3576, %v3575
    %v3693 = vpack.c.b16 %v3578, %v3577
    %v3694 = vpack.c.b16 %v3580, %v3579
    %v3695 = vpack.c.b16 %v3582, %v3581
    %v3696 = vpack.c.b16 %v3584, %v3583
    %v3697 = vpack.c.b16 %v3586, %v3585
    %v3698 = vpack.c.b16 %v3588, %v3587
    %v3699 = vpack.c.b16 %v3590, %v3589
    %v3700 = vpack.c.b16 %v3592, %v3591
    %v3701 = vpack.c.b16 %v3594, %v3593
    %v3702 = vpack.c.b16 %v3596, %v3595
    %v3703 = vpack.c.b16 %v3598, %v3597
    %v3704 = vpack.c.b16 %v3600, %v3599
    %v3705 = vpack.c.b16 %v3602, %v3601
    %v3706 = vpack.c.b16 %v3604, %v3603
    %v3707 = vpack.c.b16 %v3606, %v3605
    %v3708 = vpack.c.b16 %v3608, %v3607
    %v3709 = vpack.c.b16 %v3610, %v3609
    %v3710 = vpack.c.b16 %v3612, %v3611
    %v3711 = vpack.c.b16 %v3614, %v3613
    %v3712 = vpack.c.b16 %v3616, %v3615
    %v3713 = vpack.c.b16 %v3618, %v3617
    %v3714 = vpack.c.b16 %v3620, %v3619
    %v3715 = vpack.c.b16 %v3622, %v3621
    %v3716 = vpack.c.b16 %v3624, %v3623
    %v3717 = vpack.c.b16 %v3626, %v3625
    %v3718 = vpack.c.b16 %v3628, %v3627
    %v3719 = vpack.c.b16 %v3630, %v3629
    %v3720 = vpack.c.b16 %v3632, %v3631
    %v3721 = vpack.c.b16 %v3634, %v3633
    %v3722 = vpack.c.b16 %v3636, %v3635
    %v3723 = vpack.c.b16 %v3638, %v3637
    %v3724 = vpack.c.b16 %v3640, %v3639
    %v3725 = vpack.c.b16 %v3642, %v3641
    %v3726 = vpack.c.b16 %v3644, %v3643
    %v3727 = vpack.c.b16 %v3646, %v3645
    %v3728 = vpack.c.b16 %v3648, %v3647
    %v3729 = vpack.c.b16 %v3650, %v3649
    %v3730 = vpack.c.b16 %v3652, %v3651
    %v3731 = vpack.c.b16 %v3654, %v3653
    %v3732 = vpack.c.b16 %v3656, %v3655
    %v3733 = vpack.c.b16 %v3658, %v3657
    %v3734 = vpack.c.b16 %v3660, %v3659
    %v3735 = vpack.c.b16 %v3662, %v3661
    %v3736 = vpack.c.b16 %v3664, %v3663
    %v3737 = vpack.c.b16 %v3666, %v3665
    %v3738 = vpack.c.b16 %v3668, %v3667
    %v3739 = vpack.c.b16 %v3670, %v3669
    %v3740 = vpack.c.b16 %v3672, %v3671
    %v3741 = vpack.c.b16 %v3674, %v3673
    %v3742 = vpack.c.b16 %v3676, %v3675
    %v3743 = vpack.c.b16 %v3678, %v3677
    %v3744 = vpack.c.b16 %v3680, %v3679
    %3809 = vmatprep.subr.bf16.mxu0 0
    %3810 = vmatpush1.bf16.msra.mxu0 %v3681
    %3811 = vmatprep.subr.bf16.mxu0 0
    %3812 = vmatpush1.bf16.msra.mxu0 %v3682
    %3813 = vmatprep.subr.bf16.mxu0 0
    %3814 = vmatpush1.bf16.msra.mxu0 %v3683
    %3815 = vmatprep.subr.bf16.mxu0 0
    %3816 = vmatpush1.bf16.msra.mxu0 %v3684
    %3817 = vmatprep.subr.bf16.mxu0 0
    %3818 = vmatpush1.bf16.msra.mxu0 %v3685
    %3819 = vmatprep.subr.bf16.mxu0 0
    %3820 = vmatpush1.bf16.msra.mxu0 %v3686
    %3821 = vmatprep.subr.bf16.mxu0 0
    %3822 = vmatpush1.bf16.msra.mxu0 %v3687
    %3823 = vmatprep.subr.bf16.mxu0 0
    %3824 = vmatpush1.bf16.msra.mxu0 %v3688
    %3825 = vmatprep.subr.bf16.mxu0 0
    %3826 = vmatpush1.bf16.msra.mxu0 %v3689
    %3827 = vmatprep.subr.bf16.mxu0 0
    %3828 = vmatpush1.bf16.msra.mxu0 %v3690
    %3829 = vmatprep.subr.bf16.mxu0 0
    %3830 = vmatpush1.bf16.msra.mxu0 %v3691
    %3831 = vmatprep.subr.bf16.mxu0 0
    %3832 = vmatpush1.bf16.msra.mxu0 %v3692
    %3833 = vmatprep.subr.bf16.mxu0 0
    %3834 = vmatpush1.bf16.msra.mxu0 %v3693
    %3835 = vmatprep.subr.bf16.mxu0 0
    %3836 = vmatpush1.bf16.msra.mxu0 %v3694
    %3837 = vmatprep.subr.bf16.mxu0 0
    %3838 = vmatpush1.bf16.msra.mxu0 %v3695
    %3839 = vmatprep.subr.bf16.mxu0 0
    %3840 = vmatpush1.bf16.msra.mxu0 %v3696
    %3841 = vmatprep.mubr.bf16.mxu0 %v3283
    %3842 = vmatmul.mubr.bf16.gmra.mrb[0].mxu0 %v3282
    %v3843 = vpop.f32.mrb[0].mxu0
    %v3844 = vadd.f32 %v3423, %v3843
    %v3845 = vpop.f32.mrb[0].mxu0
    %v3846 = vpop.f32.mrb[0].mxu0
    %v3847 = vpop.f32.mrb[0].mxu0
    %3848 = vdwg.mxu0
    %3849 = vmatprep.subr.bf16.mxu0 0
    %3850 = vmatpush1.bf16.msra.mxu0 %v3697
    %3851 = vmatprep.subr.bf16.mxu0 0
    %3852 = vmatpush1.bf16.msra.mxu0 %v3698
    %3853 = vmatprep.subr.bf16.mxu0 0
    %3854 = vmatpush1.bf16.msra.mxu0 %v3699
    %3855 = vmatprep.subr.bf16.mxu0 0
    %3856 = vmatpush1.bf16.msra.mxu0 %v3700
    %3857 = vmatprep.subr.bf16.mxu0 0
    %3858 = vmatpush1.bf16.msra.mxu0 %v3701
    %3859 = vmatprep.subr.bf16.mxu0 0
    %3860 = vmatpush1.bf16.msra.mxu0 %v3702
    %3861 = vmatprep.subr.bf16.mxu0 0
    %3862 = vmatpush1.bf16.msra.mxu0 %v3703
    %3863 = vmatprep.subr.bf16.mxu0 0
    %3864 = vmatpush1.bf16.msra.mxu0 %v3704
    %3865 = vmatprep.subr.bf16.mxu0 0
    %3866 = vmatpush1.bf16.msra.mxu0 %v3705
    %3867 = vmatprep.subr.bf16.mxu0 0
    %3868 = vmatpush1.bf16.msra.mxu0 %v3706
    %3869 = vmatprep.subr.bf16.mxu0 0
    %3870 = vmatpush1.bf16.msra.mxu0 %v3707
    %3871 = vmatprep.subr.bf16.mxu0 0
    %3872 = vmatpush1.bf16.msra.mxu0 %v3708
    %3873 = vmatprep.subr.bf16.mxu0 0
    %3874 = vmatpush1.bf16.msra.mxu0 %v3709
    %3875 = vmatprep.subr.bf16.mxu0 0
    %3876 = vmatpush1.bf16.msra.mxu0 %v3710
    %3877 = vmatprep.subr.bf16.mxu0 0
    %3878 = vmatpush1.bf16.msra.mxu0 %v3711
    %3879 = vmatprep.subr.bf16.mxu0 0
    %3880 = vmatpush1.bf16.msra.mxu0 %v3712
    %3881 = vmatprep.mubr.bf16.mxu0 %v3285
    %3882 = vmatmul.mubr.bf16.gmra.mrb[0].mxu0 %v3284
    %v3883 = vpop.f32.mrb[0].mxu0
    %v3884 = vadd.f32 %v3844, %v3883
    %v3885 = vpop.f32.mrb[0].mxu0
    %v3886 = vpop.f32.mrb[0].mxu0
    %v3887 = vpop.f32.mrb[0].mxu0
    %3888 = vdwg.mxu0
    %3889 = vmatprep.subr.bf16.mxu0 0
    %3890 = vmatpush1.bf16.msra.mxu0 %v3713
    %3891 = vmatprep.subr.bf16.mxu0 0
    %3892 = vmatpush1.bf16.msra.mxu0 %v3714
    %3893 = vmatprep.subr.bf16.mxu0 0
    %3894 = vmatpush1.bf16.msra.mxu0 %v3715
    %3895 = vmatprep.subr.bf16.mxu0 0
    %3896 = vmatpush1.bf16.msra.mxu0 %v3716
    %3897 = vmatprep.subr.bf16.mxu0 0
    %3898 = vmatpush1.bf16.msra.mxu0 %v3717
    %3899 = vmatprep.subr.bf16.mxu0 0
    %3900 = vmatpush1.bf16.msra.mxu0 %v3718
    %3901 = vmatprep.subr.bf16.mxu0 0
    %3902 = vmatpush1.bf16.msra.mxu0 %v3719
    %3903 = vmatprep.subr.bf16.mxu0 0
    %3904 = vmatpush1.bf16.msra.mxu0 %v3720
    %3905 = vmatprep.subr.bf16.mxu0 0
    %3906 = vmatpush1.bf16.msra.mxu0 %v3721
    %3907 = vmatprep.subr.bf16.mxu0 0
    %3908 = vmatpush1.bf16.msra.mxu0 %v3722
    %3909 = vmatprep.subr.bf16.mxu0 0
    %3910 = vmatpush1.bf16.msra.mxu0 %v3723
    %3911 = vmatprep.subr.bf16.mxu0 0
    %3912 = vmatpush1.bf16.msra.mxu0 %v3724
    %3913 = vmatprep.subr.bf16.mxu0 0
    %3914 = vmatpush1.bf16.msra.mxu0 %v3725
    %3915 = vmatprep.subr.bf16.mxu0 0
    %3916 = vmatpush1.bf16.msra.mxu0 %v3726
    %3917 = vmatprep.subr.bf16.mxu0 0
    %3918 = vmatpush1.bf16.msra.mxu0 %v3727
    %3919 = vmatprep.subr.bf16.mxu0 0
    %3920 = vmatpush1.bf16.msra.mxu0 %v3728
    %3921 = vmatprep.mubr.bf16.mxu0 %v3287
    %3922 = vmatmul.mubr.bf16.gmra.mrb[0].mxu0 %v3286
    %v3923 = vpop.f32.mrb[0].mxu0
    %v3924 = vadd.f32 %v3884, %v3923
    %v3925 = vpop.f32.mrb[0].mxu0
    %v3926 = vpop.f32.mrb[0].mxu0
    %v3927 = vpop.f32.mrb[0].mxu0
    %3928 = vdwg.mxu0
    %3929 = vmatprep.subr.bf16.mxu0 0
    %3930 = vmatpush1.bf16.msra.mxu0 %v3729
    %3931 = vmatprep.subr.bf16.mxu0 0
    %3932 = vmatpush1.bf16.msra.mxu0 %v3730
    %3933 = vmatprep.subr.bf16.mxu0 0
    %3934 = vmatpush1.bf16.msra.mxu0 %v3731
    %3935 = vmatprep.subr.bf16.mxu0 0
    %3936 = vmatpush1.bf16.msra.mxu0 %v3732
    %3937 = vmatprep.subr.bf16.mxu0 0
    %3938 = vmatpush1.bf16.msra.mxu0 %v3733
    %3939 = vmatprep.subr.bf16.mxu0 0
    %3940 = vmatpush1.bf16.msra.mxu0 %v3734
    %3941 = vmatprep.subr.bf16.mxu0 0
    %3942 = vmatpush1.bf16.msra.mxu0 %v3735
    %3943 = vmatprep.subr.bf16.mxu0 0
    %3944 = vmatpush1.bf16.msra.mxu0 %v3736
    %3945 = vmatprep.subr.bf16.mxu0 0
    %3946 = vmatpush1.bf16.msra.mxu0 %v3737
    %3947 = vmatprep.subr.bf16.mxu0 0
    %3948 = vmatpush1.bf16.msra.mxu0 %v3738
    %3949 = vmatprep.subr.bf16.mxu0 0
    %3950 = vmatpush1.bf16.msra.mxu0 %v3739
    %3951 = vmatprep.subr.bf16.mxu0 0
    %3952 = vmatpush1.bf16.msra.mxu0 %v3740
    %3953 = vmatprep.subr.bf16.mxu0 0
    %3954 = vmatpush1.bf16.msra.mxu0 %v3741
    %3955 = vmatprep.subr.bf16.mxu0 0
    %3956 = vmatpush1.bf16.msra.mxu0 %v3742
    %3957 = vmatprep.subr.bf16.mxu0 0
    %3958 = vmatpush1.bf16.msra.mxu0 %v3743
    %3959 = vmatprep.subr.bf16.mxu0 0
    %3960 = vmatpush1.bf16.msra.mxu0 %v3744
    %3961 = vmatprep.mubr.bf16.mxu0 %v3289
    %3962 = vmatmul.mubr.bf16.gmra.mrb[0].mxu0 %v3288
    %v3963 = vpop.f32.mrb[0].mxu0
    %v3964 = vadd.f32 %v3924, %v3963
    %v3965 = vpop.f32.mrb[0].mxu0
    %v3966 = vpop.f32.mrb[0].mxu0
    %v3967 = vpop.f32.mrb[0].mxu0
    %3968 = vdwg.mxu0
    %v3969 = vtanh.pop %v3964
    %3970 = vst [vmem:[%s17] sm:$0xff] %v3969
    // Predicated region
    $region114: #{generator_forward.1} parent=1 // pred_check
      _
    $region115: #{generator_forward.1} parent=1 // pred_check_branch
      %3972 = sbr.rel (0) target = $region117
    $region116: #{generator_forward.1} parent=1 // pred_region
      _
    $region117: #{generator_forward.1} parent=1 // pred_fallthru
      _
    // Predicated region
    $region118: #{generator_forward.1} parent=1 // pred_check
      _
    $region119: #{generator_forward.1} parent=1 // pred_check_branch
      %3974 = sbr.rel (0) target = $region121
    $region120: #{generator_forward.1} parent=1 // pred_region
      _
    $region121: #{generator_forward.1} parent=1 // pred_fallthru
      _
    %3975 = vsyncpa [#allocation3], 1
    %3976 = vsyncpa [#allocation5], 1
    %3977 = vsyncpa [#allocation8], 1
    %3978 = vsyncpa [#allocation11], 1
    %3979 = vsyncpa [#allocation14], 1
    %3980 = vsyncpa [#allocation17], 1

</llo_original>
